<compile_context>
chip_gen: v7x
topology: tpu7x:2x2x1
jax: 0.10.0
libtpu: 0.0.40
codegen_flags: <defaults>
</compile_context>

<pallas_src>
import math

import jax
import jax.numpy as jnp
from jax.experimental import pallas as pl
from jax.experimental.pallas import tpu as pltpu


# ----------------------------- in-kernel attention core -----------------------------

def _attention_and_out(q, k, v, wo_ref, bo_ref, o_ref, H, d):
    """q/k/v: [rows, C] f32 (projections).  Writes the [Gb, N, C] output block."""
    rows, C = q.shape
    Gb, N, _ = o_ref.shape

    def split_heads(t):
        # [rows, C] -> [H, rows, d] (leading-axis stack of static lane slices)
        #           -> [H*Gb, N, d] bf16 batch for the batched attention dot_generals.
        hs = jnp.stack([t[:, h * d:(h + 1) * d] for h in range(H)], axis=0)
        return hs.reshape(H * Gb, N, d).astype(jnp.bfloat16)

    qh, kh, vh = split_heads(q), split_heads(k), split_heads(v)

    # One batched scores matmul over b = H*Gb (1/sqrt(d) already folded into W_Q).
    s = jnp.einsum('bnd,bmd->bnm', qh, kh, preferred_element_type=jnp.float32)
    s_max = jnp.max(s, axis=-1, keepdims=True)
    p = jnp.exp(s - s_max)
    inv = pl.reciprocal(jnp.sum(p, axis=-1, keepdims=True), approx=True)   # EUP slot
    attn = (p * inv).astype(jnp.bfloat16)

    # One batched context matmul.
    ctx = jnp.einsum('bnm,bmd->bnd', attn, vh,
                     preferred_element_type=jnp.float32)                   # [H*Gb, N, d]
    ctx = ctx.reshape(H, rows, d).astype(jnp.bfloat16)

    # Output projection: per-head weight blocks [H, d, C] -> one batched matmul + a cheap
    # major-axis sum; this replaces the lane-axis concat of head contexts entirely.
    out = jnp.einsum('hrd,hdc->hrc', ctx, wo_ref[...],
                     preferred_element_type=jnp.float32)
    out = jnp.sum(out, axis=0) + bo_ref[...]                               # [rows, C] f32

    o_ref[...] = out.reshape(Gb, N, C).astype(o_ref.dtype)


def _make_shared_kv_kernel(heads, head_dim):
    H, d = heads, head_dim

    def kernel(xq_ref, xkv_ref, wq_ref, wkv_ref, wo_ref, bo_ref, o_ref):
        Gb, N, C = xq_ref.shape
        rows = Gb * N
        xq = xq_ref[...].reshape(rows, C)
        xkv = xkv_ref[...].reshape(rows, C)
        q = jnp.dot(xq, wq_ref[...], preferred_element_type=jnp.float32)    # [rows, C]
        kv = jnp.dot(xkv, wkv_ref[...], preferred_element_type=jnp.float32)  # [rows, 2C]
        _attention_and_out(q, kv[:, :C], kv[:, C:], wo_ref, bo_ref, o_ref, H, d)

    return kernel


def _make_general_kernel(heads, head_dim):
    H, d = heads, head_dim

    def kernel(xq_ref, xk_ref, xv_ref, wq_ref, wk_ref, wv_ref, wo_ref, bo_ref, o_ref):
        Gb, N, C = xq_ref.shape
        rows = Gb * N
        q = jnp.dot(xq_ref[...].reshape(rows, C), wq_ref[...],
                    preferred_element_type=jnp.float32)
        k = jnp.dot(xk_ref[...].reshape(rows, C), wk_ref[...],
                    preferred_element_type=jnp.float32)
        v = jnp.dot(xv_ref[...].reshape(rows, C), wv_ref[...],
                    preferred_element_type=jnp.float32)
        _attention_and_out(q, k, v, wo_ref, bo_ref, o_ref, H, d)

    return kernel


# ----------------------------- module forward (Pallas) -----------------------------

def smha_forward(params, input_Q, input_K, input_V, heads,
                 group_block=8, compute_dtype=jnp.bfloat16):
    """Pallas implementation of SMultiHeadAttention.forward.

    input_*: [B, N, T, C]; attention runs over the node axis N for each (batch, time)
    group.  Returns [B, N, T, C] in input_Q's dtype.
    """
    B, N, T, C = input_Q.shape
    H = heads
    assert C % H == 0
    d = C // H
    G = B * T
    shared_kv = input_K is input_V   # true for STBlk's SAT(x_T, x_S, x_S)

    # [B, N, T, C] -> [B*T, N, C] (+ bf16 cast) so each grid block is a lane-dense tile.
    def to_groups(x):
        return x.transpose(0, 2, 1, 3).reshape(G, N, C).astype(compute_dtype)

    # nn.Linear: y = x @ W.T ; fold 1/sqrt(d) into W_Q; per-head output-weight blocks.
    scale = 1.0 / math.sqrt(d)
    wq = (params["W_Q"].T * scale).astype(compute_dtype)                 # [C, C]
    wo3 = params["W_out"].T.reshape(H, d, C).astype(compute_dtype)       # [H, d, C]
    bo = params["b_out"].reshape(1, C).astype(jnp.float32)               # [1, C]

    # Group-block size: never degenerate to gb=1 on awkward G — pad G up instead.
    gb = max(1, min(group_block, G))
    num_steps = -(-G // gb)
    Gp = num_steps * gb

    def pad_groups(x):
        return x if Gp == G else jnp.pad(x, ((0, Gp - G), (0, 0), (0, 0)))

    x_spec = pl.BlockSpec((gb, N, C), lambda i: (i, 0, 0))
    w_spec = pl.BlockSpec((C, C), lambda i: (0, 0))              # resident in VMEM
    wo_spec = pl.BlockSpec((H, d, C), lambda i: (0, 0, 0))
    b_spec = pl.BlockSpec((1, C), lambda i: (0, 0))

    if shared_kv:
        xq = pad_groups(to_groups(input_Q))
        xkv = pad_groups(to_groups(input_K))
        wkv = jnp.concatenate([params["W_K"].T, params["W_V"].T],
                              axis=1).astype(compute_dtype)      # [C, 2C]
        kernel = _make_shared_kv_kernel(H, d)
        in_specs = [x_spec, x_spec, w_spec,
                    pl.BlockSpec((C, 2 * C), lambda i: (0, 0)), wo_spec, b_spec]
        args = (xq, xkv, wq, wkv, wo3, bo)
    else:
        xq = pad_groups(to_groups(input_Q))
        xk = pad_groups(to_groups(input_K))
        xv = pad_groups(to_groups(input_V))
        wk = params["W_K"].T.astype(compute_dtype)
        wv = params["W_V"].T.astype(compute_dtype)
        kernel = _make_general_kernel(H, d)
        in_specs = [x_spec, x_spec, x_spec, w_spec, w_spec, w_spec, wo_spec, b_spec]
        args = (xq, xk, xv, wq, wk, wv, wo3, bo)

    out = pl.pallas_call(
        kernel,
        out_shape=jax.ShapeDtypeStruct((Gp, N, C), input_Q.dtype),
        grid_spec=pltpu.PrefetchScalarGridSpec(
            num_scalar_prefetch=0,
            grid=(num_steps,),
            in_specs=in_specs,
            out_specs=x_spec,
        ),
        compiler_params=pltpu.CompilerParams(dimension_semantics=("parallel",)),
    )(*args)

    if Gp != G:
        out = out[:G]
    # [B*T, N, C] -> [B, N, T, C]
    return out.reshape(B, T, N, C).transpose(0, 2, 1, 3)


# ----------------------------- reference (plain JAX, f32) -----------------------------

def smha_reference(params, input_Q, input_K, input_V, heads):
    B, N, T, C = input_Q.shape
    H = heads
    d = C // H
    Q = (input_Q @ params["W_Q"].T).reshape(B, N, T, H, d).transpose(0, 3, 2, 1, 4)
    K = (input_K @ params["W_K"].T).reshape(B, N, T, H, d).transpose(0, 3, 2, 1, 4)
    V = (input_V @ params["W_V"].T).reshape(B, N, T, H, d).transpose(0, 3, 2, 1, 4)
    scores = jnp.einsum("bhtnd,bhtmd->bhtnm", Q, K) / math.sqrt(d)
    attn = jax.nn.softmax(scores, axis=-1)
    ctx = jnp.einsum("bhtnm,bhtmd->bhtnd", attn, V)
    ctx = ctx.transpose(0, 3, 2, 1, 4).reshape(B, N, T, H * d)
    return ctx @ params["W_out"].T + params["b_out"]


# ----------------------------- main -----------------------------

if __name__ == "__main__":
    # Shapes consistent with the module: [B, N, T, C], embed_size=C, heads=4.
    B, N, T, C = 2, 16, 8, 32
    heads = 4

    key = jax.random.PRNGKey(0)
    k_q, k_kv, k_v2, k_wq, k_wk, k_wv, k_wo, k_bo = jax.random.split(key, 8)

    input_Q = jax.random.normal(k_q, (B, N, T, C), dtype=jnp.float32)
    input_KV = jax.random.normal(k_kv, (B, N, T, C), dtype=jnp.float32)
    input_V2 = jax.random.normal(k_v2, (B, N, T, C), dtype=jnp.float32)

    # torch nn.Linear stores weight as [out, in]; default init uniform(-1/sqrt(in), 1/sqrt(in)).
    s = 1.0 / math.sqrt(C)
    params = {
        "W_Q": jax.random.uniform(k_wq, (C, C), jnp.float32, -s, s),
        "W_K": jax.random.uniform(k_wk, (C, C), jnp.float32, -s, s),
        "W_V": jax.random.uniform(k_wv, (C, C), jnp.float32, -s, s),
        "W_out": jax.random.uniform(k_wo, (C, C), jnp.float32, -s, s),
        "b_out": jax.random.uniform(k_bo, (C,), jnp.float32, -s, s),
    }

    # Tolerance: bf16 MXU operands (feedback) with f32 accumulation + EUP approx reciprocal;
    # estimated worst-case elementwise error ~1e-2 at these magnitudes.
    ATOL, RTOL = 3e-2, 3e-2

    # --- shared-KV path (mirrors STBlk's SAT(x_T, x_S, x_S): K is V) ---
    fwd_shared = jax.jit(lambda p, q, kv: smha_forward(p, q, kv, kv, heads=heads))
    out_shared = jax.block_until_ready(fwd_shared(params, input_Q, input_KV))
    ref_shared = smha_reference(params, input_Q, input_KV, input_KV, heads)
    assert out_shared.shape == (B, N, T, C), out_shared.shape
    err_s = float(jnp.max(jnp.abs(out_shared - ref_shared)))
    assert jnp.allclose(out_shared, ref_shared, atol=ATOL, rtol=RTOL), err_s

    # --- general path (distinct Q / K / V) ---
    fwd_gen = jax.jit(lambda p, q, k, v: smha_forward(p, q, k, v, heads=heads))
    out_gen = jax.block_until_ready(fwd_gen(params, input_Q, input_KV, input_V2))
    ref_gen = smha_reference(params, input_Q, input_KV, input_V2, heads)
    err_g = float(jnp.max(jnp.abs(out_gen - ref_gen)))
    assert jnp.allclose(out_gen, ref_gen, atol=ATOL, rtol=RTOL), err_g

    print("KERNEL_OK")
</pallas_src>

<mosaic_0001>
module attributes {stable_mosaic.version = 11 : i64} {
  func.func @kernel(%arg0: i32, %arg1: memref<8x16x32xbf16, #tpu.memory_space<vmem>>, %arg2: memref<8x16x32xbf16, #tpu.memory_space<vmem>>, %arg3: memref<32x32xbf16, #tpu.memory_space<vmem>>, %arg4: memref<32x64xbf16, #tpu.memory_space<vmem>>, %arg5: memref<4x8x32xbf16, #tpu.memory_space<vmem>>, %arg6: memref<1x32xf32, #tpu.memory_space<vmem>>, %arg7: memref<8x16x32xf32, #tpu.memory_space<vmem>>) attributes {dimension_semantics = [#tpu.dimension_semantics<parallel>], iteration_bounds = array<i64: 2>, scalar_prefetch = 0 : i64, scratch_operands = 0 : i64, tpu.core_type = #tpu.core_type<tc>, window_params = [{transform_indices = @transform_0, window_bounds = array<i64: 8, 16, 32>}, {transform_indices = @transform_1, window_bounds = array<i64: 8, 16, 32>}, {pipeline_mode = #tpu.pipeline_mode<synchronous>, transform_indices = @transform_2, window_bounds = array<i64: 32, 32>}, {pipeline_mode = #tpu.pipeline_mode<synchronous>, transform_indices = @transform_3, window_bounds = array<i64: 32, 64>}, {pipeline_mode = #tpu.pipeline_mode<synchronous>, transform_indices = @transform_4, window_bounds = array<i64: 4, 8, 32>}, {pipeline_mode = #tpu.pipeline_mode<synchronous>, transform_indices = @transform_5, window_bounds = array<i64: 1, 32>}, {transform_indices = @transform_6, window_bounds = array<i64: 8, 16, 32>}]} {
    %c0 = arith.constant 0 : index
    %c0_0 = arith.constant 0 : index
    %c0_1 = arith.constant 0 : index
    %0 = vector.load %arg1[%c0, %c0_0, %c0_1] : memref<8x16x32xbf16, #tpu.memory_space<vmem>>, vector<8x16x32xbf16>
    %1 = vector.shape_cast %0 : vector<8x16x32xbf16> to vector<128x32xbf16>
    %c0_2 = arith.constant 0 : index
    %c0_3 = arith.constant 0 : index
    %c0_4 = arith.constant 0 : index
    %2 = vector.load %arg2[%c0_2, %c0_3, %c0_4] : memref<8x16x32xbf16, #tpu.memory_space<vmem>>, vector<8x16x32xbf16>
    %3 = vector.shape_cast %2 : vector<8x16x32xbf16> to vector<128x32xbf16>
    %c0_5 = arith.constant 0 : index
    %c0_6 = arith.constant 0 : index
    %4 = vector.load %arg3[%c0_5, %c0_6] : memref<32x32xbf16, #tpu.memory_space<vmem>>, vector<32x32xbf16>
    %cst = arith.constant dense<0.000000e+00> : vector<128x32xf32>
    %5 = tpu.matmul %1, %4, %cst {dimension_numbers = #tpu.dot_dimension_numbers<[1], [0], [0], [1], [0, 0, 1, 1], [], []>} : vector<128x32xbf16>, vector<32x32xbf16>, vector<128x32xf32> -> vector<128x32xf32>
    %c0_7 = arith.constant 0 : index
    %c0_8 = arith.constant 0 : index
    %6 = vector.load %arg4[%c0_7, %c0_8] : memref<32x64xbf16, #tpu.memory_space<vmem>>, vector<32x64xbf16>
    %cst_9 = arith.constant dense<0.000000e+00> : vector<128x64xf32>
    %7 = tpu.matmul %3, %6, %cst_9 {dimension_numbers = #tpu.dot_dimension_numbers<[1], [0], [0], [1], [0, 0, 1, 1], [], []>} : vector<128x32xbf16>, vector<32x64xbf16>, vector<128x64xf32> -> vector<128x64xf32>
    %8 = vector.extract_strided_slice %7 {offsets = [0, 0], sizes = [128, 32], strides = [1, 1]} : vector<128x64xf32> to vector<128x32xf32>
    %9 = vector.extract_strided_slice %7 {offsets = [0, 32], sizes = [128, 32], strides = [1, 1]} : vector<128x64xf32> to vector<128x32xf32>
    %10 = vector.extract_strided_slice %5 {offsets = [0, 0], sizes = [128, 8], strides = [1, 1]} : vector<128x32xf32> to vector<128x8xf32>
    %11 = vector.extract_strided_slice %5 {offsets = [0, 8], sizes = [128, 8], strides = [1, 1]} : vector<128x32xf32> to vector<128x8xf32>
    %12 = vector.extract_strided_slice %5 {offsets = [0, 16], sizes = [128, 8], strides = [1, 1]} : vector<128x32xf32> to vector<128x8xf32>
    %13 = vector.extract_strided_slice %5 {offsets = [0, 24], sizes = [128, 8], strides = [1, 1]} : vector<128x32xf32> to vector<128x8xf32>
    %14 = vector.shape_cast %10 : vector<128x8xf32> to vector<1x128x8xf32>
    %15 = vector.shape_cast %11 : vector<128x8xf32> to vector<1x128x8xf32>
    %16 = vector.shape_cast %12 : vector<128x8xf32> to vector<1x128x8xf32>
    %17 = vector.shape_cast %13 : vector<128x8xf32> to vector<1x128x8xf32>
    %18 = tpu.concatenate %14, %15, %16, %17 in 0 : vector<1x128x8xf32>, vector<1x128x8xf32>, vector<1x128x8xf32>, vector<1x128x8xf32> -> vector<4x128x8xf32>
    %19 = vector.shape_cast %18 : vector<4x128x8xf32> to vector<32x16x8xf32>
    %20 = arith.truncf %19 : vector<32x16x8xf32> to vector<32x16x8xbf16>
    %21 = vector.extract_strided_slice %8 {offsets = [0, 0], sizes = [128, 8], strides = [1, 1]} : vector<128x32xf32> to vector<128x8xf32>
    %22 = vector.extract_strided_slice %8 {offsets = [0, 8], sizes = [128, 8], strides = [1, 1]} : vector<128x32xf32> to vector<128x8xf32>
    %23 = vector.extract_strided_slice %8 {offsets = [0, 16], sizes = [128, 8], strides = [1, 1]} : vector<128x32xf32> to vector<128x8xf32>
    %24 = vector.extract_strided_slice %8 {offsets = [0, 24], sizes = [128, 8], strides = [1, 1]} : vector<128x32xf32> to vector<128x8xf32>
    %25 = vector.shape_cast %21 : vector<128x8xf32> to vector<1x128x8xf32>
    %26 = vector.shape_cast %22 : vector<128x8xf32> to vector<1x128x8xf32>
    %27 = vector.shape_cast %23 : vector<128x8xf32> to vector<1x128x8xf32>
    %28 = vector.shape_cast %24 : vector<128x8xf32> to vector<1x128x8xf32>
    %29 = tpu.concatenate %25, %26, %27, %28 in 0 : vector<1x128x8xf32>, vector<1x128x8xf32>, vector<1x128x8xf32>, vector<1x128x8xf32> -> vector<4x128x8xf32>
    %30 = vector.shape_cast %29 : vector<4x128x8xf32> to vector<32x16x8xf32>
    %31 = arith.truncf %30 : vector<32x16x8xf32> to vector<32x16x8xbf16>
    %32 = vector.extract_strided_slice %9 {offsets = [0, 0], sizes = [128, 8], strides = [1, 1]} : vector<128x32xf32> to vector<128x8xf32>
    %33 = vector.extract_strided_slice %9 {offsets = [0, 8], sizes = [128, 8], strides = [1, 1]} : vector<128x32xf32> to vector<128x8xf32>
    %34 = vector.extract_strided_slice %9 {offsets = [0, 16], sizes = [128, 8], strides = [1, 1]} : vector<128x32xf32> to vector<128x8xf32>
    %35 = vector.extract_strided_slice %9 {offsets = [0, 24], sizes = [128, 8], strides = [1, 1]} : vector<128x32xf32> to vector<128x8xf32>
    %36 = vector.shape_cast %32 : vector<128x8xf32> to vector<1x128x8xf32>
    %37 = vector.shape_cast %33 : vector<128x8xf32> to vector<1x128x8xf32>
    %38 = vector.shape_cast %34 : vector<128x8xf32> to vector<1x128x8xf32>
    %39 = vector.shape_cast %35 : vector<128x8xf32> to vector<1x128x8xf32>
    %40 = tpu.concatenate %36, %37, %38, %39 in 0 : vector<1x128x8xf32>, vector<1x128x8xf32>, vector<1x128x8xf32>, vector<1x128x8xf32> -> vector<4x128x8xf32>
    %41 = vector.shape_cast %40 : vector<4x128x8xf32> to vector<32x16x8xf32>
    %42 = arith.truncf %41 : vector<32x16x8xf32> to vector<32x16x8xbf16>
    "tpu.trace_start"() <{level = 10 : i32, message = "bnd,bmd->bnm"}> : () -> ()
    %cst_10 = arith.constant dense<0.000000e+00> : vector<32x16x16xf32>
    %43 = tpu.matmul %20, %31, %cst_10 {dimension_numbers = #tpu.dot_dimension_numbers<[2], [2], [1], [1], [0, 0, 0, 1, 1, 1], [0], [0]>} : vector<32x16x8xbf16>, vector<32x16x8xbf16>, vector<32x16x16xf32> -> vector<32x16x16xf32>
    "tpu.trace_stop"() : () -> ()
    %cst_11 = arith.constant dense<0xFF800000> : vector<32x16xf32>
    %44 = vector.multi_reduction <maximumf>, %43, %cst_11 [2] : vector<32x16x16xf32> to vector<32x16xf32>
    %45 = vector.shape_cast %44 : vector<32x16xf32> to vector<32x16x1xf32>
    %46 = vector.broadcast %45 : vector<32x16x1xf32> to vector<32x16x16xf32>
    %47 = arith.subf %43, %46 : vector<32x16x16xf32>
    %48 = math.exp %47 : vector<32x16x16xf32>
    %cst_12 = arith.constant dense<0.000000e+00> : vector<32x16xf32>
    %49 = vector.multi_reduction <add>, %48, %cst_12 [2] : vector<32x16x16xf32> to vector<32x16xf32>
    %50 = vector.shape_cast %49 : vector<32x16xf32> to vector<32x16x1xf32>
    %51 = tpu.reciprocal %50 {approx = true} : vector<32x16x1xf32> -> vector<32x16x1xf32>
    %52 = vector.broadcast %51 : vector<32x16x1xf32> to vector<32x16x16xf32>
    %53 = arith.mulf %48, %52 : vector<32x16x16xf32>
    %54 = arith.truncf %53 : vector<32x16x16xf32> to vector<32x16x16xbf16>
    "tpu.trace_start"() <{level = 10 : i32, message = "bnm,bmd->bnd"}> : () -> ()
    %cst_13 = arith.constant dense<0.000000e+00> : vector<32x16x8xf32>
    %55 = tpu.matmul %54, %42, %cst_13 {dimension_numbers = #tpu.dot_dimension_numbers<[2], [1], [1], [2], [0, 0, 0, 1, 1, 2], [0], [0]>} : vector<32x16x16xbf16>, vector<32x16x8xbf16>, vector<32x16x8xf32> -> vector<32x16x8xf32>
    "tpu.trace_stop"() : () -> ()
    %56 = vector.shape_cast %55 : vector<32x16x8xf32> to vector<4x128x8xf32>
    %57 = arith.truncf %56 : vector<4x128x8xf32> to vector<4x128x8xbf16>
    %c0_14 = arith.constant 0 : index
    %c0_15 = arith.constant 0 : index
    %c0_16 = arith.constant 0 : index
    %58 = vector.load %arg5[%c0_14, %c0_15, %c0_16] : memref<4x8x32xbf16, #tpu.memory_space<vmem>>, vector<4x8x32xbf16>
    "tpu.trace_start"() <{level = 10 : i32, message = "hrd,hdc->hrc"}> : () -> ()
    %cst_17 = arith.constant dense<0.000000e+00> : vector<4x128x32xf32>
    %59 = tpu.matmul %57, %58, %cst_17 {dimension_numbers = #tpu.dot_dimension_numbers<[2], [1], [1], [2], [0, 0, 0, 1, 1, 2], [0], [0]>} : vector<4x128x8xbf16>, vector<4x8x32xbf16>, vector<4x128x32xf32> -> vector<4x128x32xf32>
    "tpu.trace_stop"() : () -> ()
    %cst_18 = arith.constant dense<0.000000e+00> : vector<128x32xf32>
    %60 = vector.multi_reduction <add>, %59, %cst_18 [0] : vector<4x128x32xf32> to vector<128x32xf32>
    %c0_19 = arith.constant 0 : index
    %c0_20 = arith.constant 0 : index
    %61 = vector.load %arg6[%c0_19, %c0_20] : memref<1x32xf32, #tpu.memory_space<vmem>>, vector<1x32xf32>
    %62 = vector.broadcast %61 : vector<1x32xf32> to vector<128x32xf32>
    %63 = arith.addf %60, %62 : vector<128x32xf32>
    %64 = vector.shape_cast %63 : vector<128x32xf32> to vector<8x16x32xf32>
    %c0_21 = arith.constant 0 : index
    %c0_22 = arith.constant 0 : index
    %c0_23 = arith.constant 0 : index
    %65 = vector.load %arg7[%c0_21, %c0_22, %c0_23] : memref<8x16x32xf32, #tpu.memory_space<vmem>>, vector<8x16x32xf32>
    tpu.vector_store %arg7[%c0_21, %c0_22, %c0_23], %64 {strides = array<i32>} : memref<8x16x32xf32, #tpu.memory_space<vmem>>, vector<8x16x32xf32>,
    return
  }
  func.func @transform_0(%arg0: i32) -> (i32, i32, i32) {
    %c0_i32 = arith.constant 0 : i32
    %c0_i32_0 = arith.constant 0 : i32
    %c0_i32_1 = arith.constant 0 : i32
    return %arg0, %c0_i32, %c0_i32_0 : i32, i32, i32
  }
  func.func @transform_1(%arg0: i32) -> (i32, i32, i32) {
    %c0_i32 = arith.constant 0 : i32
    %c0_i32_0 = arith.constant 0 : i32
    %c0_i32_1 = arith.constant 0 : i32
    return %arg0, %c0_i32, %c0_i32_0 : i32, i32, i32
  }
  func.func @transform_2(%arg0: i32) -> (i32, i32) {
    %c0_i32 = arith.constant 0 : i32
    %c0_i32_0 = arith.constant 0 : i32
    %c0_i32_1 = arith.constant 0 : i32
    return %c0_i32, %c0_i32_0 : i32, i32
  }
  func.func @transform_3(%arg0: i32) -> (i32, i32) {
    %c0_i32 = arith.constant 0 : i32
    %c0_i32_0 = arith.constant 0 : i32
    %c0_i32_1 = arith.constant 0 : i32
    return %c0_i32, %c0_i32_0 : i32, i32
  }
  func.func @transform_4(%arg0: i32) -> (i32, i32, i32) {
    %c0_i32 = arith.constant 0 : i32
    %c0_i32_0 = arith.constant 0 : i32
    %c0_i32_1 = arith.constant 0 : i32
    %c0_i32_2 = arith.constant 0 : i32
    return %c0_i32, %c0_i32_0, %c0_i32_1 : i32, i32, i32
  }
  func.func @transform_5(%arg0: i32) -> (i32, i32) {
    %c0_i32 = arith.constant 0 : i32
    %c0_i32_0 = arith.constant 0 : i32
    %c0_i32_1 = arith.constant 0 : i32
    return %c0_i32, %c0_i32_0 : i32, i32
  }
  func.func @transform_6(%arg0: i32) -> (i32, i32, i32) {
    %c0_i32 = arith.constant 0 : i32
    %c0_i32_0 = arith.constant 0 : i32
    %c0_i32_1 = arith.constant 0 : i32
    return %arg0, %c0_i32, %c0_i32_0 : i32, i32, i32
  }
}

</mosaic_0001>

<llo_original>
// kernel: _lambda_.1
$region0: #{_lambda_.1}
  #allocation0 [shape = 'u32[]', space=smem, size = 0x4, offset = 0x4, fixed_abs, tag = 'smem constant byte address 0x4 - core index']
  #allocation1 [shape = 'u32[144,128]{1,0:T(1,128)}', space=vmem, size = 0x12000, scoped, tag = 'internal scratch']
  %s0 = inlined_call_operand.vmem [shape: bf16[16,16,32], index: 0, kind: input, shape index: {}]
  %s1 = inlined_call_operand.vmem [shape: bf16[16,16,32], index: 1, kind: input, shape index: {}]
  %s2 = inlined_call_operand.vmem [shape: bf16[32,32], index: 2, kind: input, shape index: {}]
  %s3 = inlined_call_operand.vmem [shape: bf16[32,64], index: 3, kind: input, shape index: {}]
  %s4 = inlined_call_operand.vmem [shape: bf16[4,8,32], index: 4, kind: input, shape index: {}]
  %s5 = inlined_call_operand.vmem [shape: f32[1,32], index: 5, kind: input, shape index: {}]
  %s6 = inlined_call_operand.vmem [shape: f32[16,16,32], index: 6, kind: output, shape index: {}]
  %s7 = sld [smem:[#allocation0]]
  $region57: #{_lambda_.1} parent=0
    _
  %s9 = ssub.s32 1, %s7
  %s10 = scalar_select 0, %s9, %s7
  loop: start=0, step=1, limit=4
  $region2: #{_lambda_.1} parent=0 // loop_pre_header
    _
  $region3: #{_lambda_.1} parent=0 // loop_header
    %s12 = sphi 0, %s16
    %p13 = scmp.ge.s32.totalorder %s12, 4
    %s22 = sphi 0, %s24
    %s25 = sphi 0, %s22
    %s26 = sphi 0, %s25
    %s42 = sphi 0, %s26
    %s48 = sphi 0, %s50
    %s51 = sphi 0, %s48
    %s52 = sphi 0, %s51
    %s68 = sphi 0, %s52
    %s72 = sphi 0, %s72
    %s74 = sphi 0, %s72
    %s75 = sphi 0, %s74
    %s89 = sphi 0, %s75
    %s93 = sphi 0, %s93
    %s95 = sphi 0, %s93
    %s96 = sphi 0, %s95
    %s110 = sphi 0, %s96
    %s114 = sphi 0, %s114
    %s116 = sphi 0, %s114
    %s117 = sphi 0, %s116
    %s131 = sphi 0, %s117
    %s135 = sphi 0, %s135
    %s137 = sphi 0, %s135
    %s138 = sphi 0, %s137
    %s152 = sphi 0, %s138
    %s158 = sphi 0, %s160
    %s161 = sphi 0, %s158
    %s162 = sphi 0, %s161
    %s178 = sphi 0, %s162
  $region4: #{_lambda_.1} parent=0 // loop_header_branch
    %15 = sbr.rel (%p13) target = $region8
  $region5: #{_lambda_.1} parent=0 // loop_body
    %s17 = ssub.s32 %s12, 1
    %s18 = ssub.s32 %s12, 2
    %s19 = sadd.s32 %s12, 1
    %s20 = ssub.s32 %s12, %s19
    %p21 = scmp.eq.s32.totalorder %s20, 0
    %s23 = sadd.s32 %s22, 1
    %s24 = scalar_select %p21, %s22, %s23
    %p27 = pneg %p21
    %p28 = scmp.eq.s32.totalorder %s12, 1
    %p29 = por %p27, %p28
    %p30 = scmp.ne.s32.totalorder %s22, %s25
    %p31 = scmp.eq.s32.totalorder %s12, 0
    %p32 = por %p30, %p31
    %p33 = scmp.ne.s32.totalorder %s22, %s25
    %p34 = scmp.eq.s32.totalorder %s17, 1
    %p35 = por %p33, %p34
    %p36 = scmp.ne.s32.totalorder %s25, %s26
    %p37 = scmp.eq.s32.totalorder %s17, 0
    %p38 = por %p36, %p37
    %p39 = scmp.ne.s32.totalorder %s25, %s26
    %p40 = scmp.eq.s32.totalorder %s18, 1
    %p41 = por %p39, %p40
    %p43 = scmp.ne.s32.totalorder %s26, %s42
    %p44 = scmp.eq.s32.totalorder %s18, 0
    %p45 = por %p43, %p44
    %s46 = ssub.s32 %s12, %s19
    %p47 = scmp.eq.s32.totalorder %s46, 0
    %s49 = sadd.s32 %s48, 1
    %s50 = scalar_select %p47, %s48, %s49
    %p53 = pneg %p47
    %p54 = scmp.eq.s32.totalorder %s12, 1
    %p55 = por %p53, %p54
    %p56 = scmp.ne.s32.totalorder %s48, %s51
    %p57 = scmp.eq.s32.totalorder %s12, 0
    %p58 = por %p56, %p57
    %p59 = scmp.ne.s32.totalorder %s48, %s51
    %p60 = scmp.eq.s32.totalorder %s17, 1
    %p61 = por %p59, %p60
    %p62 = scmp.ne.s32.totalorder %s51, %s52
    %p63 = scmp.eq.s32.totalorder %s17, 0
    %p64 = por %p62, %p63
    %p65 = scmp.ne.s32.totalorder %s51, %s52
    %p66 = scmp.eq.s32.totalorder %s18, 1
    %p67 = por %p65, %p66
    %p69 = scmp.ne.s32.totalorder %s52, %s68
    %p70 = scmp.eq.s32.totalorder %s18, 0
    %p71 = por %p69, %p70
    %s73 = sadd.s32 %s72, 1
    %p76 = scmp.eq.s32.totalorder %s12, 1
    %p77 = scmp.ne.s32.totalorder %s72, %s74
    %p78 = scmp.eq.s32.totalorder %s12, 0
    %p79 = por %p77, %p78
    %p80 = scmp.ne.s32.totalorder %s72, %s74
    %p81 = scmp.eq.s32.totalorder %s17, 1
    %p82 = por %p80, %p81
    %p83 = scmp.ne.s32.totalorder %s74, %s75
    %p84 = scmp.eq.s32.totalorder %s17, 0
    %p85 = por %p83, %p84
    %p86 = scmp.ne.s32.totalorder %s74, %s75
    %p87 = scmp.eq.s32.totalorder %s18, 1
    %p88 = por %p86, %p87
    %p90 = scmp.ne.s32.totalorder %s75, %s89
    %p91 = scmp.eq.s32.totalorder %s18, 0
    %p92 = por %p90, %p91
    %s94 = sadd.s32 %s93, 1
    %p97 = scmp.eq.s32.totalorder %s12, 1
    %p98 = scmp.ne.s32.totalorder %s93, %s95
    %p99 = scmp.eq.s32.totalorder %s12, 0
    %p100 = por %p98, %p99
    %p101 = scmp.ne.s32.totalorder %s93, %s95
    %p102 = scmp.eq.s32.totalorder %s17, 1
    %p103 = por %p101, %p102
    %p104 = scmp.ne.s32.totalorder %s95, %s96
    %p105 = scmp.eq.s32.totalorder %s17, 0
    %p106 = por %p104, %p105
    %p107 = scmp.ne.s32.totalorder %s95, %s96
    %p108 = scmp.eq.s32.totalorder %s18, 1
    %p109 = por %p107, %p108
    %p111 = scmp.ne.s32.totalorder %s96, %s110
    %p112 = scmp.eq.s32.totalorder %s18, 0
    %p113 = por %p111, %p112
    %s115 = sadd.s32 %s114, 1
    %p118 = scmp.eq.s32.totalorder %s12, 1
    %p119 = scmp.ne.s32.totalorder %s114, %s116
    %p120 = scmp.eq.s32.totalorder %s12, 0
    %p121 = por %p119, %p120
    %p122 = scmp.ne.s32.totalorder %s114, %s116
    %p123 = scmp.eq.s32.totalorder %s17, 1
    %p124 = por %p122, %p123
    %p125 = scmp.ne.s32.totalorder %s116, %s117
    %p126 = scmp.eq.s32.totalorder %s17, 0
    %p127 = por %p125, %p126
    %p128 = scmp.ne.s32.totalorder %s116, %s117
    %p129 = scmp.eq.s32.totalorder %s18, 1
    %p130 = por %p128, %p129
    %p132 = scmp.ne.s32.totalorder %s117, %s131
    %p133 = scmp.eq.s32.totalorder %s18, 0
    %p134 = por %p132, %p133
    %s136 = sadd.s32 %s135, 1
    %p139 = scmp.eq.s32.totalorder %s12, 1
    %p140 = scmp.ne.s32.totalorder %s135, %s137
    %p141 = scmp.eq.s32.totalorder %s12, 0
    %p142 = por %p140, %p141
    %p143 = scmp.ne.s32.totalorder %s135, %s137
    %p144 = scmp.eq.s32.totalorder %s17, 1
    %p145 = por %p143, %p144
    %p146 = scmp.ne.s32.totalorder %s137, %s138
    %p147 = scmp.eq.s32.totalorder %s17, 0
    %p148 = por %p146, %p147
    %p149 = scmp.ne.s32.totalorder %s137, %s138
    %p150 = scmp.eq.s32.totalorder %s18, 1
    %p151 = por %p149, %p150
    %p153 = scmp.ne.s32.totalorder %s138, %s152
    %p154 = scmp.eq.s32.totalorder %s18, 0
    %p155 = por %p153, %p154
    %s156 = ssub.s32 %s12, %s19
    %p157 = scmp.eq.s32.totalorder %s156, 0
    %s159 = sadd.s32 %s158, 1
    %s160 = scalar_select %p157, %s158, %s159
    %p163 = pneg %p157
    %p164 = scmp.eq.s32.totalorder %s12, 1
    %p165 = por %p163, %p164
    %p166 = scmp.ne.s32.totalorder %s158, %s161
    %p167 = scmp.eq.s32.totalorder %s12, 0
    %p168 = por %p166, %p167
    %p169 = scmp.ne.s32.totalorder %s158, %s161
    %p170 = scmp.eq.s32.totalorder %s17, 1
    %p171 = por %p169, %p170
    %p172 = scmp.ne.s32.totalorder %s161, %s162
    %p173 = scmp.eq.s32.totalorder %s17, 0
    %p174 = por %p172, %p173
    %p175 = scmp.ne.s32.totalorder %s161, %s162
    %p176 = scmp.eq.s32.totalorder %s18, 1
    %p177 = por %p175, %p176
    %p179 = scmp.ne.s32.totalorder %s162, %s178
    %p180 = scmp.eq.s32.totalorder %s18, 0
    %p181 = por %p179, %p180
    %p182 = scmp.le.s32.totalorder 1, %s12
    %p183 = scmp.lt.s32.totalorder %s12, 3
    %p184 = pnand %p182, %p183
    %p185 = pneg %p184
    // Predicated region
    $region9: #{_lambda_.1} parent=5 // pred_check
      _
    $region10: #{_lambda_.1} parent=5 // pred_check_branch
      %187 = sbr.rel (%p184) target = $region12
    $region11: #{_lambda_.1} parent=5 // pred_region
      %s188 = ssub.s32 %s12, 1
      // Predicated region
      $region13: #{_lambda_.1} parent=11 // pred_check
        %p189 = pneg %p85
      $region14: #{_lambda_.1} parent=11 // pred_check_branch
        %191 = sbr.rel (%p189) target = $region16
      $region15: #{_lambda_.1} parent=11 // pred_region
        _
      $region16: #{_lambda_.1} parent=11 // pred_fallthru
        _
      // Predicated region
      $region17: #{_lambda_.1} parent=11 // pred_check
        %p192 = pneg %p106
      $region18: #{_lambda_.1} parent=11 // pred_check_branch
        %194 = sbr.rel (%p192) target = $region20
      $region19: #{_lambda_.1} parent=11 // pred_region
        _
      $region20: #{_lambda_.1} parent=11 // pred_fallthru
        _
      // Predicated region
      $region21: #{_lambda_.1} parent=11 // pred_check
        %p195 = pneg %p127
      $region22: #{_lambda_.1} parent=11 // pred_check_branch
        %197 = sbr.rel (%p195) target = $region24
      $region23: #{_lambda_.1} parent=11 // pred_region
        _
      $region24: #{_lambda_.1} parent=11 // pred_fallthru
        _
      // Predicated region
      $region25: #{_lambda_.1} parent=11 // pred_check
        %p198 = pneg %p148
      $region26: #{_lambda_.1} parent=11 // pred_check_branch
        %200 = sbr.rel (%p198) target = $region28
      $region27: #{_lambda_.1} parent=11 // pred_region
        _
      $region28: #{_lambda_.1} parent=11 // pred_fallthru
        _
    $region12: #{_lambda_.1} parent=5 // pred_fallthru
      _
    %p201 = scmp.lt.s32.totalorder %s12, 2
    // Predicated region
    $region29: #{_lambda_.1} parent=5 // pred_check
      %p202 = pneg %p201
    $region30: #{_lambda_.1} parent=5 // pred_check_branch
      %204 = sbr.rel (%p202) target = $region32
    $region31: #{_lambda_.1} parent=5 // pred_region
      // Predicated region
      $region33: #{_lambda_.1} parent=31 // pred_check
        %p205 = pneg %p32
      $region34: #{_lambda_.1} parent=31 // pred_check_branch
        %207 = sbr.rel (%p205) target = $region36
      $region35: #{_lambda_.1} parent=31 // pred_region
        %s208 = smul.u32 8, %s12
        %p209 = scmp.lt.s32.totalorder %s208, 15
        %s210 = scalar_select %p209, %s208, 15
        %s211 = smul.addr %s210, 2
        %s212 = smul.addr %s211, 4
        %s213 = scalar_lea.vmem %s0, %s212
        %s214 = smul.u32 8, %s12
      $region36: #{_lambda_.1} parent=31 // pred_fallthru
        _
      // Predicated region
      $region37: #{_lambda_.1} parent=31 // pred_check
        %p215 = pneg %p58
      $region38: #{_lambda_.1} parent=31 // pred_check_branch
        %217 = sbr.rel (%p215) target = $region40
      $region39: #{_lambda_.1} parent=31 // pred_region
        %s218 = smul.u32 8, %s12
        %p219 = scmp.lt.s32.totalorder %s218, 15
        %s220 = scalar_select %p219, %s218, 15
        %s221 = smul.addr %s220, 2
        %s222 = smul.addr %s221, 4
        %s223 = scalar_lea.vmem %s1, %s222
        %s224 = smul.u32 8, %s12
      $region40: #{_lambda_.1} parent=31 // pred_fallthru
        _
    $region32: #{_lambda_.1} parent=5 // pred_fallthru
      _
    %p225 = scmp.le.s32.totalorder 1, %s12
    %p226 = scmp.lt.s32.totalorder %s12, 3
    %p227 = pnand %p225, %p226
    %p228 = pneg %p227
    // Predicated region
    $region41: #{_lambda_.1} parent=5 // pred_check
      _
    $region42: #{_lambda_.1} parent=5 // pred_check_branch
      %230 = sbr.rel (%p227) target = $region44
    $region43: #{_lambda_.1} parent=5 // pred_region
      %s231 = ssub.s32 %s12, 1
      %s232 = smul.u32 8, %s17
      %p233 = scmp.lt.s32.totalorder %s232, 15
      %s234 = scalar_select %p233, %s232, 15
      %s235 = smul.addr %s234, 2
      %s236 = smul.addr %s235, 4
      %s237 = scalar_lea.vmem %s0, %s236
      %p238 = pneg %p38
      %p239 = pneg %p35
      %s240 = smul.u32 8, %s17
      %p241 = scmp.lt.s32.totalorder %s240, 15
      %s242 = scalar_select %p241, %s240, 15
      %s243 = smul.addr %s242, 2
      %s244 = smul.addr %s243, 4
      %s245 = scalar_lea.vmem %s1, %s244
      %p246 = pneg %p64
      %p247 = pneg %p61
      %p248 = pneg %p85
      %p249 = pneg %p82
      %p250 = pneg %p106
      %p251 = pneg %p103
      %p252 = pneg %p127
      %p253 = pneg %p124
      %p254 = pneg %p148
      %p255 = pneg %p145
      %p256 = pneg %p174
      %p257 = pneg %p171
      %s258 = smul.u32 8, %s17
      %p259 = scmp.lt.s32.totalorder %s258, 15
      %s260 = scalar_select %p259, %s258, 15
      %s261 = smul.addr %s260, 2
      %s262 = smul.addr %s261, 8
      %s263 = scalar_lea.vmem %s6, %s262
      %s264 = smul.u32 8, %s17
      %p265 = scmp.lt.s32.totalorder %s264, 15
      %s266 = scalar_select %p265, %s264, 15
      %s267 = smul.addr %s266, 2
      %s268 = smul.addr %s267, 4
      %s269 = scalar_lea.vmem %s0, %s268
      %s270 = smul.u32 8, %s17
      %s271 = smul.u32 8, %s17
      %p272 = scmp.lt.s32.totalorder %s271, 15
      %s273 = scalar_select %p272, %s271, 15
      %s274 = smul.addr %s273, 2
      %s275 = smul.addr %s274, 4
      %s276 = scalar_lea.vmem %s1, %s275
      %s277 = smul.u32 8, %s17
      %s278 = smul.u32 8, %s17
      %p279 = scmp.lt.s32.totalorder %s278, 15
      %s280 = scalar_select %p279, %s278, 15
      %s281 = smul.addr %s280, 2
      %s282 = smul.addr %s281, 8
      %s283 = scalar_lea.vmem %s6, %s282
      %s284 = smul.u32 8, %s17
      %v286 = vld [vmem:[%s269] sm:$0xf]
      %v287 = vld [vmem:[%s269 + $0x4] sm:$0xf]
      %v288 = vld [vmem:[%s269 + $0x8] sm:$0xf]
      %v289 = vld [vmem:[%s269 + $0xc] sm:$0xf]
      %v290 = vld [vmem:[%s269 + $0x10] sm:$0xf]
      %v291 = vld [vmem:[%s269 + $0x14] sm:$0xf]
      %v292 = vld [vmem:[%s269 + $0x18] sm:$0xf]
      %v293 = vld [vmem:[%s269 + $0x1c] sm:$0xf]
      %v294 = vld [vmem:[%s269 + $0x20] sm:$0xf]
      %v295 = vld [vmem:[%s269 + $0x24] sm:$0xf]
      %v296 = vld [vmem:[%s269 + $0x28] sm:$0xf]
      %v297 = vld [vmem:[%s269 + $0x2c] sm:$0xf]
      %v298 = vld [vmem:[%s269 + $0x30] sm:$0xf]
      %v299 = vld [vmem:[%s269 + $0x34] sm:$0xf]
      %v300 = vld [vmem:[%s269 + $0x38] sm:$0xf]
      %v301 = vld [vmem:[%s269 + $0x3c] sm:$0xf]
      %v302 = vld [vmem:[%s276] sm:$0xf]
      %v303 = vld [vmem:[%s276 + $0x4] sm:$0xf]
      %v304 = vld [vmem:[%s276 + $0x8] sm:$0xf]
      %v305 = vld [vmem:[%s276 + $0xc] sm:$0xf]
      %v306 = vld [vmem:[%s276 + $0x10] sm:$0xf]
      %v307 = vld [vmem:[%s276 + $0x14] sm:$0xf]
      %v308 = vld [vmem:[%s276 + $0x18] sm:$0xf]
      %v309 = vld [vmem:[%s276 + $0x1c] sm:$0xf]
      %v310 = vld [vmem:[%s276 + $0x20] sm:$0xf]
      %v311 = vld [vmem:[%s276 + $0x24] sm:$0xf]
      %v312 = vld [vmem:[%s276 + $0x28] sm:$0xf]
      %v313 = vld [vmem:[%s276 + $0x2c] sm:$0xf]
      %v314 = vld [vmem:[%s276 + $0x30] sm:$0xf]
      %v315 = vld [vmem:[%s276 + $0x34] sm:$0xf]
      %v316 = vld [vmem:[%s276 + $0x38] sm:$0xf]
      %v317 = vld [vmem:[%s276 + $0x3c] sm:$0xf]
      %v318 = vld [vmem:[%s2] sm:$0xf]
      %v319 = vld [vmem:[%s2 + $0x4] sm:$0xf]
      %v320 = vld [vmem:[%s2 + $0x8] sm:$0xf]
      %v321 = vld [vmem:[%s2 + $0xc] sm:$0xf]
      %v338 = vunpack.c.l.b16 %v286
      %v339 = vunpack.c.l.b16 %v287
      %v340 = vunpack.c.l.b16 %v288
      %v341 = vunpack.c.l.b16 %v289
      %v342 = vunpack.c.l.b16 %v290
      %v343 = vunpack.c.l.b16 %v291
      %v344 = vunpack.c.l.b16 %v292
      %v345 = vunpack.c.l.b16 %v293
      %v346 = vunpack.c.l.b16 %v294
      %v347 = vunpack.c.l.b16 %v295
      %v348 = vunpack.c.l.b16 %v296
      %v349 = vunpack.c.l.b16 %v297
      %v350 = vunpack.c.l.b16 %v298
      %v351 = vunpack.c.l.b16 %v299
      %v352 = vunpack.c.l.b16 %v300
      %v353 = vunpack.c.l.b16 %v301
      %v354 = vpack.c.b16 %v339, %v338
      %v355 = vpack.c.b16 %v341, %v340
      %v356 = vpack.c.b16 %v343, %v342
      %v357 = vpack.c.b16 %v345, %v344
      %v358 = vpack.c.b16 %v347, %v346
      %v359 = vpack.c.b16 %v349, %v348
      %v360 = vpack.c.b16 %v351, %v350
      %v361 = vpack.c.b16 %v353, %v352
      %v366 = vunpack.c.l.b16 %v318
      %v367 = vunpack.c.l.b16 %v319
      %v368 = vunpack.c.l.b16 %v320
      %v369 = vunpack.c.l.b16 %v321
      %v370 = vpack.c.b16 %v367, %v366
      %v371 = vpack.c.b16 %v369, %v368
      %vm374 = vcmask 261120
      %v376 = vsel %vm374, %v354, 0
      %v379 = vsel %vm374, %v355, 0
      %v382 = vsel %vm374, %v356, 0
      %v385 = vsel %vm374, %v357, 0
      %v388 = vsel %vm374, %v358, 0
      %v391 = vsel %vm374, %v359, 0
      %v394 = vsel %vm374, %v360, 0
      %v397 = vsel %vm374, %v361, 0
      %399 = vmatprep.subr.bf16.mxu0 0
      %400 = vmatpush1.bf16.msra.mxu0 %v370
      %401 = vmatprep.subr.bf16.mxu0 0
      %402 = vmatpush1.bf16.msra.mxu0 %v371
      %403 = vmatprep.subr.bf16.mxu0 0
      %404 = vmatpush1.bf16.msra.mxu0 0
      %405 = vmatprep.subr.bf16.mxu0 0
      %406 = vmatpush1.bf16.msra.mxu0 0
      %407 = vmatprep.subr.bf16.mxu0 0
      %408 = vmatpush1.bf16.msra.mxu0 0
      %409 = vmatprep.subr.bf16.mxu0 0
      %410 = vmatpush1.bf16.msra.mxu0 0
      %411 = vmatprep.subr.bf16.mxu0 0
      %412 = vmatpush1.bf16.msra.mxu0 0
      %413 = vmatprep.subr.bf16.mxu0 0
      %414 = vmatpush1.bf16.msra.mxu0 0
      %415 = vmatprep.subr.bf16.mxu0 0
      %416 = vmatpush1.bf16.msra.mxu0 0
      %417 = vmatprep.subr.bf16.mxu0 0
      %418 = vmatpush1.bf16.msra.mxu0 0
      %419 = vmatprep.subr.bf16.mxu0 0
      %420 = vmatpush1.bf16.msra.mxu0 0
      %421 = vmatprep.subr.bf16.mxu0 0
      %422 = vmatpush1.bf16.msra.mxu0 0
      %423 = vmatprep.subr.bf16.mxu0 0
      %424 = vmatpush1.bf16.msra.mxu0 0
      %425 = vmatprep.subr.bf16.mxu0 0
      %426 = vmatpush1.bf16.msra.mxu0 0
      %427 = vmatprep.subr.bf16.mxu0 0
      %428 = vmatpush1.bf16.msra.mxu0 0
      %429 = vmatprep.subr.bf16.mxu0 0
      %430 = vmatpush1.bf16.msra.mxu0 0
      %431 = vmatprep.mubr.bf16.mxu0 0
      %432 = vmatmul.mubr.bf16.gmra.mrb[0].mxu0 %v376
      %v433 = vpop.f32.mrb[0].mxu0
      %v434 = vadd.f32 0.0, %v433
      %v435 = vpop.f32.mrb[0].mxu0
      %v436 = vpop.f32.mrb[0].mxu0
      %v437 = vadd.f32 0.0, %v436
      %v438 = vpop.f32.mrb[0].mxu0
      %439 = vmatprep.mubr.bf16.mxu0 0
      %440 = vmatmul.mubr.bf16.gmra.mrb[0].mxu0 %v379
      %v441 = vpop.f32.mrb[0].mxu0
      %v442 = vadd.f32 0.0, %v441
      %v443 = vpop.f32.mrb[0].mxu0
      %v444 = vpop.f32.mrb[0].mxu0
      %v445 = vadd.f32 0.0, %v444
      %v446 = vpop.f32.mrb[0].mxu0
      %447 = vmatprep.mubr.bf16.mxu0 0
      %448 = vmatmul.mubr.bf16.gmra.mrb[0].mxu0 %v382
      %v449 = vpop.f32.mrb[0].mxu0
      %v450 = vadd.f32 0.0, %v449
      %v451 = vpop.f32.mrb[0].mxu0
      %v452 = vpop.f32.mrb[0].mxu0
      %v453 = vadd.f32 0.0, %v452
      %v454 = vpop.f32.mrb[0].mxu0
      %455 = vmatprep.mubr.bf16.mxu0 0
      %456 = vmatmul.mubr.bf16.gmra.mrb[0].mxu0 %v385
      %v457 = vpop.f32.mrb[0].mxu0
      %v458 = vadd.f32 0.0, %v457
      %v459 = vpop.f32.mrb[0].mxu0
      %v460 = vpop.f32.mrb[0].mxu0
      %v461 = vadd.f32 0.0, %v460
      %v462 = vpop.f32.mrb[0].mxu0
      %463 = vmatprep.mubr.bf16.mxu0 0
      %464 = vmatmul.mubr.bf16.gmra.mrb[0].mxu0 %v388
      %v465 = vpop.f32.mrb[0].mxu0
      %v466 = vadd.f32 0.0, %v465
      %v467 = vpop.f32.mrb[0].mxu0
      %v468 = vpop.f32.mrb[0].mxu0
      %v469 = vadd.f32 0.0, %v468
      %v470 = vpop.f32.mrb[0].mxu0
      %471 = vmatprep.mubr.bf16.mxu0 0
      %472 = vmatmul.mubr.bf16.gmra.mrb[0].mxu0 %v391
      %v473 = vpop.f32.mrb[0].mxu0
      %v474 = vadd.f32 0.0, %v473
      %v475 = vpop.f32.mrb[0].mxu0
      %v476 = vpop.f32.mrb[0].mxu0
      %v477 = vadd.f32 0.0, %v476
      %v478 = vpop.f32.mrb[0].mxu0
      %479 = vmatprep.mubr.bf16.mxu0 0
      %480 = vmatmul.mubr.bf16.gmra.mrb[0].mxu0 %v394
      %v481 = vpop.f32.mrb[0].mxu0
      %v482 = vadd.f32 0.0, %v481
      %v483 = vpop.f32.mrb[0].mxu0
      %v484 = vpop.f32.mrb[0].mxu0
      %v485 = vadd.f32 0.0, %v484
      %v486 = vpop.f32.mrb[0].mxu0
      %487 = vmatprep.mubr.bf16.mxu0 0
      %488 = vmatmul.mubr.bf16.gmra.mrb[0].mxu0 %v397
      %v489 = vpop.f32.mrb[0].mxu0
      %v490 = vadd.f32 0.0, %v489
      %v491 = vpop.f32.mrb[0].mxu0
      %v492 = vpop.f32.mrb[0].mxu0
      %v493 = vadd.f32 0.0, %v492
      %v494 = vpop.f32.mrb[0].mxu0
      %495 = vdwg.mxu0
      %v496 = vld [vmem:[%s3] sm:$0xf]
      %v497 = vld [vmem:[%s3 + $0x4] sm:$0xf]
      %v498 = vld [vmem:[%s3 + $0x8] sm:$0xf]
      %v499 = vld [vmem:[%s3 + $0xc] sm:$0xf]
      %v516 = vunpack.c.l.b16 %v302
      %v517 = vunpack.c.l.b16 %v303
      %v518 = vunpack.c.l.b16 %v304
      %v519 = vunpack.c.l.b16 %v305
      %v520 = vunpack.c.l.b16 %v306
      %v521 = vunpack.c.l.b16 %v307
      %v522 = vunpack.c.l.b16 %v308
      %v523 = vunpack.c.l.b16 %v309
      %v524 = vunpack.c.l.b16 %v310
      %v525 = vunpack.c.l.b16 %v311
      %v526 = vunpack.c.l.b16 %v312
      %v527 = vunpack.c.l.b16 %v313
      %v528 = vunpack.c.l.b16 %v314
      %v529 = vunpack.c.l.b16 %v315
      %v530 = vunpack.c.l.b16 %v316
      %v531 = vunpack.c.l.b16 %v317
      %v532 = vpack.c.b16 %v517, %v516
      %v533 = vpack.c.b16 %v519, %v518
      %v534 = vpack.c.b16 %v521, %v520
      %v535 = vpack.c.b16 %v523, %v522
      %v536 = vpack.c.b16 %v525, %v524
      %v537 = vpack.c.b16 %v527, %v526
      %v538 = vpack.c.b16 %v529, %v528
      %v539 = vpack.c.b16 %v531, %v530
      %v544 = vunpack.c.l.b16 %v496
      %v545 = vunpack.c.l.b16 %v497
      %v546 = vunpack.c.l.b16 %v498
      %v547 = vunpack.c.l.b16 %v499
      %v548 = vpack.c.b16 %v545, %v544
      %v549 = vpack.c.b16 %v547, %v546
      %v553 = vsel %vm374, %v532, 0
      %v556 = vsel %vm374, %v533, 0
      %v559 = vsel %vm374, %v534, 0
      %v562 = vsel %vm374, %v535, 0
      %v565 = vsel %vm374, %v536, 0
      %v568 = vsel %vm374, %v537, 0
      %v571 = vsel %vm374, %v538, 0
      %v574 = vsel %vm374, %v539, 0
      %576 = vmatprep.subr.bf16.mxu0 0
      %577 = vmatpush1.bf16.msra.mxu0 %v548
      %578 = vmatprep.subr.bf16.mxu0 0
      %579 = vmatpush1.bf16.msra.mxu0 %v549
      %580 = vmatprep.subr.bf16.mxu0 0
      %581 = vmatpush1.bf16.msra.mxu0 0
      %582 = vmatprep.subr.bf16.mxu0 0
      %583 = vmatpush1.bf16.msra.mxu0 0
      %584 = vmatprep.subr.bf16.mxu0 0
      %585 = vmatpush1.bf16.msra.mxu0 0
      %586 = vmatprep.subr.bf16.mxu0 0
      %587 = vmatpush1.bf16.msra.mxu0 0
      %588 = vmatprep.subr.bf16.mxu0 0
      %589 = vmatpush1.bf16.msra.mxu0 0
      %590 = vmatprep.subr.bf16.mxu0 0
      %591 = vmatpush1.bf16.msra.mxu0 0
      %592 = vmatprep.subr.bf16.mxu0 0
      %593 = vmatpush1.bf16.msra.mxu0 0
      %594 = vmatprep.subr.bf16.mxu0 0
      %595 = vmatpush1.bf16.msra.mxu0 0
      %596 = vmatprep.subr.bf16.mxu0 0
      %597 = vmatpush1.bf16.msra.mxu0 0
      %598 = vmatprep.subr.bf16.mxu0 0
      %599 = vmatpush1.bf16.msra.mxu0 0
      %600 = vmatprep.subr.bf16.mxu0 0
      %601 = vmatpush1.bf16.msra.mxu0 0
      %602 = vmatprep.subr.bf16.mxu0 0
      %603 = vmatpush1.bf16.msra.mxu0 0
      %604 = vmatprep.subr.bf16.mxu0 0
      %605 = vmatpush1.bf16.msra.mxu0 0
      %606 = vmatprep.subr.bf16.mxu0 0
      %607 = vmatpush1.bf16.msra.mxu0 0
      %608 = vmatprep.mubr.bf16.mxu0 0
      %609 = vmatmul.mubr.bf16.gmra.mrb[0].mxu0 %v553
      %v610 = vpop.f32.mrb[0].mxu0
      %v611 = vadd.f32 0.0, %v610
      %v612 = vpop.f32.mrb[0].mxu0
      %v613 = vpop.f32.mrb[0].mxu0
      %v614 = vadd.f32 0.0, %v613
      %v615 = vpop.f32.mrb[0].mxu0
      %616 = vmatprep.mubr.bf16.mxu0 0
      %617 = vmatmul.mubr.bf16.gmra.mrb[0].mxu0 %v556
      %v618 = vpop.f32.mrb[0].mxu0
      %v619 = vadd.f32 0.0, %v618
      %v620 = vpop.f32.mrb[0].mxu0
      %v621 = vpop.f32.mrb[0].mxu0
      %v622 = vadd.f32 0.0, %v621
      %v623 = vpop.f32.mrb[0].mxu0
      %624 = vmatprep.mubr.bf16.mxu0 0
      %625 = vmatmul.mubr.bf16.gmra.mrb[0].mxu0 %v559
      %v626 = vpop.f32.mrb[0].mxu0
      %v627 = vadd.f32 0.0, %v626
      %v628 = vpop.f32.mrb[0].mxu0
      %v629 = vpop.f32.mrb[0].mxu0
      %v630 = vadd.f32 0.0, %v629
      %v631 = vpop.f32.mrb[0].mxu0
      %632 = vmatprep.mubr.bf16.mxu0 0
      %633 = vmatmul.mubr.bf16.gmra.mrb[0].mxu0 %v562
      %v634 = vpop.f32.mrb[0].mxu0
      %v635 = vadd.f32 0.0, %v634
      %v636 = vpop.f32.mrb[0].mxu0
      %v637 = vpop.f32.mrb[0].mxu0
      %v638 = vadd.f32 0.0, %v637
      %v639 = vpop.f32.mrb[0].mxu0
      %640 = vmatprep.mubr.bf16.mxu0 0
      %641 = vmatmul.mubr.bf16.gmra.mrb[0].mxu0 %v565
      %v642 = vpop.f32.mrb[0].mxu0
      %v643 = vadd.f32 0.0, %v642
      %v644 = vpop.f32.mrb[0].mxu0
      %v645 = vpop.f32.mrb[0].mxu0
      %v646 = vadd.f32 0.0, %v645
      %v647 = vpop.f32.mrb[0].mxu0
      %648 = vmatprep.mubr.bf16.mxu0 0
      %649 = vmatmul.mubr.bf16.gmra.mrb[0].mxu0 %v568
      %v650 = vpop.f32.mrb[0].mxu0
      %v651 = vadd.f32 0.0, %v650
      %v652 = vpop.f32.mrb[0].mxu0
      %v653 = vpop.f32.mrb[0].mxu0
      %v654 = vadd.f32 0.0, %v653
      %v655 = vpop.f32.mrb[0].mxu0
      %656 = vmatprep.mubr.bf16.mxu0 0
      %657 = vmatmul.mubr.bf16.gmra.mrb[0].mxu0 %v571
      %v658 = vpop.f32.mrb[0].mxu0
      %v659 = vadd.f32 0.0, %v658
      %v660 = vpop.f32.mrb[0].mxu0
      %v661 = vpop.f32.mrb[0].mxu0
      %v662 = vadd.f32 0.0, %v661
      %v663 = vpop.f32.mrb[0].mxu0
      %664 = vmatprep.mubr.bf16.mxu0 0
      %665 = vmatmul.mubr.bf16.gmra.mrb[0].mxu0 %v574
      %v666 = vpop.f32.mrb[0].mxu0
      %v667 = vadd.f32 0.0, %v666
      %v668 = vpop.f32.mrb[0].mxu0
      %v669 = vpop.f32.mrb[0].mxu0
      %v670 = vadd.f32 0.0, %v669
      %v671 = vpop.f32.mrb[0].mxu0
      %672 = vdwg.mxu0
      %689 = vrot.lane.b32.xlu0 %v434, 120
      %v690 = vpop.permute.xlu0 %689
      %691 = vrot.lane.b32.xlu0 %v437, 120
      %v692 = vpop.permute.xlu0 %691
      %693 = vrot.lane.b32.xlu0 %v442, 120
      %v694 = vpop.permute.xlu0 %693
      %695 = vrot.lane.b32.xlu0 %v445, 120
      %v696 = vpop.permute.xlu0 %695
      %697 = vrot.lane.b32.xlu0 %v450, 120
      %v698 = vpop.permute.xlu0 %697
      %699 = vrot.lane.b32.xlu0 %v453, 120
      %v700 = vpop.permute.xlu0 %699
      %701 = vrot.lane.b32.xlu0 %v458, 120
      %v702 = vpop.permute.xlu0 %701
      %703 = vrot.lane.b32.xlu0 %v461, 120
      %v704 = vpop.permute.xlu0 %703
      %705 = vrot.lane.b32.xlu0 %v466, 120
      %v706 = vpop.permute.xlu0 %705
      %707 = vrot.lane.b32.xlu0 %v469, 120
      %v708 = vpop.permute.xlu0 %707
      %709 = vrot.lane.b32.xlu0 %v474, 120
      %v710 = vpop.permute.xlu0 %709
      %711 = vrot.lane.b32.xlu0 %v477, 120
      %v712 = vpop.permute.xlu0 %711
      %713 = vrot.lane.b32.xlu0 %v482, 120
      %v714 = vpop.permute.xlu0 %713
      %715 = vrot.lane.b32.xlu0 %v485, 120
      %v716 = vpop.permute.xlu0 %715
      %717 = vrot.lane.b32.xlu0 %v490, 120
      %v718 = vpop.permute.xlu0 %717
      %719 = vrot.lane.b32.xlu0 %v493, 120
      %v720 = vpop.permute.xlu0 %719
      %737 = vrot.lane.b32.xlu0 %v434, 112
      %v738 = vpop.permute.xlu0 %737
      %739 = vrot.lane.b32.xlu0 %v437, 112
      %v740 = vpop.permute.xlu0 %739
      %741 = vrot.lane.b32.xlu0 %v442, 112
      %v742 = vpop.permute.xlu0 %741
      %743 = vrot.lane.b32.xlu0 %v445, 112
      %v744 = vpop.permute.xlu0 %743
      %745 = vrot.lane.b32.xlu0 %v450, 112
      %v746 = vpop.permute.xlu0 %745
      %747 = vrot.lane.b32.xlu0 %v453, 112
      %v748 = vpop.permute.xlu0 %747
      %749 = vrot.lane.b32.xlu0 %v458, 112
      %v750 = vpop.permute.xlu0 %749
      %751 = vrot.lane.b32.xlu0 %v461, 112
      %v752 = vpop.permute.xlu0 %751
      %753 = vrot.lane.b32.xlu0 %v466, 112
      %v754 = vpop.permute.xlu0 %753
      %755 = vrot.lane.b32.xlu0 %v469, 112
      %v756 = vpop.permute.xlu0 %755
      %757 = vrot.lane.b32.xlu0 %v474, 112
      %v758 = vpop.permute.xlu0 %757
      %759 = vrot.lane.b32.xlu0 %v477, 112
      %v760 = vpop.permute.xlu0 %759
      %761 = vrot.lane.b32.xlu0 %v482, 112
      %v762 = vpop.permute.xlu0 %761
      %763 = vrot.lane.b32.xlu0 %v485, 112
      %v764 = vpop.permute.xlu0 %763
      %765 = vrot.lane.b32.xlu0 %v490, 112
      %v766 = vpop.permute.xlu0 %765
      %767 = vrot.lane.b32.xlu0 %v493, 112
      %v768 = vpop.permute.xlu0 %767
      %785 = vrot.lane.b32.xlu0 %v434, 104
      %v786 = vpop.permute.xlu0 %785
      %787 = vrot.lane.b32.xlu0 %v437, 104
      %v788 = vpop.permute.xlu0 %787
      %789 = vrot.lane.b32.xlu0 %v442, 104
      %v790 = vpop.permute.xlu0 %789
      %791 = vrot.lane.b32.xlu0 %v445, 104
      %v792 = vpop.permute.xlu0 %791
      %793 = vrot.lane.b32.xlu0 %v450, 104
      %v794 = vpop.permute.xlu0 %793
      %795 = vrot.lane.b32.xlu0 %v453, 104
      %v796 = vpop.permute.xlu0 %795
      %797 = vrot.lane.b32.xlu0 %v458, 104
      %v798 = vpop.permute.xlu0 %797
      %799 = vrot.lane.b32.xlu0 %v461, 104
      %v800 = vpop.permute.xlu0 %799
      %801 = vrot.lane.b32.xlu0 %v466, 104
      %v802 = vpop.permute.xlu0 %801
      %803 = vrot.lane.b32.xlu0 %v469, 104
      %v804 = vpop.permute.xlu0 %803
      %805 = vrot.lane.b32.xlu0 %v474, 104
      %v806 = vpop.permute.xlu0 %805
      %807 = vrot.lane.b32.xlu0 %v477, 104
      %v808 = vpop.permute.xlu0 %807
      %809 = vrot.lane.b32.xlu0 %v482, 104
      %v810 = vpop.permute.xlu0 %809
      %811 = vrot.lane.b32.xlu0 %v485, 104
      %v812 = vpop.permute.xlu0 %811
      %813 = vrot.lane.b32.xlu0 %v490, 104
      %v814 = vpop.permute.xlu0 %813
      %815 = vrot.lane.b32.xlu0 %v493, 104
      %v816 = vpop.permute.xlu0 %815
      %v833 = vpack.c.bf16 %v437, %v434
      %v834 = vpack.c.bf16 %v445, %v442
      %v835 = vpack.c.bf16 %v453, %v450
      %v836 = vpack.c.bf16 %v461, %v458
      %v837 = vpack.c.bf16 %v469, %v466
      %v838 = vpack.c.bf16 %v477, %v474
      %v839 = vpack.c.bf16 %v485, %v482
      %v840 = vpack.c.bf16 %v493, %v490
      %v841 = vpack.c.bf16 %v692, %v690
      %v842 = vpack.c.bf16 %v696, %v694
      %v843 = vpack.c.bf16 %v700, %v698
      %v844 = vpack.c.bf16 %v704, %v702
      %v845 = vpack.c.bf16 %v708, %v706
      %v846 = vpack.c.bf16 %v712, %v710
      %v847 = vpack.c.bf16 %v716, %v714
      %v848 = vpack.c.bf16 %v720, %v718
      %v849 = vpack.c.bf16 %v740, %v738
      %v850 = vpack.c.bf16 %v744, %v742
      %v851 = vpack.c.bf16 %v748, %v746
      %v852 = vpack.c.bf16 %v752, %v750
      %v853 = vpack.c.bf16 %v756, %v754
      %v854 = vpack.c.bf16 %v760, %v758
      %v855 = vpack.c.bf16 %v764, %v762
      %v856 = vpack.c.bf16 %v768, %v766
      %v857 = vpack.c.bf16 %v788, %v786
      %v858 = vpack.c.bf16 %v792, %v790
      %v859 = vpack.c.bf16 %v796, %v794
      %v860 = vpack.c.bf16 %v800, %v798
      %v861 = vpack.c.bf16 %v804, %v802
      %v862 = vpack.c.bf16 %v808, %v806
      %v863 = vpack.c.bf16 %v812, %v810
      %v864 = vpack.c.bf16 %v816, %v814
      %881 = vrot.lane.b32.xlu0 %v611, 120
      %v882 = vpop.permute.xlu0 %881
      %883 = vrot.lane.b32.xlu0 %v614, 120
      %v884 = vpop.permute.xlu0 %883
      %885 = vrot.lane.b32.xlu0 %v619, 120
      %v886 = vpop.permute.xlu0 %885
      %887 = vrot.lane.b32.xlu0 %v622, 120
      %v888 = vpop.permute.xlu0 %887
      %889 = vrot.lane.b32.xlu0 %v627, 120
      %v890 = vpop.permute.xlu0 %889
      %891 = vrot.lane.b32.xlu0 %v630, 120
      %v892 = vpop.permute.xlu0 %891
      %893 = vrot.lane.b32.xlu0 %v635, 120
      %v894 = vpop.permute.xlu0 %893
      %895 = vrot.lane.b32.xlu0 %v638, 120
      %v896 = vpop.permute.xlu0 %895
      %897 = vrot.lane.b32.xlu0 %v643, 120
      %v898 = vpop.permute.xlu0 %897
      %899 = vrot.lane.b32.xlu0 %v646, 120
      %v900 = vpop.permute.xlu0 %899
      %901 = vrot.lane.b32.xlu0 %v651, 120
      %v902 = vpop.permute.xlu0 %901
      %903 = vrot.lane.b32.xlu0 %v654, 120
      %v904 = vpop.permute.xlu0 %903
      %905 = vrot.lane.b32.xlu0 %v659, 120
      %v906 = vpop.permute.xlu0 %905
      %907 = vrot.lane.b32.xlu0 %v662, 120
      %v908 = vpop.permute.xlu0 %907
      %909 = vrot.lane.b32.xlu0 %v667, 120
      %v910 = vpop.permute.xlu0 %909
      %911 = vrot.lane.b32.xlu0 %v670, 120
      %v912 = vpop.permute.xlu0 %911
      %929 = vrot.lane.b32.xlu0 %v611, 112
      %v930 = vpop.permute.xlu0 %929
      %931 = vrot.lane.b32.xlu0 %v614, 112
      %v932 = vpop.permute.xlu0 %931
      %933 = vrot.lane.b32.xlu0 %v619, 112
      %v934 = vpop.permute.xlu0 %933
      %935 = vrot.lane.b32.xlu0 %v622, 112
      %v936 = vpop.permute.xlu0 %935
      %937 = vrot.lane.b32.xlu0 %v627, 112
      %v938 = vpop.permute.xlu0 %937
      %939 = vrot.lane.b32.xlu0 %v630, 112
      %v940 = vpop.permute.xlu0 %939
      %941 = vrot.lane.b32.xlu0 %v635, 112
      %v942 = vpop.permute.xlu0 %941
      %943 = vrot.lane.b32.xlu0 %v638, 112
      %v944 = vpop.permute.xlu0 %943
      %945 = vrot.lane.b32.xlu0 %v643, 112
      %v946 = vpop.permute.xlu0 %945
      %947 = vrot.lane.b32.xlu0 %v646, 112
      %v948 = vpop.permute.xlu0 %947
      %949 = vrot.lane.b32.xlu0 %v651, 112
      %v950 = vpop.permute.xlu0 %949
      %951 = vrot.lane.b32.xlu0 %v654, 112
      %v952 = vpop.permute.xlu0 %951
      %953 = vrot.lane.b32.xlu0 %v659, 112
      %v954 = vpop.permute.xlu0 %953
      %955 = vrot.lane.b32.xlu0 %v662, 112
      %v956 = vpop.permute.xlu0 %955
      %957 = vrot.lane.b32.xlu0 %v667, 112
      %v958 = vpop.permute.xlu0 %957
      %959 = vrot.lane.b32.xlu0 %v670, 112
      %v960 = vpop.permute.xlu0 %959
      %977 = vrot.lane.b32.xlu0 %v611, 104
      %v978 = vpop.permute.xlu0 %977
      %979 = vrot.lane.b32.xlu0 %v614, 104
      %v980 = vpop.permute.xlu0 %979
      %981 = vrot.lane.b32.xlu0 %v619, 104
      %v982 = vpop.permute.xlu0 %981
      %983 = vrot.lane.b32.xlu0 %v622, 104
      %v984 = vpop.permute.xlu0 %983
      %985 = vrot.lane.b32.xlu0 %v627, 104
      %v986 = vpop.permute.xlu0 %985
      %987 = vrot.lane.b32.xlu0 %v630, 104
      %v988 = vpop.permute.xlu0 %987
      %989 = vrot.lane.b32.xlu0 %v635, 104
      %v990 = vpop.permute.xlu0 %989
      %991 = vrot.lane.b32.xlu0 %v638, 104
      %v992 = vpop.permute.xlu0 %991
      %993 = vrot.lane.b32.xlu0 %v643, 104
      %v994 = vpop.permute.xlu0 %993
      %995 = vrot.lane.b32.xlu0 %v646, 104
      %v996 = vpop.permute.xlu0 %995
      %997 = vrot.lane.b32.xlu0 %v651, 104
      %v998 = vpop.permute.xlu0 %997
      %999 = vrot.lane.b32.xlu0 %v654, 104
      %v1000 = vpop.permute.xlu0 %999
      %1001 = vrot.lane.b32.xlu0 %v659, 104
      %v1002 = vpop.permute.xlu0 %1001
      %1003 = vrot.lane.b32.xlu0 %v662, 104
      %v1004 = vpop.permute.xlu0 %1003
      %1005 = vrot.lane.b32.xlu0 %v667, 104
      %v1006 = vpop.permute.xlu0 %1005
      %1007 = vrot.lane.b32.xlu0 %v670, 104
      %v1008 = vpop.permute.xlu0 %1007
      %v1025 = vpack.c.bf16 %v614, %v611
      %v1026 = vpack.c.bf16 %v622, %v619
      %v1027 = vpack.c.bf16 %v630, %v627
      %v1028 = vpack.c.bf16 %v638, %v635
      %v1029 = vpack.c.bf16 %v646, %v643
      %v1030 = vpack.c.bf16 %v654, %v651
      %v1031 = vpack.c.bf16 %v662, %v659
      %v1032 = vpack.c.bf16 %v670, %v667
      %v1033 = vpack.c.bf16 %v884, %v882
      %v1034 = vpack.c.bf16 %v888, %v886
      %v1035 = vpack.c.bf16 %v892, %v890
      %v1036 = vpack.c.bf16 %v896, %v894
      %v1037 = vpack.c.bf16 %v900, %v898
      %v1038 = vpack.c.bf16 %v904, %v902
      %v1039 = vpack.c.bf16 %v908, %v906
      %v1040 = vpack.c.bf16 %v912, %v910
      %v1041 = vpack.c.bf16 %v932, %v930
      %v1042 = vpack.c.bf16 %v936, %v934
      %v1043 = vpack.c.bf16 %v940, %v938
      %v1044 = vpack.c.bf16 %v944, %v942
      %v1045 = vpack.c.bf16 %v948, %v946
      %v1046 = vpack.c.bf16 %v952, %v950
      %v1047 = vpack.c.bf16 %v956, %v954
      %v1048 = vpack.c.bf16 %v960, %v958
      %v1049 = vpack.c.bf16 %v980, %v978
      %v1050 = vpack.c.bf16 %v984, %v982
      %v1051 = vpack.c.bf16 %v988, %v986
      %v1052 = vpack.c.bf16 %v992, %v990
      %v1053 = vpack.c.bf16 %v996, %v994
      %v1054 = vpack.c.bf16 %v1000, %v998
      %v1055 = vpack.c.bf16 %v1004, %v1002
      %v1056 = vpack.c.bf16 %v1008, %v1006
      %vm1057 = vcmask 64512
      %v1059 = vsel %vm1057, %v833, 0
      %v1062 = vsel %vm1057, %v1025, 0
      %1064 = vmatprep.subr.bf16.mxu0 0
      %1065 = vmatpush1.bf16.xpose.msra.mxu0 %v1062
      %1066 = vmatprep.subr.bf16.mxu0 0
      %1067 = vmatpush1.bf16.xpose.msra.mxu0 0
      %1068 = vmatprep.subr.bf16.mxu0 0
      %1069 = vmatpush1.bf16.xpose.msra.mxu0 0
      %1070 = vmatprep.subr.bf16.mxu0 0
      %1071 = vmatpush1.bf16.xpose.msra.mxu0 0
      %1072 = vmatprep.subr.bf16.mxu0 0
      %1073 = vmatpush1.bf16.xpose.msra.mxu0 0
      %1074 = vmatprep.subr.bf16.mxu0 0
      %1075 = vmatpush1.bf16.xpose.msra.mxu0 0
      %1076 = vmatprep.subr.bf16.mxu0 0
      %1077 = vmatpush1.bf16.xpose.msra.mxu0 0
      %1078 = vmatprep.subr.bf16.mxu0 0
      %1079 = vmatpush1.bf16.xpose.msra.mxu0 0
      %1080 = vmatprep.subr.bf16.mxu0 0
      %1081 = vmatpush1.bf16.xpose.msra.mxu0 0
      %1082 = vmatprep.subr.bf16.mxu0 0
      %1083 = vmatpush1.bf16.xpose.msra.mxu0 0
      %1084 = vmatprep.subr.bf16.mxu0 0
      %1085 = vmatpush1.bf16.xpose.msra.mxu0 0
      %1086 = vmatprep.subr.bf16.mxu0 0
      %1087 = vmatpush1.bf16.xpose.msra.mxu0 0
      %1088 = vmatprep.subr.bf16.mxu0 0
      %1089 = vmatpush1.bf16.xpose.msra.mxu0 0
      %1090 = vmatprep.subr.bf16.mxu0 0
      %1091 = vmatpush1.bf16.xpose.msra.mxu0 0
      %1092 = vmatprep.subr.bf16.mxu0 0
      %1093 = vmatpush1.bf16.xpose.msra.mxu0 0
      %1094 = vmatprep.subr.bf16.mxu0 0
      %1095 = vmatpush1.bf16.xpose.msra.mxu0 0
      %1096 = vmatprep.mubr.bf16.mxu0 0
      %1097 = vmatmul.mubr.bf16.gmra.mrb[0].mxu0 %v1059
      %v1098 = vpop.f32.mrb[0].mxu0
      %v1099 = vadd.f32 0.0, %v1098
      %v1100 = vpop.f32.mrb[0].mxu0
      %v1101 = vpop.f32.mrb[0].mxu0
      %v1102 = vadd.f32 0.0, %v1101
      %v1103 = vpop.f32.mrb[0].mxu0
      %1104 = vdwg.mxu0
      %v1106 = vsel %vm1057, %v834, 0
      %v1109 = vsel %vm1057, %v1026, 0
      %1111 = vmatprep.subr.bf16.mxu0 0
      %1112 = vmatpush1.bf16.xpose.msra.mxu0 %v1109
      %1113 = vmatprep.subr.bf16.mxu0 0
      %1114 = vmatpush1.bf16.xpose.msra.mxu0 0
      %1115 = vmatprep.subr.bf16.mxu0 0
      %1116 = vmatpush1.bf16.xpose.msra.mxu0 0
      %1117 = vmatprep.subr.bf16.mxu0 0
      %1118 = vmatpush1.bf16.xpose.msra.mxu0 0
      %1119 = vmatprep.subr.bf16.mxu0 0
      %1120 = vmatpush1.bf16.xpose.msra.mxu0 0
      %1121 = vmatprep.subr.bf16.mxu0 0
      %1122 = vmatpush1.bf16.xpose.msra.mxu0 0
      %1123 = vmatprep.subr.bf16.mxu0 0
      %1124 = vmatpush1.bf16.xpose.msra.mxu0 0
      %1125 = vmatprep.subr.bf16.mxu0 0
      %1126 = vmatpush1.bf16.xpose.msra.mxu0 0
      %1127 = vmatprep.subr.bf16.mxu0 0
      %1128 = vmatpush1.bf16.xpose.msra.mxu0 0
      %1129 = vmatprep.subr.bf16.mxu0 0
      %1130 = vmatpush1.bf16.xpose.msra.mxu0 0
      %1131 = vmatprep.subr.bf16.mxu0 0
      %1132 = vmatpush1.bf16.xpose.msra.mxu0 0
      %1133 = vmatprep.subr.bf16.mxu0 0
      %1134 = vmatpush1.bf16.xpose.msra.mxu0 0
      %1135 = vmatprep.subr.bf16.mxu0 0
      %1136 = vmatpush1.bf16.xpose.msra.mxu0 0
      %1137 = vmatprep.subr.bf16.mxu0 0
      %1138 = vmatpush1.bf16.xpose.msra.mxu0 0
      %1139 = vmatprep.subr.bf16.mxu0 0
      %1140 = vmatpush1.bf16.xpose.msra.mxu0 0
      %1141 = vmatprep.subr.bf16.mxu0 0
      %1142 = vmatpush1.bf16.xpose.msra.mxu0 0
      %1143 = vmatprep.mubr.bf16.mxu0 0
      %1144 = vmatmul.mubr.bf16.gmra.mrb[0].mxu0 %v1106
      %v1145 = vpop.f32.mrb[0].mxu0
      %v1146 = vadd.f32 0.0, %v1145
      %v1147 = vpop.f32.mrb[0].mxu0
      %v1148 = vpop.f32.mrb[0].mxu0
      %v1149 = vadd.f32 0.0, %v1148
      %v1150 = vpop.f32.mrb[0].mxu0
      %1151 = vdwg.mxu0
      %v1153 = vsel %vm1057, %v835, 0
      %v1156 = vsel %vm1057, %v1027, 0
      %1158 = vmatprep.subr.bf16.mxu0 0
      %1159 = vmatpush1.bf16.xpose.msra.mxu0 %v1156
      %1160 = vmatprep.subr.bf16.mxu0 0
      %1161 = vmatpush1.bf16.xpose.msra.mxu0 0
      %1162 = vmatprep.subr.bf16.mxu0 0
      %1163 = vmatpush1.bf16.xpose.msra.mxu0 0
      %1164 = vmatprep.subr.bf16.mxu0 0
      %1165 = vmatpush1.bf16.xpose.msra.mxu0 0
      %1166 = vmatprep.subr.bf16.mxu0 0
      %1167 = vmatpush1.bf16.xpose.msra.mxu0 0
      %1168 = vmatprep.subr.bf16.mxu0 0
      %1169 = vmatpush1.bf16.xpose.msra.mxu0 0
      %1170 = vmatprep.subr.bf16.mxu0 0
      %1171 = vmatpush1.bf16.xpose.msra.mxu0 0
      %1172 = vmatprep.subr.bf16.mxu0 0
      %1173 = vmatpush1.bf16.xpose.msra.mxu0 0
      %1174 = vmatprep.subr.bf16.mxu0 0
      %1175 = vmatpush1.bf16.xpose.msra.mxu0 0
      %1176 = vmatprep.subr.bf16.mxu0 0
      %1177 = vmatpush1.bf16.xpose.msra.mxu0 0
      %1178 = vmatprep.subr.bf16.mxu0 0
      %1179 = vmatpush1.bf16.xpose.msra.mxu0 0
      %1180 = vmatprep.subr.bf16.mxu0 0
      %1181 = vmatpush1.bf16.xpose.msra.mxu0 0
      %1182 = vmatprep.subr.bf16.mxu0 0
      %1183 = vmatpush1.bf16.xpose.msra.mxu0 0
      %1184 = vmatprep.subr.bf16.mxu0 0
      %1185 = vmatpush1.bf16.xpose.msra.mxu0 0
      %1186 = vmatprep.subr.bf16.mxu0 0
      %1187 = vmatpush1.bf16.xpose.msra.mxu0 0
      %1188 = vmatprep.subr.bf16.mxu0 0
      %1189 = vmatpush1.bf16.xpose.msra.mxu0 0
      %1190 = vmatprep.mubr.bf16.mxu0 0
      %1191 = vmatmul.mubr.bf16.gmra.mrb[0].mxu0 %v1153
      %v1192 = vpop.f32.mrb[0].mxu0
      %v1193 = vadd.f32 0.0, %v1192
      %v1194 = vpop.f32.mrb[0].mxu0
      %v1195 = vpop.f32.mrb[0].mxu0
      %v1196 = vadd.f32 0.0, %v1195
      %v1197 = vpop.f32.mrb[0].mxu0
      %1198 = vdwg.mxu0
      %v1200 = vsel %vm1057, %v836, 0
      %v1203 = vsel %vm1057, %v1028, 0
      %1205 = vmatprep.subr.bf16.mxu0 0
      %1206 = vmatpush1.bf16.xpose.msra.mxu0 %v1203
      %1207 = vmatprep.subr.bf16.mxu0 0
      %1208 = vmatpush1.bf16.xpose.msra.mxu0 0
      %1209 = vmatprep.subr.bf16.mxu0 0
      %1210 = vmatpush1.bf16.xpose.msra.mxu0 0
      %1211 = vmatprep.subr.bf16.mxu0 0
      %1212 = vmatpush1.bf16.xpose.msra.mxu0 0
      %1213 = vmatprep.subr.bf16.mxu0 0
      %1214 = vmatpush1.bf16.xpose.msra.mxu0 0
      %1215 = vmatprep.subr.bf16.mxu0 0
      %1216 = vmatpush1.bf16.xpose.msra.mxu0 0
      %1217 = vmatprep.subr.bf16.mxu0 0
      %1218 = vmatpush1.bf16.xpose.msra.mxu0 0
      %1219 = vmatprep.subr.bf16.mxu0 0
      %1220 = vmatpush1.bf16.xpose.msra.mxu0 0
      %1221 = vmatprep.subr.bf16.mxu0 0
      %1222 = vmatpush1.bf16.xpose.msra.mxu0 0
      %1223 = vmatprep.subr.bf16.mxu0 0
      %1224 = vmatpush1.bf16.xpose.msra.mxu0 0
      %1225 = vmatprep.subr.bf16.mxu0 0
      %1226 = vmatpush1.bf16.xpose.msra.mxu0 0
      %1227 = vmatprep.subr.bf16.mxu0 0
      %1228 = vmatpush1.bf16.xpose.msra.mxu0 0
      %1229 = vmatprep.subr.bf16.mxu0 0
      %1230 = vmatpush1.bf16.xpose.msra.mxu0 0
      %1231 = vmatprep.subr.bf16.mxu0 0
      %1232 = vmatpush1.bf16.xpose.msra.mxu0 0
      %1233 = vmatprep.subr.bf16.mxu0 0
      %1234 = vmatpush1.bf16.xpose.msra.mxu0 0
      %1235 = vmatprep.subr.bf16.mxu0 0
      %1236 = vmatpush1.bf16.xpose.msra.mxu0 0
      %1237 = vmatprep.mubr.bf16.mxu0 0
      %1238 = vmatmul.mubr.bf16.gmra.mrb[0].mxu0 %v1200
      %v1239 = vpop.f32.mrb[0].mxu0
      %v1240 = vadd.f32 0.0, %v1239
      %v1241 = vpop.f32.mrb[0].mxu0
      %v1242 = vpop.f32.mrb[0].mxu0
      %v1243 = vadd.f32 0.0, %v1242
      %v1244 = vpop.f32.mrb[0].mxu0
      %1245 = vdwg.mxu0
      %v1247 = vsel %vm1057, %v837, 0
      %v1250 = vsel %vm1057, %v1029, 0
      %1252 = vmatprep.subr.bf16.mxu0 0
      %1253 = vmatpush1.bf16.xpose.msra.mxu0 %v1250
      %1254 = vmatprep.subr.bf16.mxu0 0
      %1255 = vmatpush1.bf16.xpose.msra.mxu0 0
      %1256 = vmatprep.subr.bf16.mxu0 0
      %1257 = vmatpush1.bf16.xpose.msra.mxu0 0
      %1258 = vmatprep.subr.bf16.mxu0 0
      %1259 = vmatpush1.bf16.xpose.msra.mxu0 0
      %1260 = vmatprep.subr.bf16.mxu0 0
      %1261 = vmatpush1.bf16.xpose.msra.mxu0 0
      %1262 = vmatprep.subr.bf16.mxu0 0
      %1263 = vmatpush1.bf16.xpose.msra.mxu0 0
      %1264 = vmatprep.subr.bf16.mxu0 0
      %1265 = vmatpush1.bf16.xpose.msra.mxu0 0
      %1266 = vmatprep.subr.bf16.mxu0 0
      %1267 = vmatpush1.bf16.xpose.msra.mxu0 0
      %1268 = vmatprep.subr.bf16.mxu0 0
      %1269 = vmatpush1.bf16.xpose.msra.mxu0 0
      %1270 = vmatprep.subr.bf16.mxu0 0
      %1271 = vmatpush1.bf16.xpose.msra.mxu0 0
      %1272 = vmatprep.subr.bf16.mxu0 0
      %1273 = vmatpush1.bf16.xpose.msra.mxu0 0
      %1274 = vmatprep.subr.bf16.mxu0 0
      %1275 = vmatpush1.bf16.xpose.msra.mxu0 0
      %1276 = vmatprep.subr.bf16.mxu0 0
      %1277 = vmatpush1.bf16.xpose.msra.mxu0 0
      %1278 = vmatprep.subr.bf16.mxu0 0
      %1279 = vmatpush1.bf16.xpose.msra.mxu0 0
      %1280 = vmatprep.subr.bf16.mxu0 0
      %1281 = vmatpush1.bf16.xpose.msra.mxu0 0
      %1282 = vmatprep.subr.bf16.mxu0 0
      %1283 = vmatpush1.bf16.xpose.msra.mxu0 0
      %1284 = vmatprep.mubr.bf16.mxu0 0
      %1285 = vmatmul.mubr.bf16.gmra.mrb[0].mxu0 %v1247
      %v1286 = vpop.f32.mrb[0].mxu0
      %v1287 = vadd.f32 0.0, %v1286
      %v1288 = vpop.f32.mrb[0].mxu0
      %v1289 = vpop.f32.mrb[0].mxu0
      %v1290 = vadd.f32 0.0, %v1289
      %v1291 = vpop.f32.mrb[0].mxu0
      %1292 = vdwg.mxu0
      %v1294 = vsel %vm1057, %v838, 0
      %v1297 = vsel %vm1057, %v1030, 0
      %1299 = vmatprep.subr.bf16.mxu0 0
      %1300 = vmatpush1.bf16.xpose.msra.mxu0 %v1297
      %1301 = vmatprep.subr.bf16.mxu0 0
      %1302 = vmatpush1.bf16.xpose.msra.mxu0 0
      %1303 = vmatprep.subr.bf16.mxu0 0
      %1304 = vmatpush1.bf16.xpose.msra.mxu0 0
      %1305 = vmatprep.subr.bf16.mxu0 0
      %1306 = vmatpush1.bf16.xpose.msra.mxu0 0
      %1307 = vmatprep.subr.bf16.mxu0 0
      %1308 = vmatpush1.bf16.xpose.msra.mxu0 0
      %1309 = vmatprep.subr.bf16.mxu0 0
      %1310 = vmatpush1.bf16.xpose.msra.mxu0 0
      %1311 = vmatprep.subr.bf16.mxu0 0
      %1312 = vmatpush1.bf16.xpose.msra.mxu0 0
      %1313 = vmatprep.subr.bf16.mxu0 0
      %1314 = vmatpush1.bf16.xpose.msra.mxu0 0
      %1315 = vmatprep.subr.bf16.mxu0 0
      %1316 = vmatpush1.bf16.xpose.msra.mxu0 0
      %1317 = vmatprep.subr.bf16.mxu0 0
      %1318 = vmatpush1.bf16.xpose.msra.mxu0 0
      %1319 = vmatprep.subr.bf16.mxu0 0
      %1320 = vmatpush1.bf16.xpose.msra.mxu0 0
      %1321 = vmatprep.subr.bf16.mxu0 0
      %1322 = vmatpush1.bf16.xpose.msra.mxu0 0
      %1323 = vmatprep.subr.bf16.mxu0 0
      %1324 = vmatpush1.bf16.xpose.msra.mxu0 0
      %1325 = vmatprep.subr.bf16.mxu0 0
      %1326 = vmatpush1.bf16.xpose.msra.mxu0 0
      %1327 = vmatprep.subr.bf16.mxu0 0
      %1328 = vmatpush1.bf16.xpose.msra.mxu0 0
      %1329 = vmatprep.subr.bf16.mxu0 0
      %1330 = vmatpush1.bf16.xpose.msra.mxu0 0
      %1331 = vmatprep.mubr.bf16.mxu0 0
      %1332 = vmatmul.mubr.bf16.gmra.mrb[0].mxu0 %v1294
      %v1333 = vpop.f32.mrb[0].mxu0
      %v1334 = vadd.f32 0.0, %v1333
      %v1335 = vpop.f32.mrb[0].mxu0
      %v1336 = vpop.f32.mrb[0].mxu0
      %v1337 = vadd.f32 0.0, %v1336
      %v1338 = vpop.f32.mrb[0].mxu0
      %1339 = vdwg.mxu0
      %v1341 = vsel %vm1057, %v839, 0
      %v1344 = vsel %vm1057, %v1031, 0
      %1346 = vmatprep.subr.bf16.mxu0 0
      %1347 = vmatpush1.bf16.xpose.msra.mxu0 %v1344
      %1348 = vmatprep.subr.bf16.mxu0 0
      %1349 = vmatpush1.bf16.xpose.msra.mxu0 0
      %1350 = vmatprep.subr.bf16.mxu0 0
      %1351 = vmatpush1.bf16.xpose.msra.mxu0 0
      %1352 = vmatprep.subr.bf16.mxu0 0
      %1353 = vmatpush1.bf16.xpose.msra.mxu0 0
      %1354 = vmatprep.subr.bf16.mxu0 0
      %1355 = vmatpush1.bf16.xpose.msra.mxu0 0
      %1356 = vmatprep.subr.bf16.mxu0 0
      %1357 = vmatpush1.bf16.xpose.msra.mxu0 0
      %1358 = vmatprep.subr.bf16.mxu0 0
      %1359 = vmatpush1.bf16.xpose.msra.mxu0 0
      %1360 = vmatprep.subr.bf16.mxu0 0
      %1361 = vmatpush1.bf16.xpose.msra.mxu0 0
      %1362 = vmatprep.subr.bf16.mxu0 0
      %1363 = vmatpush1.bf16.xpose.msra.mxu0 0
      %1364 = vmatprep.subr.bf16.mxu0 0
      %1365 = vmatpush1.bf16.xpose.msra.mxu0 0
      %1366 = vmatprep.subr.bf16.mxu0 0
      %1367 = vmatpush1.bf16.xpose.msra.mxu0 0
      %1368 = vmatprep.subr.bf16.mxu0 0
      %1369 = vmatpush1.bf16.xpose.msra.mxu0 0
      %1370 = vmatprep.subr.bf16.mxu0 0
      %1371 = vmatpush1.bf16.xpose.msra.mxu0 0
      %1372 = vmatprep.subr.bf16.mxu0 0
      %1373 = vmatpush1.bf16.xpose.msra.mxu0 0
      %1374 = vmatprep.subr.bf16.mxu0 0
      %1375 = vmatpush1.bf16.xpose.msra.mxu0 0
      %1376 = vmatprep.subr.bf16.mxu0 0
      %1377 = vmatpush1.bf16.xpose.msra.mxu0 0
      %1378 = vmatprep.mubr.bf16.mxu0 0
      %1379 = vmatmul.mubr.bf16.gmra.mrb[0].mxu0 %v1341
      %v1380 = vpop.f32.mrb[0].mxu0
      %v1381 = vadd.f32 0.0, %v1380
      %v1382 = vpop.f32.mrb[0].mxu0
      %v1383 = vpop.f32.mrb[0].mxu0
      %v1384 = vadd.f32 0.0, %v1383
      %v1385 = vpop.f32.mrb[0].mxu0
      %1386 = vdwg.mxu0
      %v1388 = vsel %vm1057, %v840, 0
      %v1391 = vsel %vm1057, %v1032, 0
      %1393 = vmatprep.subr.bf16.mxu0 0
      %1394 = vmatpush1.bf16.xpose.msra.mxu0 %v1391
      %1395 = vmatprep.subr.bf16.mxu0 0
      %1396 = vmatpush1.bf16.xpose.msra.mxu0 0
      %1397 = vmatprep.subr.bf16.mxu0 0
      %1398 = vmatpush1.bf16.xpose.msra.mxu0 0
      %1399 = vmatprep.subr.bf16.mxu0 0
      %1400 = vmatpush1.bf16.xpose.msra.mxu0 0
      %1401 = vmatprep.subr.bf16.mxu0 0
      %1402 = vmatpush1.bf16.xpose.msra.mxu0 0
      %1403 = vmatprep.subr.bf16.mxu0 0
      %1404 = vmatpush1.bf16.xpose.msra.mxu0 0
      %1405 = vmatprep.subr.bf16.mxu0 0
      %1406 = vmatpush1.bf16.xpose.msra.mxu0 0
      %1407 = vmatprep.subr.bf16.mxu0 0
      %1408 = vmatpush1.bf16.xpose.msra.mxu0 0
      %1409 = vmatprep.subr.bf16.mxu0 0
      %1410 = vmatpush1.bf16.xpose.msra.mxu0 0
      %1411 = vmatprep.subr.bf16.mxu0 0
      %1412 = vmatpush1.bf16.xpose.msra.mxu0 0
      %1413 = vmatprep.subr.bf16.mxu0 0
      %1414 = vmatpush1.bf16.xpose.msra.mxu0 0
      %1415 = vmatprep.subr.bf16.mxu0 0
      %1416 = vmatpush1.bf16.xpose.msra.mxu0 0
      %1417 = vmatprep.subr.bf16.mxu0 0
      %1418 = vmatpush1.bf16.xpose.msra.mxu0 0
      %1419 = vmatprep.subr.bf16.mxu0 0
      %1420 = vmatpush1.bf16.xpose.msra.mxu0 0
      %1421 = vmatprep.subr.bf16.mxu0 0
      %1422 = vmatpush1.bf16.xpose.msra.mxu0 0
      %1423 = vmatprep.subr.bf16.mxu0 0
      %1424 = vmatpush1.bf16.xpose.msra.mxu0 0
      %1425 = vmatprep.mubr.bf16.mxu0 0
      %1426 = vmatmul.mubr.bf16.gmra.mrb[0].mxu0 %v1388
      %v1427 = vpop.f32.mrb[0].mxu0
      %v1428 = vadd.f32 0.0, %v1427
      %v1429 = vpop.f32.mrb[0].mxu0
      %v1430 = vpop.f32.mrb[0].mxu0
      %v1431 = vadd.f32 0.0, %v1430
      %v1432 = vpop.f32.mrb[0].mxu0
      %1433 = vdwg.mxu0
      %v1435 = vsel %vm1057, %v841, 0
      %v1438 = vsel %vm1057, %v1033, 0
      %1440 = vmatprep.subr.bf16.mxu0 0
      %1441 = vmatpush1.bf16.xpose.msra.mxu0 %v1438
      %1442 = vmatprep.subr.bf16.mxu0 0
      %1443 = vmatpush1.bf16.xpose.msra.mxu0 0
      %1444 = vmatprep.subr.bf16.mxu0 0
      %1445 = vmatpush1.bf16.xpose.msra.mxu0 0
      %1446 = vmatprep.subr.bf16.mxu0 0
      %1447 = vmatpush1.bf16.xpose.msra.mxu0 0
      %1448 = vmatprep.subr.bf16.mxu0 0
      %1449 = vmatpush1.bf16.xpose.msra.mxu0 0
      %1450 = vmatprep.subr.bf16.mxu0 0
      %1451 = vmatpush1.bf16.xpose.msra.mxu0 0
      %1452 = vmatprep.subr.bf16.mxu0 0
      %1453 = vmatpush1.bf16.xpose.msra.mxu0 0
      %1454 = vmatprep.subr.bf16.mxu0 0
      %1455 = vmatpush1.bf16.xpose.msra.mxu0 0
      %1456 = vmatprep.subr.bf16.mxu0 0
      %1457 = vmatpush1.bf16.xpose.msra.mxu0 0
      %1458 = vmatprep.subr.bf16.mxu0 0
      %1459 = vmatpush1.bf16.xpose.msra.mxu0 0
      %1460 = vmatprep.subr.bf16.mxu0 0
      %1461 = vmatpush1.bf16.xpose.msra.mxu0 0
      %1462 = vmatprep.subr.bf16.mxu0 0
      %1463 = vmatpush1.bf16.xpose.msra.mxu0 0
      %1464 = vmatprep.subr.bf16.mxu0 0
      %1465 = vmatpush1.bf16.xpose.msra.mxu0 0
      %1466 = vmatprep.subr.bf16.mxu0 0
      %1467 = vmatpush1.bf16.xpose.msra.mxu0 0
      %1468 = vmatprep.subr.bf16.mxu0 0
      %1469 = vmatpush1.bf16.xpose.msra.mxu0 0
      %1470 = vmatprep.subr.bf16.mxu0 0
      %1471 = vmatpush1.bf16.xpose.msra.mxu0 0
      %1472 = vmatprep.mubr.bf16.mxu0 0
      %1473 = vmatmul.mubr.bf16.gmra.mrb[0].mxu0 %v1435
      %v1474 = vpop.f32.mrb[0].mxu0
      %v1475 = vadd.f32 0.0, %v1474
      %v1476 = vpop.f32.mrb[0].mxu0
      %v1477 = vpop.f32.mrb[0].mxu0
      %v1478 = vadd.f32 0.0, %v1477
      %v1479 = vpop.f32.mrb[0].mxu0
      %1480 = vdwg.mxu0
      %v1482 = vsel %vm1057, %v842, 0
      %v1485 = vsel %vm1057, %v1034, 0
      %1487 = vmatprep.subr.bf16.mxu0 0
      %1488 = vmatpush1.bf16.xpose.msra.mxu0 %v1485
      %1489 = vmatprep.subr.bf16.mxu0 0
      %1490 = vmatpush1.bf16.xpose.msra.mxu0 0
      %1491 = vmatprep.subr.bf16.mxu0 0
      %1492 = vmatpush1.bf16.xpose.msra.mxu0 0
      %1493 = vmatprep.subr.bf16.mxu0 0
      %1494 = vmatpush1.bf16.xpose.msra.mxu0 0
      %1495 = vmatprep.subr.bf16.mxu0 0
      %1496 = vmatpush1.bf16.xpose.msra.mxu0 0
      %1497 = vmatprep.subr.bf16.mxu0 0
      %1498 = vmatpush1.bf16.xpose.msra.mxu0 0
      %1499 = vmatprep.subr.bf16.mxu0 0
      %1500 = vmatpush1.bf16.xpose.msra.mxu0 0
      %1501 = vmatprep.subr.bf16.mxu0 0
      %1502 = vmatpush1.bf16.xpose.msra.mxu0 0
      %1503 = vmatprep.subr.bf16.mxu0 0
      %1504 = vmatpush1.bf16.xpose.msra.mxu0 0
      %1505 = vmatprep.subr.bf16.mxu0 0
      %1506 = vmatpush1.bf16.xpose.msra.mxu0 0
      %1507 = vmatprep.subr.bf16.mxu0 0
      %1508 = vmatpush1.bf16.xpose.msra.mxu0 0
      %1509 = vmatprep.subr.bf16.mxu0 0
      %1510 = vmatpush1.bf16.xpose.msra.mxu0 0
      %1511 = vmatprep.subr.bf16.mxu0 0
      %1512 = vmatpush1.bf16.xpose.msra.mxu0 0
      %1513 = vmatprep.subr.bf16.mxu0 0
      %1514 = vmatpush1.bf16.xpose.msra.mxu0 0
      %1515 = vmatprep.subr.bf16.mxu0 0
      %1516 = vmatpush1.bf16.xpose.msra.mxu0 0
      %1517 = vmatprep.subr.bf16.mxu0 0
      %1518 = vmatpush1.bf16.xpose.msra.mxu0 0
      %1519 = vmatprep.mubr.bf16.mxu0 0
      %1520 = vmatmul.mubr.bf16.gmra.mrb[0].mxu0 %v1482
      %v1521 = vpop.f32.mrb[0].mxu0
      %v1522 = vadd.f32 0.0, %v1521
      %v1523 = vpop.f32.mrb[0].mxu0
      %v1524 = vpop.f32.mrb[0].mxu0
      %v1525 = vadd.f32 0.0, %v1524
      %v1526 = vpop.f32.mrb[0].mxu0
      %1527 = vdwg.mxu0
      %v1529 = vsel %vm1057, %v843, 0
      %v1532 = vsel %vm1057, %v1035, 0
      %1534 = vmatprep.subr.bf16.mxu0 0
      %1535 = vmatpush1.bf16.xpose.msra.mxu0 %v1532
      %1536 = vmatprep.subr.bf16.mxu0 0
      %1537 = vmatpush1.bf16.xpose.msra.mxu0 0
      %1538 = vmatprep.subr.bf16.mxu0 0
      %1539 = vmatpush1.bf16.xpose.msra.mxu0 0
      %1540 = vmatprep.subr.bf16.mxu0 0
      %1541 = vmatpush1.bf16.xpose.msra.mxu0 0
      %1542 = vmatprep.subr.bf16.mxu0 0
      %1543 = vmatpush1.bf16.xpose.msra.mxu0 0
      %1544 = vmatprep.subr.bf16.mxu0 0
      %1545 = vmatpush1.bf16.xpose.msra.mxu0 0
      %1546 = vmatprep.subr.bf16.mxu0 0
      %1547 = vmatpush1.bf16.xpose.msra.mxu0 0
      %1548 = vmatprep.subr.bf16.mxu0 0
      %1549 = vmatpush1.bf16.xpose.msra.mxu0 0
      %1550 = vmatprep.subr.bf16.mxu0 0
      %1551 = vmatpush1.bf16.xpose.msra.mxu0 0
      %1552 = vmatprep.subr.bf16.mxu0 0
      %1553 = vmatpush1.bf16.xpose.msra.mxu0 0
      %1554 = vmatprep.subr.bf16.mxu0 0
      %1555 = vmatpush1.bf16.xpose.msra.mxu0 0
      %1556 = vmatprep.subr.bf16.mxu0 0
      %1557 = vmatpush1.bf16.xpose.msra.mxu0 0
      %1558 = vmatprep.subr.bf16.mxu0 0
      %1559 = vmatpush1.bf16.xpose.msra.mxu0 0
      %1560 = vmatprep.subr.bf16.mxu0 0
      %1561 = vmatpush1.bf16.xpose.msra.mxu0 0
      %1562 = vmatprep.subr.bf16.mxu0 0
      %1563 = vmatpush1.bf16.xpose.msra.mxu0 0
      %1564 = vmatprep.subr.bf16.mxu0 0
      %1565 = vmatpush1.bf16.xpose.msra.mxu0 0
      %1566 = vmatprep.mubr.bf16.mxu0 0
      %1567 = vmatmul.mubr.bf16.gmra.mrb[0].mxu0 %v1529
      %v1568 = vpop.f32.mrb[0].mxu0
      %v1569 = vadd.f32 0.0, %v1568
      %v1570 = vpop.f32.mrb[0].mxu0
      %v1571 = vpop.f32.mrb[0].mxu0
      %v1572 = vadd.f32 0.0, %v1571
      %v1573 = vpop.f32.mrb[0].mxu0
      %1574 = vdwg.mxu0
      %v1576 = vsel %vm1057, %v844, 0
      %v1579 = vsel %vm1057, %v1036, 0
      %1581 = vmatprep.subr.bf16.mxu0 0
      %1582 = vmatpush1.bf16.xpose.msra.mxu0 %v1579
      %1583 = vmatprep.subr.bf16.mxu0 0
      %1584 = vmatpush1.bf16.xpose.msra.mxu0 0
      %1585 = vmatprep.subr.bf16.mxu0 0
      %1586 = vmatpush1.bf16.xpose.msra.mxu0 0
      %1587 = vmatprep.subr.bf16.mxu0 0
      %1588 = vmatpush1.bf16.xpose.msra.mxu0 0
      %1589 = vmatprep.subr.bf16.mxu0 0
      %1590 = vmatpush1.bf16.xpose.msra.mxu0 0
      %1591 = vmatprep.subr.bf16.mxu0 0
      %1592 = vmatpush1.bf16.xpose.msra.mxu0 0
      %1593 = vmatprep.subr.bf16.mxu0 0
      %1594 = vmatpush1.bf16.xpose.msra.mxu0 0
      %1595 = vmatprep.subr.bf16.mxu0 0
      %1596 = vmatpush1.bf16.xpose.msra.mxu0 0
      %1597 = vmatprep.subr.bf16.mxu0 0
      %1598 = vmatpush1.bf16.xpose.msra.mxu0 0
      %1599 = vmatprep.subr.bf16.mxu0 0
      %1600 = vmatpush1.bf16.xpose.msra.mxu0 0
      %1601 = vmatprep.subr.bf16.mxu0 0
      %1602 = vmatpush1.bf16.xpose.msra.mxu0 0
      %1603 = vmatprep.subr.bf16.mxu0 0
      %1604 = vmatpush1.bf16.xpose.msra.mxu0 0
      %1605 = vmatprep.subr.bf16.mxu0 0
      %1606 = vmatpush1.bf16.xpose.msra.mxu0 0
      %1607 = vmatprep.subr.bf16.mxu0 0
      %1608 = vmatpush1.bf16.xpose.msra.mxu0 0
      %1609 = vmatprep.subr.bf16.mxu0 0
      %1610 = vmatpush1.bf16.xpose.msra.mxu0 0
      %1611 = vmatprep.subr.bf16.mxu0 0
      %1612 = vmatpush1.bf16.xpose.msra.mxu0 0
      %1613 = vmatprep.mubr.bf16.mxu0 0
      %1614 = vmatmul.mubr.bf16.gmra.mrb[0].mxu0 %v1576
      %v1615 = vpop.f32.mrb[0].mxu0
      %v1616 = vadd.f32 0.0, %v1615
      %v1617 = vpop.f32.mrb[0].mxu0
      %v1618 = vpop.f32.mrb[0].mxu0
      %v1619 = vadd.f32 0.0, %v1618
      %v1620 = vpop.f32.mrb[0].mxu0
      %1621 = vdwg.mxu0
      %v1623 = vsel %vm1057, %v845, 0
      %v1626 = vsel %vm1057, %v1037, 0
      %1628 = vmatprep.subr.bf16.mxu0 0
      %1629 = vmatpush1.bf16.xpose.msra.mxu0 %v1626
      %1630 = vmatprep.subr.bf16.mxu0 0
      %1631 = vmatpush1.bf16.xpose.msra.mxu0 0
      %1632 = vmatprep.subr.bf16.mxu0 0
      %1633 = vmatpush1.bf16.xpose.msra.mxu0 0
      %1634 = vmatprep.subr.bf16.mxu0 0
      %1635 = vmatpush1.bf16.xpose.msra.mxu0 0
      %1636 = vmatprep.subr.bf16.mxu0 0
      %1637 = vmatpush1.bf16.xpose.msra.mxu0 0
      %1638 = vmatprep.subr.bf16.mxu0 0
      %1639 = vmatpush1.bf16.xpose.msra.mxu0 0
      %1640 = vmatprep.subr.bf16.mxu0 0
      %1641 = vmatpush1.bf16.xpose.msra.mxu0 0
      %1642 = vmatprep.subr.bf16.mxu0 0
      %1643 = vmatpush1.bf16.xpose.msra.mxu0 0
      %1644 = vmatprep.subr.bf16.mxu0 0
      %1645 = vmatpush1.bf16.xpose.msra.mxu0 0
      %1646 = vmatprep.subr.bf16.mxu0 0
      %1647 = vmatpush1.bf16.xpose.msra.mxu0 0
      %1648 = vmatprep.subr.bf16.mxu0 0
      %1649 = vmatpush1.bf16.xpose.msra.mxu0 0
      %1650 = vmatprep.subr.bf16.mxu0 0
      %1651 = vmatpush1.bf16.xpose.msra.mxu0 0
      %1652 = vmatprep.subr.bf16.mxu0 0
      %1653 = vmatpush1.bf16.xpose.msra.mxu0 0
      %1654 = vmatprep.subr.bf16.mxu0 0
      %1655 = vmatpush1.bf16.xpose.msra.mxu0 0
      %1656 = vmatprep.subr.bf16.mxu0 0
      %1657 = vmatpush1.bf16.xpose.msra.mxu0 0
      %1658 = vmatprep.subr.bf16.mxu0 0
      %1659 = vmatpush1.bf16.xpose.msra.mxu0 0
      %1660 = vmatprep.mubr.bf16.mxu0 0
      %1661 = vmatmul.mubr.bf16.gmra.mrb[0].mxu0 %v1623
      %v1662 = vpop.f32.mrb[0].mxu0
      %v1663 = vadd.f32 0.0, %v1662
      %v1664 = vpop.f32.mrb[0].mxu0
      %v1665 = vpop.f32.mrb[0].mxu0
      %v1666 = vadd.f32 0.0, %v1665
      %v1667 = vpop.f32.mrb[0].mxu0
      %1668 = vdwg.mxu0
      %v1670 = vsel %vm1057, %v846, 0
      %v1673 = vsel %vm1057, %v1038, 0
      %1675 = vmatprep.subr.bf16.mxu0 0
      %1676 = vmatpush1.bf16.xpose.msra.mxu0 %v1673
      %1677 = vmatprep.subr.bf16.mxu0 0
      %1678 = vmatpush1.bf16.xpose.msra.mxu0 0
      %1679 = vmatprep.subr.bf16.mxu0 0
      %1680 = vmatpush1.bf16.xpose.msra.mxu0 0
      %1681 = vmatprep.subr.bf16.mxu0 0
      %1682 = vmatpush1.bf16.xpose.msra.mxu0 0
      %1683 = vmatprep.subr.bf16.mxu0 0
      %1684 = vmatpush1.bf16.xpose.msra.mxu0 0
      %1685 = vmatprep.subr.bf16.mxu0 0
      %1686 = vmatpush1.bf16.xpose.msra.mxu0 0
      %1687 = vmatprep.subr.bf16.mxu0 0
      %1688 = vmatpush1.bf16.xpose.msra.mxu0 0
      %1689 = vmatprep.subr.bf16.mxu0 0
      %1690 = vmatpush1.bf16.xpose.msra.mxu0 0
      %1691 = vmatprep.subr.bf16.mxu0 0
      %1692 = vmatpush1.bf16.xpose.msra.mxu0 0
      %1693 = vmatprep.subr.bf16.mxu0 0
      %1694 = vmatpush1.bf16.xpose.msra.mxu0 0
      %1695 = vmatprep.subr.bf16.mxu0 0
      %1696 = vmatpush1.bf16.xpose.msra.mxu0 0
      %1697 = vmatprep.subr.bf16.mxu0 0
      %1698 = vmatpush1.bf16.xpose.msra.mxu0 0
      %1699 = vmatprep.subr.bf16.mxu0 0
      %1700 = vmatpush1.bf16.xpose.msra.mxu0 0
      %1701 = vmatprep.subr.bf16.mxu0 0
      %1702 = vmatpush1.bf16.xpose.msra.mxu0 0
      %1703 = vmatprep.subr.bf16.mxu0 0
      %1704 = vmatpush1.bf16.xpose.msra.mxu0 0
      %1705 = vmatprep.subr.bf16.mxu0 0
      %1706 = vmatpush1.bf16.xpose.msra.mxu0 0
      %1707 = vmatprep.mubr.bf16.mxu0 0
      %1708 = vmatmul.mubr.bf16.gmra.mrb[0].mxu0 %v1670
      %v1709 = vpop.f32.mrb[0].mxu0
      %v1710 = vadd.f32 0.0, %v1709
      %v1711 = vpop.f32.mrb[0].mxu0
      %v1712 = vpop.f32.mrb[0].mxu0
      %v1713 = vadd.f32 0.0, %v1712
      %v1714 = vpop.f32.mrb[0].mxu0
      %1715 = vdwg.mxu0
      %v1717 = vsel %vm1057, %v847, 0
      %v1720 = vsel %vm1057, %v1039, 0
      %1722 = vmatprep.subr.bf16.mxu0 0
      %1723 = vmatpush1.bf16.xpose.msra.mxu0 %v1720
      %1724 = vmatprep.subr.bf16.mxu0 0
      %1725 = vmatpush1.bf16.xpose.msra.mxu0 0
      %1726 = vmatprep.subr.bf16.mxu0 0
      %1727 = vmatpush1.bf16.xpose.msra.mxu0 0
      %1728 = vmatprep.subr.bf16.mxu0 0
      %1729 = vmatpush1.bf16.xpose.msra.mxu0 0
      %1730 = vmatprep.subr.bf16.mxu0 0
      %1731 = vmatpush1.bf16.xpose.msra.mxu0 0
      %1732 = vmatprep.subr.bf16.mxu0 0
      %1733 = vmatpush1.bf16.xpose.msra.mxu0 0
      %1734 = vmatprep.subr.bf16.mxu0 0
      %1735 = vmatpush1.bf16.xpose.msra.mxu0 0
      %1736 = vmatprep.subr.bf16.mxu0 0
      %1737 = vmatpush1.bf16.xpose.msra.mxu0 0
      %1738 = vmatprep.subr.bf16.mxu0 0
      %1739 = vmatpush1.bf16.xpose.msra.mxu0 0
      %1740 = vmatprep.subr.bf16.mxu0 0
      %1741 = vmatpush1.bf16.xpose.msra.mxu0 0
      %1742 = vmatprep.subr.bf16.mxu0 0
      %1743 = vmatpush1.bf16.xpose.msra.mxu0 0
      %1744 = vmatprep.subr.bf16.mxu0 0
      %1745 = vmatpush1.bf16.xpose.msra.mxu0 0
      %1746 = vmatprep.subr.bf16.mxu0 0
      %1747 = vmatpush1.bf16.xpose.msra.mxu0 0
      %1748 = vmatprep.subr.bf16.mxu0 0
      %1749 = vmatpush1.bf16.xpose.msra.mxu0 0
      %1750 = vmatprep.subr.bf16.mxu0 0
      %1751 = vmatpush1.bf16.xpose.msra.mxu0 0
      %1752 = vmatprep.subr.bf16.mxu0 0
      %1753 = vmatpush1.bf16.xpose.msra.mxu0 0
      %1754 = vmatprep.mubr.bf16.mxu0 0
      %1755 = vmatmul.mubr.bf16.gmra.mrb[0].mxu0 %v1717
      %v1756 = vpop.f32.mrb[0].mxu0
      %v1757 = vadd.f32 0.0, %v1756
      %v1758 = vpop.f32.mrb[0].mxu0
      %v1759 = vpop.f32.mrb[0].mxu0
      %v1760 = vadd.f32 0.0, %v1759
      %v1761 = vpop.f32.mrb[0].mxu0
      %1762 = vdwg.mxu0
      %v1764 = vsel %vm1057, %v848, 0
      %v1767 = vsel %vm1057, %v1040, 0
      %1769 = vmatprep.subr.bf16.mxu0 0
      %1770 = vmatpush1.bf16.xpose.msra.mxu0 %v1767
      %1771 = vmatprep.subr.bf16.mxu0 0
      %1772 = vmatpush1.bf16.xpose.msra.mxu0 0
      %1773 = vmatprep.subr.bf16.mxu0 0
      %1774 = vmatpush1.bf16.xpose.msra.mxu0 0
      %1775 = vmatprep.subr.bf16.mxu0 0
      %1776 = vmatpush1.bf16.xpose.msra.mxu0 0
      %1777 = vmatprep.subr.bf16.mxu0 0
      %1778 = vmatpush1.bf16.xpose.msra.mxu0 0
      %1779 = vmatprep.subr.bf16.mxu0 0
      %1780 = vmatpush1.bf16.xpose.msra.mxu0 0
      %1781 = vmatprep.subr.bf16.mxu0 0
      %1782 = vmatpush1.bf16.xpose.msra.mxu0 0
      %1783 = vmatprep.subr.bf16.mxu0 0
      %1784 = vmatpush1.bf16.xpose.msra.mxu0 0
      %1785 = vmatprep.subr.bf16.mxu0 0
      %1786 = vmatpush1.bf16.xpose.msra.mxu0 0
      %1787 = vmatprep.subr.bf16.mxu0 0
      %1788 = vmatpush1.bf16.xpose.msra.mxu0 0
      %1789 = vmatprep.subr.bf16.mxu0 0
      %1790 = vmatpush1.bf16.xpose.msra.mxu0 0
      %1791 = vmatprep.subr.bf16.mxu0 0
      %1792 = vmatpush1.bf16.xpose.msra.mxu0 0
      %1793 = vmatprep.subr.bf16.mxu0 0
      %1794 = vmatpush1.bf16.xpose.msra.mxu0 0
      %1795 = vmatprep.subr.bf16.mxu0 0
      %1796 = vmatpush1.bf16.xpose.msra.mxu0 0
      %1797 = vmatprep.subr.bf16.mxu0 0
      %1798 = vmatpush1.bf16.xpose.msra.mxu0 0
      %1799 = vmatprep.subr.bf16.mxu0 0
      %1800 = vmatpush1.bf16.xpose.msra.mxu0 0
      %1801 = vmatprep.mubr.bf16.mxu0 0
      %1802 = vmatmul.mubr.bf16.gmra.mrb[0].mxu0 %v1764
      %v1803 = vpop.f32.mrb[0].mxu0
      %v1804 = vadd.f32 0.0, %v1803
      %v1805 = vpop.f32.mrb[0].mxu0
      %v1806 = vpop.f32.mrb[0].mxu0
      %v1807 = vadd.f32 0.0, %v1806
      %v1808 = vpop.f32.mrb[0].mxu0
      %1809 = vdwg.mxu0
      %v1811 = vsel %vm1057, %v849, 0
      %v1814 = vsel %vm1057, %v1041, 0
      %1816 = vmatprep.subr.bf16.mxu0 0
      %1817 = vmatpush1.bf16.xpose.msra.mxu0 %v1814
      %1818 = vmatprep.subr.bf16.mxu0 0
      %1819 = vmatpush1.bf16.xpose.msra.mxu0 0
      %1820 = vmatprep.subr.bf16.mxu0 0
      %1821 = vmatpush1.bf16.xpose.msra.mxu0 0
      %1822 = vmatprep.subr.bf16.mxu0 0
      %1823 = vmatpush1.bf16.xpose.msra.mxu0 0
      %1824 = vmatprep.subr.bf16.mxu0 0
      %1825 = vmatpush1.bf16.xpose.msra.mxu0 0
      %1826 = vmatprep.subr.bf16.mxu0 0
      %1827 = vmatpush1.bf16.xpose.msra.mxu0 0
      %1828 = vmatprep.subr.bf16.mxu0 0
      %1829 = vmatpush1.bf16.xpose.msra.mxu0 0
      %1830 = vmatprep.subr.bf16.mxu0 0
      %1831 = vmatpush1.bf16.xpose.msra.mxu0 0
      %1832 = vmatprep.subr.bf16.mxu0 0
      %1833 = vmatpush1.bf16.xpose.msra.mxu0 0
      %1834 = vmatprep.subr.bf16.mxu0 0
      %1835 = vmatpush1.bf16.xpose.msra.mxu0 0
      %1836 = vmatprep.subr.bf16.mxu0 0
      %1837 = vmatpush1.bf16.xpose.msra.mxu0 0
      %1838 = vmatprep.subr.bf16.mxu0 0
      %1839 = vmatpush1.bf16.xpose.msra.mxu0 0
      %1840 = vmatprep.subr.bf16.mxu0 0
      %1841 = vmatpush1.bf16.xpose.msra.mxu0 0
      %1842 = vmatprep.subr.bf16.mxu0 0
      %1843 = vmatpush1.bf16.xpose.msra.mxu0 0
      %1844 = vmatprep.subr.bf16.mxu0 0
      %1845 = vmatpush1.bf16.xpose.msra.mxu0 0
      %1846 = vmatprep.subr.bf16.mxu0 0
      %1847 = vmatpush1.bf16.xpose.msra.mxu0 0
      %1848 = vmatprep.mubr.bf16.mxu0 0
      %1849 = vmatmul.mubr.bf16.gmra.mrb[0].mxu0 %v1811
      %v1850 = vpop.f32.mrb[0].mxu0
      %v1851 = vadd.f32 0.0, %v1850
      %v1852 = vpop.f32.mrb[0].mxu0
      %v1853 = vpop.f32.mrb[0].mxu0
      %v1854 = vadd.f32 0.0, %v1853
      %v1855 = vpop.f32.mrb[0].mxu0
      %1856 = vdwg.mxu0
      %v1858 = vsel %vm1057, %v850, 0
      %v1861 = vsel %vm1057, %v1042, 0
      %1863 = vmatprep.subr.bf16.mxu0 0
      %1864 = vmatpush1.bf16.xpose.msra.mxu0 %v1861
      %1865 = vmatprep.subr.bf16.mxu0 0
      %1866 = vmatpush1.bf16.xpose.msra.mxu0 0
      %1867 = vmatprep.subr.bf16.mxu0 0
      %1868 = vmatpush1.bf16.xpose.msra.mxu0 0
      %1869 = vmatprep.subr.bf16.mxu0 0
      %1870 = vmatpush1.bf16.xpose.msra.mxu0 0
      %1871 = vmatprep.subr.bf16.mxu0 0
      %1872 = vmatpush1.bf16.xpose.msra.mxu0 0
      %1873 = vmatprep.subr.bf16.mxu0 0
      %1874 = vmatpush1.bf16.xpose.msra.mxu0 0
      %1875 = vmatprep.subr.bf16.mxu0 0
      %1876 = vmatpush1.bf16.xpose.msra.mxu0 0
      %1877 = vmatprep.subr.bf16.mxu0 0
      %1878 = vmatpush1.bf16.xpose.msra.mxu0 0
      %1879 = vmatprep.subr.bf16.mxu0 0
      %1880 = vmatpush1.bf16.xpose.msra.mxu0 0
      %1881 = vmatprep.subr.bf16.mxu0 0
      %1882 = vmatpush1.bf16.xpose.msra.mxu0 0
      %1883 = vmatprep.subr.bf16.mxu0 0
      %1884 = vmatpush1.bf16.xpose.msra.mxu0 0
      %1885 = vmatprep.subr.bf16.mxu0 0
      %1886 = vmatpush1.bf16.xpose.msra.mxu0 0
      %1887 = vmatprep.subr.bf16.mxu0 0
      %1888 = vmatpush1.bf16.xpose.msra.mxu0 0
      %1889 = vmatprep.subr.bf16.mxu0 0
      %1890 = vmatpush1.bf16.xpose.msra.mxu0 0
      %1891 = vmatprep.subr.bf16.mxu0 0
      %1892 = vmatpush1.bf16.xpose.msra.mxu0 0
      %1893 = vmatprep.subr.bf16.mxu0 0
      %1894 = vmatpush1.bf16.xpose.msra.mxu0 0
      %1895 = vmatprep.mubr.bf16.mxu0 0
      %1896 = vmatmul.mubr.bf16.gmra.mrb[0].mxu0 %v1858
      %v1897 = vpop.f32.mrb[0].mxu0
      %v1898 = vadd.f32 0.0, %v1897
      %v1899 = vpop.f32.mrb[0].mxu0
      %v1900 = vpop.f32.mrb[0].mxu0
      %v1901 = vadd.f32 0.0, %v1900
      %v1902 = vpop.f32.mrb[0].mxu0
      %1903 = vdwg.mxu0
      %v1905 = vsel %vm1057, %v851, 0
      %v1908 = vsel %vm1057, %v1043, 0
      %1910 = vmatprep.subr.bf16.mxu0 0
      %1911 = vmatpush1.bf16.xpose.msra.mxu0 %v1908
      %1912 = vmatprep.subr.bf16.mxu0 0
      %1913 = vmatpush1.bf16.xpose.msra.mxu0 0
      %1914 = vmatprep.subr.bf16.mxu0 0
      %1915 = vmatpush1.bf16.xpose.msra.mxu0 0
      %1916 = vmatprep.subr.bf16.mxu0 0
      %1917 = vmatpush1.bf16.xpose.msra.mxu0 0
      %1918 = vmatprep.subr.bf16.mxu0 0
      %1919 = vmatpush1.bf16.xpose.msra.mxu0 0
      %1920 = vmatprep.subr.bf16.mxu0 0
      %1921 = vmatpush1.bf16.xpose.msra.mxu0 0
      %1922 = vmatprep.subr.bf16.mxu0 0
      %1923 = vmatpush1.bf16.xpose.msra.mxu0 0
      %1924 = vmatprep.subr.bf16.mxu0 0
      %1925 = vmatpush1.bf16.xpose.msra.mxu0 0
      %1926 = vmatprep.subr.bf16.mxu0 0
      %1927 = vmatpush1.bf16.xpose.msra.mxu0 0
      %1928 = vmatprep.subr.bf16.mxu0 0
      %1929 = vmatpush1.bf16.xpose.msra.mxu0 0
      %1930 = vmatprep.subr.bf16.mxu0 0
      %1931 = vmatpush1.bf16.xpose.msra.mxu0 0
      %1932 = vmatprep.subr.bf16.mxu0 0
      %1933 = vmatpush1.bf16.xpose.msra.mxu0 0
      %1934 = vmatprep.subr.bf16.mxu0 0
      %1935 = vmatpush1.bf16.xpose.msra.mxu0 0
      %1936 = vmatprep.subr.bf16.mxu0 0
      %1937 = vmatpush1.bf16.xpose.msra.mxu0 0
      %1938 = vmatprep.subr.bf16.mxu0 0
      %1939 = vmatpush1.bf16.xpose.msra.mxu0 0
      %1940 = vmatprep.subr.bf16.mxu0 0
      %1941 = vmatpush1.bf16.xpose.msra.mxu0 0
      %1942 = vmatprep.mubr.bf16.mxu0 0
      %1943 = vmatmul.mubr.bf16.gmra.mrb[0].mxu0 %v1905
      %v1944 = vpop.f32.mrb[0].mxu0
      %v1945 = vadd.f32 0.0, %v1944
      %v1946 = vpop.f32.mrb[0].mxu0
      %v1947 = vpop.f32.mrb[0].mxu0
      %v1948 = vadd.f32 0.0, %v1947
      %v1949 = vpop.f32.mrb[0].mxu0
      %1950 = vdwg.mxu0
      %v1952 = vsel %vm1057, %v852, 0
      %v1955 = vsel %vm1057, %v1044, 0
      %1957 = vmatprep.subr.bf16.mxu0 0
      %1958 = vmatpush1.bf16.xpose.msra.mxu0 %v1955
      %1959 = vmatprep.subr.bf16.mxu0 0
      %1960 = vmatpush1.bf16.xpose.msra.mxu0 0
      %1961 = vmatprep.subr.bf16.mxu0 0
      %1962 = vmatpush1.bf16.xpose.msra.mxu0 0
      %1963 = vmatprep.subr.bf16.mxu0 0
      %1964 = vmatpush1.bf16.xpose.msra.mxu0 0
      %1965 = vmatprep.subr.bf16.mxu0 0
      %1966 = vmatpush1.bf16.xpose.msra.mxu0 0
      %1967 = vmatprep.subr.bf16.mxu0 0
      %1968 = vmatpush1.bf16.xpose.msra.mxu0 0
      %1969 = vmatprep.subr.bf16.mxu0 0
      %1970 = vmatpush1.bf16.xpose.msra.mxu0 0
      %1971 = vmatprep.subr.bf16.mxu0 0
      %1972 = vmatpush1.bf16.xpose.msra.mxu0 0
      %1973 = vmatprep.subr.bf16.mxu0 0
      %1974 = vmatpush1.bf16.xpose.msra.mxu0 0
      %1975 = vmatprep.subr.bf16.mxu0 0
      %1976 = vmatpush1.bf16.xpose.msra.mxu0 0
      %1977 = vmatprep.subr.bf16.mxu0 0
      %1978 = vmatpush1.bf16.xpose.msra.mxu0 0
      %1979 = vmatprep.subr.bf16.mxu0 0
      %1980 = vmatpush1.bf16.xpose.msra.mxu0 0
      %1981 = vmatprep.subr.bf16.mxu0 0
      %1982 = vmatpush1.bf16.xpose.msra.mxu0 0
      %1983 = vmatprep.subr.bf16.mxu0 0
      %1984 = vmatpush1.bf16.xpose.msra.mxu0 0
      %1985 = vmatprep.subr.bf16.mxu0 0
      %1986 = vmatpush1.bf16.xpose.msra.mxu0 0
      %1987 = vmatprep.subr.bf16.mxu0 0
      %1988 = vmatpush1.bf16.xpose.msra.mxu0 0
      %1989 = vmatprep.mubr.bf16.mxu0 0
      %1990 = vmatmul.mubr.bf16.gmra.mrb[0].mxu0 %v1952
      %v1991 = vpop.f32.mrb[0].mxu0
      %v1992 = vadd.f32 0.0, %v1991
      %v1993 = vpop.f32.mrb[0].mxu0
      %v1994 = vpop.f32.mrb[0].mxu0
      %v1995 = vadd.f32 0.0, %v1994
      %v1996 = vpop.f32.mrb[0].mxu0
      %1997 = vdwg.mxu0
      %v1999 = vsel %vm1057, %v853, 0
      %v2002 = vsel %vm1057, %v1045, 0
      %2004 = vmatprep.subr.bf16.mxu0 0
      %2005 = vmatpush1.bf16.xpose.msra.mxu0 %v2002
      %2006 = vmatprep.subr.bf16.mxu0 0
      %2007 = vmatpush1.bf16.xpose.msra.mxu0 0
      %2008 = vmatprep.subr.bf16.mxu0 0
      %2009 = vmatpush1.bf16.xpose.msra.mxu0 0
      %2010 = vmatprep.subr.bf16.mxu0 0
      %2011 = vmatpush1.bf16.xpose.msra.mxu0 0
      %2012 = vmatprep.subr.bf16.mxu0 0
      %2013 = vmatpush1.bf16.xpose.msra.mxu0 0
      %2014 = vmatprep.subr.bf16.mxu0 0
      %2015 = vmatpush1.bf16.xpose.msra.mxu0 0
      %2016 = vmatprep.subr.bf16.mxu0 0
      %2017 = vmatpush1.bf16.xpose.msra.mxu0 0
      %2018 = vmatprep.subr.bf16.mxu0 0
      %2019 = vmatpush1.bf16.xpose.msra.mxu0 0
      %2020 = vmatprep.subr.bf16.mxu0 0
      %2021 = vmatpush1.bf16.xpose.msra.mxu0 0
      %2022 = vmatprep.subr.bf16.mxu0 0
      %2023 = vmatpush1.bf16.xpose.msra.mxu0 0
      %2024 = vmatprep.subr.bf16.mxu0 0
      %2025 = vmatpush1.bf16.xpose.msra.mxu0 0
      %2026 = vmatprep.subr.bf16.mxu0 0
      %2027 = vmatpush1.bf16.xpose.msra.mxu0 0
      %2028 = vmatprep.subr.bf16.mxu0 0
      %2029 = vmatpush1.bf16.xpose.msra.mxu0 0
      %2030 = vmatprep.subr.bf16.mxu0 0
      %2031 = vmatpush1.bf16.xpose.msra.mxu0 0
      %2032 = vmatprep.subr.bf16.mxu0 0
      %2033 = vmatpush1.bf16.xpose.msra.mxu0 0
      %2034 = vmatprep.subr.bf16.mxu0 0
      %2035 = vmatpush1.bf16.xpose.msra.mxu0 0
      %2036 = vmatprep.mubr.bf16.mxu0 0
      %2037 = vmatmul.mubr.bf16.gmra.mrb[0].mxu0 %v1999
      %v2038 = vpop.f32.mrb[0].mxu0
      %v2039 = vadd.f32 0.0, %v2038
      %v2040 = vpop.f32.mrb[0].mxu0
      %v2041 = vpop.f32.mrb[0].mxu0
      %v2042 = vadd.f32 0.0, %v2041
      %v2043 = vpop.f32.mrb[0].mxu0
      %2044 = vdwg.mxu0
      %v2046 = vsel %vm1057, %v854, 0
      %v2049 = vsel %vm1057, %v1046, 0
      %2051 = vmatprep.subr.bf16.mxu0 0
      %2052 = vmatpush1.bf16.xpose.msra.mxu0 %v2049
      %2053 = vmatprep.subr.bf16.mxu0 0
      %2054 = vmatpush1.bf16.xpose.msra.mxu0 0
      %2055 = vmatprep.subr.bf16.mxu0 0
      %2056 = vmatpush1.bf16.xpose.msra.mxu0 0
      %2057 = vmatprep.subr.bf16.mxu0 0
      %2058 = vmatpush1.bf16.xpose.msra.mxu0 0
      %2059 = vmatprep.subr.bf16.mxu0 0
      %2060 = vmatpush1.bf16.xpose.msra.mxu0 0
      %2061 = vmatprep.subr.bf16.mxu0 0
      %2062 = vmatpush1.bf16.xpose.msra.mxu0 0
      %2063 = vmatprep.subr.bf16.mxu0 0
      %2064 = vmatpush1.bf16.xpose.msra.mxu0 0
      %2065 = vmatprep.subr.bf16.mxu0 0
      %2066 = vmatpush1.bf16.xpose.msra.mxu0 0
      %2067 = vmatprep.subr.bf16.mxu0 0
      %2068 = vmatpush1.bf16.xpose.msra.mxu0 0
      %2069 = vmatprep.subr.bf16.mxu0 0
      %2070 = vmatpush1.bf16.xpose.msra.mxu0 0
      %2071 = vmatprep.subr.bf16.mxu0 0
      %2072 = vmatpush1.bf16.xpose.msra.mxu0 0
      %2073 = vmatprep.subr.bf16.mxu0 0
      %2074 = vmatpush1.bf16.xpose.msra.mxu0 0
      %2075 = vmatprep.subr.bf16.mxu0 0
      %2076 = vmatpush1.bf16.xpose.msra.mxu0 0
      %2077 = vmatprep.subr.bf16.mxu0 0
      %2078 = vmatpush1.bf16.xpose.msra.mxu0 0
      %2079 = vmatprep.subr.bf16.mxu0 0
      %2080 = vmatpush1.bf16.xpose.msra.mxu0 0
      %2081 = vmatprep.subr.bf16.mxu0 0
      %2082 = vmatpush1.bf16.xpose.msra.mxu0 0
      %2083 = vmatprep.mubr.bf16.mxu0 0
      %2084 = vmatmul.mubr.bf16.gmra.mrb[0].mxu0 %v2046
      %v2085 = vpop.f32.mrb[0].mxu0
      %v2086 = vadd.f32 0.0, %v2085
      %v2087 = vpop.f32.mrb[0].mxu0
      %v2088 = vpop.f32.mrb[0].mxu0
      %v2089 = vadd.f32 0.0, %v2088
      %v2090 = vpop.f32.mrb[0].mxu0
      %2091 = vdwg.mxu0
      %v2093 = vsel %vm1057, %v855, 0
      %v2096 = vsel %vm1057, %v1047, 0
      %2098 = vmatprep.subr.bf16.mxu0 0
      %2099 = vmatpush1.bf16.xpose.msra.mxu0 %v2096
      %2100 = vmatprep.subr.bf16.mxu0 0
      %2101 = vmatpush1.bf16.xpose.msra.mxu0 0
      %2102 = vmatprep.subr.bf16.mxu0 0
      %2103 = vmatpush1.bf16.xpose.msra.mxu0 0
      %2104 = vmatprep.subr.bf16.mxu0 0
      %2105 = vmatpush1.bf16.xpose.msra.mxu0 0
      %2106 = vmatprep.subr.bf16.mxu0 0
      %2107 = vmatpush1.bf16.xpose.msra.mxu0 0
      %2108 = vmatprep.subr.bf16.mxu0 0
      %2109 = vmatpush1.bf16.xpose.msra.mxu0 0
      %2110 = vmatprep.subr.bf16.mxu0 0
      %2111 = vmatpush1.bf16.xpose.msra.mxu0 0
      %2112 = vmatprep.subr.bf16.mxu0 0
      %2113 = vmatpush1.bf16.xpose.msra.mxu0 0
      %2114 = vmatprep.subr.bf16.mxu0 0
      %2115 = vmatpush1.bf16.xpose.msra.mxu0 0
      %2116 = vmatprep.subr.bf16.mxu0 0
      %2117 = vmatpush1.bf16.xpose.msra.mxu0 0
      %2118 = vmatprep.subr.bf16.mxu0 0
      %2119 = vmatpush1.bf16.xpose.msra.mxu0 0
      %2120 = vmatprep.subr.bf16.mxu0 0
      %2121 = vmatpush1.bf16.xpose.msra.mxu0 0
      %2122 = vmatprep.subr.bf16.mxu0 0
      %2123 = vmatpush1.bf16.xpose.msra.mxu0 0
      %2124 = vmatprep.subr.bf16.mxu0 0
      %2125 = vmatpush1.bf16.xpose.msra.mxu0 0
      %2126 = vmatprep.subr.bf16.mxu0 0
      %2127 = vmatpush1.bf16.xpose.msra.mxu0 0
      %2128 = vmatprep.subr.bf16.mxu0 0
      %2129 = vmatpush1.bf16.xpose.msra.mxu0 0
      %2130 = vmatprep.mubr.bf16.mxu0 0
      %2131 = vmatmul.mubr.bf16.gmra.mrb[0].mxu0 %v2093
      %v2132 = vpop.f32.mrb[0].mxu0
      %v2133 = vadd.f32 0.0, %v2132
      %v2134 = vpop.f32.mrb[0].mxu0
      %v2135 = vpop.f32.mrb[0].mxu0
      %v2136 = vadd.f32 0.0, %v2135
      %v2137 = vpop.f32.mrb[0].mxu0
      %2138 = vdwg.mxu0
      %v2140 = vsel %vm1057, %v856, 0
      %v2143 = vsel %vm1057, %v1048, 0
      %2145 = vmatprep.subr.bf16.mxu0 0
      %2146 = vmatpush1.bf16.xpose.msra.mxu0 %v2143
      %2147 = vmatprep.subr.bf16.mxu0 0
      %2148 = vmatpush1.bf16.xpose.msra.mxu0 0
      %2149 = vmatprep.subr.bf16.mxu0 0
      %2150 = vmatpush1.bf16.xpose.msra.mxu0 0
      %2151 = vmatprep.subr.bf16.mxu0 0
      %2152 = vmatpush1.bf16.xpose.msra.mxu0 0
      %2153 = vmatprep.subr.bf16.mxu0 0
      %2154 = vmatpush1.bf16.xpose.msra.mxu0 0
      %2155 = vmatprep.subr.bf16.mxu0 0
      %2156 = vmatpush1.bf16.xpose.msra.mxu0 0
      %2157 = vmatprep.subr.bf16.mxu0 0
      %2158 = vmatpush1.bf16.xpose.msra.mxu0 0
      %2159 = vmatprep.subr.bf16.mxu0 0
      %2160 = vmatpush1.bf16.xpose.msra.mxu0 0
      %2161 = vmatprep.subr.bf16.mxu0 0
      %2162 = vmatpush1.bf16.xpose.msra.mxu0 0
      %2163 = vmatprep.subr.bf16.mxu0 0
      %2164 = vmatpush1.bf16.xpose.msra.mxu0 0
      %2165 = vmatprep.subr.bf16.mxu0 0
      %2166 = vmatpush1.bf16.xpose.msra.mxu0 0
      %2167 = vmatprep.subr.bf16.mxu0 0
      %2168 = vmatpush1.bf16.xpose.msra.mxu0 0
      %2169 = vmatprep.subr.bf16.mxu0 0
      %2170 = vmatpush1.bf16.xpose.msra.mxu0 0
      %2171 = vmatprep.subr.bf16.mxu0 0
      %2172 = vmatpush1.bf16.xpose.msra.mxu0 0
      %2173 = vmatprep.subr.bf16.mxu0 0
      %2174 = vmatpush1.bf16.xpose.msra.mxu0 0
      %2175 = vmatprep.subr.bf16.mxu0 0
      %2176 = vmatpush1.bf16.xpose.msra.mxu0 0
      %2177 = vmatprep.mubr.bf16.mxu0 0
      %2178 = vmatmul.mubr.bf16.gmra.mrb[0].mxu0 %v2140
      %v2179 = vpop.f32.mrb[0].mxu0
      %v2180 = vadd.f32 0.0, %v2179
      %v2181 = vpop.f32.mrb[0].mxu0
      %v2182 = vpop.f32.mrb[0].mxu0
      %v2183 = vadd.f32 0.0, %v2182
      %v2184 = vpop.f32.mrb[0].mxu0
      %2185 = vdwg.mxu0
      %v2187 = vsel %vm1057, %v857, 0
      %v2190 = vsel %vm1057, %v1049, 0
      %2192 = vmatprep.subr.bf16.mxu0 0
      %2193 = vmatpush1.bf16.xpose.msra.mxu0 %v2190
      %2194 = vmatprep.subr.bf16.mxu0 0
      %2195 = vmatpush1.bf16.xpose.msra.mxu0 0
      %2196 = vmatprep.subr.bf16.mxu0 0
      %2197 = vmatpush1.bf16.xpose.msra.mxu0 0
      %2198 = vmatprep.subr.bf16.mxu0 0
      %2199 = vmatpush1.bf16.xpose.msra.mxu0 0
      %2200 = vmatprep.subr.bf16.mxu0 0
      %2201 = vmatpush1.bf16.xpose.msra.mxu0 0
      %2202 = vmatprep.subr.bf16.mxu0 0
      %2203 = vmatpush1.bf16.xpose.msra.mxu0 0
      %2204 = vmatprep.subr.bf16.mxu0 0
      %2205 = vmatpush1.bf16.xpose.msra.mxu0 0
      %2206 = vmatprep.subr.bf16.mxu0 0
      %2207 = vmatpush1.bf16.xpose.msra.mxu0 0
      %2208 = vmatprep.subr.bf16.mxu0 0
      %2209 = vmatpush1.bf16.xpose.msra.mxu0 0
      %2210 = vmatprep.subr.bf16.mxu0 0
      %2211 = vmatpush1.bf16.xpose.msra.mxu0 0
      %2212 = vmatprep.subr.bf16.mxu0 0
      %2213 = vmatpush1.bf16.xpose.msra.mxu0 0
      %2214 = vmatprep.subr.bf16.mxu0 0
      %2215 = vmatpush1.bf16.xpose.msra.mxu0 0
      %2216 = vmatprep.subr.bf16.mxu0 0
      %2217 = vmatpush1.bf16.xpose.msra.mxu0 0
      %2218 = vmatprep.subr.bf16.mxu0 0
      %2219 = vmatpush1.bf16.xpose.msra.mxu0 0
      %2220 = vmatprep.subr.bf16.mxu0 0
      %2221 = vmatpush1.bf16.xpose.msra.mxu0 0
      %2222 = vmatprep.subr.bf16.mxu0 0
      %2223 = vmatpush1.bf16.xpose.msra.mxu0 0
      %2224 = vmatprep.mubr.bf16.mxu0 0
      %2225 = vmatmul.mubr.bf16.gmra.mrb[0].mxu0 %v2187
      %v2226 = vpop.f32.mrb[0].mxu0
      %v2227 = vadd.f32 0.0, %v2226
      %v2228 = vpop.f32.mrb[0].mxu0
      %v2229 = vpop.f32.mrb[0].mxu0
      %v2230 = vadd.f32 0.0, %v2229
      %v2231 = vpop.f32.mrb[0].mxu0
      %2232 = vdwg.mxu0
      %v2234 = vsel %vm1057, %v858, 0
      %v2237 = vsel %vm1057, %v1050, 0
      %2239 = vmatprep.subr.bf16.mxu0 0
      %2240 = vmatpush1.bf16.xpose.msra.mxu0 %v2237
      %2241 = vmatprep.subr.bf16.mxu0 0
      %2242 = vmatpush1.bf16.xpose.msra.mxu0 0
      %2243 = vmatprep.subr.bf16.mxu0 0
      %2244 = vmatpush1.bf16.xpose.msra.mxu0 0
      %2245 = vmatprep.subr.bf16.mxu0 0
      %2246 = vmatpush1.bf16.xpose.msra.mxu0 0
      %2247 = vmatprep.subr.bf16.mxu0 0
      %2248 = vmatpush1.bf16.xpose.msra.mxu0 0
      %2249 = vmatprep.subr.bf16.mxu0 0
      %2250 = vmatpush1.bf16.xpose.msra.mxu0 0
      %2251 = vmatprep.subr.bf16.mxu0 0
      %2252 = vmatpush1.bf16.xpose.msra.mxu0 0
      %2253 = vmatprep.subr.bf16.mxu0 0
      %2254 = vmatpush1.bf16.xpose.msra.mxu0 0
      %2255 = vmatprep.subr.bf16.mxu0 0
      %2256 = vmatpush1.bf16.xpose.msra.mxu0 0
      %2257 = vmatprep.subr.bf16.mxu0 0
      %2258 = vmatpush1.bf16.xpose.msra.mxu0 0
      %2259 = vmatprep.subr.bf16.mxu0 0
      %2260 = vmatpush1.bf16.xpose.msra.mxu0 0
      %2261 = vmatprep.subr.bf16.mxu0 0
      %2262 = vmatpush1.bf16.xpose.msra.mxu0 0
      %2263 = vmatprep.subr.bf16.mxu0 0
      %2264 = vmatpush1.bf16.xpose.msra.mxu0 0
      %2265 = vmatprep.subr.bf16.mxu0 0
      %2266 = vmatpush1.bf16.xpose.msra.mxu0 0
      %2267 = vmatprep.subr.bf16.mxu0 0
      %2268 = vmatpush1.bf16.xpose.msra.mxu0 0
      %2269 = vmatprep.subr.bf16.mxu0 0
      %2270 = vmatpush1.bf16.xpose.msra.mxu0 0
      %2271 = vmatprep.mubr.bf16.mxu0 0
      %2272 = vmatmul.mubr.bf16.gmra.mrb[0].mxu0 %v2234
      %v2273 = vpop.f32.mrb[0].mxu0
      %v2274 = vadd.f32 0.0, %v2273
      %v2275 = vpop.f32.mrb[0].mxu0
      %v2276 = vpop.f32.mrb[0].mxu0
      %v2277 = vadd.f32 0.0, %v2276
      %v2278 = vpop.f32.mrb[0].mxu0
      %2279 = vdwg.mxu0
      %v2281 = vsel %vm1057, %v859, 0
      %v2284 = vsel %vm1057, %v1051, 0
      %2286 = vmatprep.subr.bf16.mxu0 0
      %2287 = vmatpush1.bf16.xpose.msra.mxu0 %v2284
      %2288 = vmatprep.subr.bf16.mxu0 0
      %2289 = vmatpush1.bf16.xpose.msra.mxu0 0
      %2290 = vmatprep.subr.bf16.mxu0 0
      %2291 = vmatpush1.bf16.xpose.msra.mxu0 0
      %2292 = vmatprep.subr.bf16.mxu0 0
      %2293 = vmatpush1.bf16.xpose.msra.mxu0 0
      %2294 = vmatprep.subr.bf16.mxu0 0
      %2295 = vmatpush1.bf16.xpose.msra.mxu0 0
      %2296 = vmatprep.subr.bf16.mxu0 0
      %2297 = vmatpush1.bf16.xpose.msra.mxu0 0
      %2298 = vmatprep.subr.bf16.mxu0 0
      %2299 = vmatpush1.bf16.xpose.msra.mxu0 0
      %2300 = vmatprep.subr.bf16.mxu0 0
      %2301 = vmatpush1.bf16.xpose.msra.mxu0 0
      %2302 = vmatprep.subr.bf16.mxu0 0
      %2303 = vmatpush1.bf16.xpose.msra.mxu0 0
      %2304 = vmatprep.subr.bf16.mxu0 0
      %2305 = vmatpush1.bf16.xpose.msra.mxu0 0
      %2306 = vmatprep.subr.bf16.mxu0 0
      %2307 = vmatpush1.bf16.xpose.msra.mxu0 0
      %2308 = vmatprep.subr.bf16.mxu0 0
      %2309 = vmatpush1.bf16.xpose.msra.mxu0 0
      %2310 = vmatprep.subr.bf16.mxu0 0
      %2311 = vmatpush1.bf16.xpose.msra.mxu0 0
      %2312 = vmatprep.subr.bf16.mxu0 0
      %2313 = vmatpush1.bf16.xpose.msra.mxu0 0
      %2314 = vmatprep.subr.bf16.mxu0 0
      %2315 = vmatpush1.bf16.xpose.msra.mxu0 0
      %2316 = vmatprep.subr.bf16.mxu0 0
      %2317 = vmatpush1.bf16.xpose.msra.mxu0 0
      %2318 = vmatprep.mubr.bf16.mxu0 0
      %2319 = vmatmul.mubr.bf16.gmra.mrb[0].mxu0 %v2281
      %v2320 = vpop.f32.mrb[0].mxu0
      %v2321 = vadd.f32 0.0, %v2320
      %v2322 = vpop.f32.mrb[0].mxu0
      %v2323 = vpop.f32.mrb[0].mxu0
      %v2324 = vadd.f32 0.0, %v2323
      %v2325 = vpop.f32.mrb[0].mxu0
      %2326 = vdwg.mxu0
      %v2328 = vsel %vm1057, %v860, 0
      %v2331 = vsel %vm1057, %v1052, 0
      %2333 = vmatprep.subr.bf16.mxu0 0
      %2334 = vmatpush1.bf16.xpose.msra.mxu0 %v2331
      %2335 = vmatprep.subr.bf16.mxu0 0
      %2336 = vmatpush1.bf16.xpose.msra.mxu0 0
      %2337 = vmatprep.subr.bf16.mxu0 0
      %2338 = vmatpush1.bf16.xpose.msra.mxu0 0
      %2339 = vmatprep.subr.bf16.mxu0 0
      %2340 = vmatpush1.bf16.xpose.msra.mxu0 0
      %2341 = vmatprep.subr.bf16.mxu0 0
      %2342 = vmatpush1.bf16.xpose.msra.mxu0 0
      %2343 = vmatprep.subr.bf16.mxu0 0
      %2344 = vmatpush1.bf16.xpose.msra.mxu0 0
      %2345 = vmatprep.subr.bf16.mxu0 0
      %2346 = vmatpush1.bf16.xpose.msra.mxu0 0
      %2347 = vmatprep.subr.bf16.mxu0 0
      %2348 = vmatpush1.bf16.xpose.msra.mxu0 0
      %2349 = vmatprep.subr.bf16.mxu0 0
      %2350 = vmatpush1.bf16.xpose.msra.mxu0 0
      %2351 = vmatprep.subr.bf16.mxu0 0
      %2352 = vmatpush1.bf16.xpose.msra.mxu0 0
      %2353 = vmatprep.subr.bf16.mxu0 0
      %2354 = vmatpush1.bf16.xpose.msra.mxu0 0
      %2355 = vmatprep.subr.bf16.mxu0 0
      %2356 = vmatpush1.bf16.xpose.msra.mxu0 0
      %2357 = vmatprep.subr.bf16.mxu0 0
      %2358 = vmatpush1.bf16.xpose.msra.mxu0 0
      %2359 = vmatprep.subr.bf16.mxu0 0
      %2360 = vmatpush1.bf16.xpose.msra.mxu0 0
      %2361 = vmatprep.subr.bf16.mxu0 0
      %2362 = vmatpush1.bf16.xpose.msra.mxu0 0
      %2363 = vmatprep.subr.bf16.mxu0 0
      %2364 = vmatpush1.bf16.xpose.msra.mxu0 0
      %2365 = vmatprep.mubr.bf16.mxu0 0
      %2366 = vmatmul.mubr.bf16.gmra.mrb[0].mxu0 %v2328
      %v2367 = vpop.f32.mrb[0].mxu0
      %v2368 = vadd.f32 0.0, %v2367
      %v2369 = vpop.f32.mrb[0].mxu0
      %v2370 = vpop.f32.mrb[0].mxu0
      %v2371 = vadd.f32 0.0, %v2370
      %v2372 = vpop.f32.mrb[0].mxu0
      %2373 = vdwg.mxu0
      %v2375 = vsel %vm1057, %v861, 0
      %v2378 = vsel %vm1057, %v1053, 0
      %2380 = vmatprep.subr.bf16.mxu0 0
      %2381 = vmatpush1.bf16.xpose.msra.mxu0 %v2378
      %2382 = vmatprep.subr.bf16.mxu0 0
      %2383 = vmatpush1.bf16.xpose.msra.mxu0 0
      %2384 = vmatprep.subr.bf16.mxu0 0
      %2385 = vmatpush1.bf16.xpose.msra.mxu0 0
      %2386 = vmatprep.subr.bf16.mxu0 0
      %2387 = vmatpush1.bf16.xpose.msra.mxu0 0
      %2388 = vmatprep.subr.bf16.mxu0 0
      %2389 = vmatpush1.bf16.xpose.msra.mxu0 0
      %2390 = vmatprep.subr.bf16.mxu0 0
      %2391 = vmatpush1.bf16.xpose.msra.mxu0 0
      %2392 = vmatprep.subr.bf16.mxu0 0
      %2393 = vmatpush1.bf16.xpose.msra.mxu0 0
      %2394 = vmatprep.subr.bf16.mxu0 0
      %2395 = vmatpush1.bf16.xpose.msra.mxu0 0
      %2396 = vmatprep.subr.bf16.mxu0 0
      %2397 = vmatpush1.bf16.xpose.msra.mxu0 0
      %2398 = vmatprep.subr.bf16.mxu0 0
      %2399 = vmatpush1.bf16.xpose.msra.mxu0 0
      %2400 = vmatprep.subr.bf16.mxu0 0
      %2401 = vmatpush1.bf16.xpose.msra.mxu0 0
      %2402 = vmatprep.subr.bf16.mxu0 0
      %2403 = vmatpush1.bf16.xpose.msra.mxu0 0
      %2404 = vmatprep.subr.bf16.mxu0 0
      %2405 = vmatpush1.bf16.xpose.msra.mxu0 0
      %2406 = vmatprep.subr.bf16.mxu0 0
      %2407 = vmatpush1.bf16.xpose.msra.mxu0 0
      %2408 = vmatprep.subr.bf16.mxu0 0
      %2409 = vmatpush1.bf16.xpose.msra.mxu0 0
      %2410 = vmatprep.subr.bf16.mxu0 0
      %2411 = vmatpush1.bf16.xpose.msra.mxu0 0
      %2412 = vmatprep.mubr.bf16.mxu0 0
      %2413 = vmatmul.mubr.bf16.gmra.mrb[0].mxu0 %v2375
      %v2414 = vpop.f32.mrb[0].mxu0
      %v2415 = vadd.f32 0.0, %v2414
      %v2416 = vpop.f32.mrb[0].mxu0
      %v2417 = vpop.f32.mrb[0].mxu0
      %v2418 = vadd.f32 0.0, %v2417
      %v2419 = vpop.f32.mrb[0].mxu0
      %2420 = vdwg.mxu0
      %v2422 = vsel %vm1057, %v862, 0
      %v2425 = vsel %vm1057, %v1054, 0
      %2427 = vmatprep.subr.bf16.mxu0 0
      %2428 = vmatpush1.bf16.xpose.msra.mxu0 %v2425
      %2429 = vmatprep.subr.bf16.mxu0 0
      %2430 = vmatpush1.bf16.xpose.msra.mxu0 0
      %2431 = vmatprep.subr.bf16.mxu0 0
      %2432 = vmatpush1.bf16.xpose.msra.mxu0 0
      %2433 = vmatprep.subr.bf16.mxu0 0
      %2434 = vmatpush1.bf16.xpose.msra.mxu0 0
      %2435 = vmatprep.subr.bf16.mxu0 0
      %2436 = vmatpush1.bf16.xpose.msra.mxu0 0
      %2437 = vmatprep.subr.bf16.mxu0 0
      %2438 = vmatpush1.bf16.xpose.msra.mxu0 0
      %2439 = vmatprep.subr.bf16.mxu0 0
      %2440 = vmatpush1.bf16.xpose.msra.mxu0 0
      %2441 = vmatprep.subr.bf16.mxu0 0
      %2442 = vmatpush1.bf16.xpose.msra.mxu0 0
      %2443 = vmatprep.subr.bf16.mxu0 0
      %2444 = vmatpush1.bf16.xpose.msra.mxu0 0
      %2445 = vmatprep.subr.bf16.mxu0 0
      %2446 = vmatpush1.bf16.xpose.msra.mxu0 0
      %2447 = vmatprep.subr.bf16.mxu0 0
      %2448 = vmatpush1.bf16.xpose.msra.mxu0 0
      %2449 = vmatprep.subr.bf16.mxu0 0
      %2450 = vmatpush1.bf16.xpose.msra.mxu0 0
      %2451 = vmatprep.subr.bf16.mxu0 0
      %2452 = vmatpush1.bf16.xpose.msra.mxu0 0
      %2453 = vmatprep.subr.bf16.mxu0 0
      %2454 = vmatpush1.bf16.xpose.msra.mxu0 0
      %2455 = vmatprep.subr.bf16.mxu0 0
      %2456 = vmatpush1.bf16.xpose.msra.mxu0 0
      %2457 = vmatprep.subr.bf16.mxu0 0
      %2458 = vmatpush1.bf16.xpose.msra.mxu0 0
      %2459 = vmatprep.mubr.bf16.mxu0 0
      %2460 = vmatmul.mubr.bf16.gmra.mrb[0].mxu0 %v2422
      %v2461 = vpop.f32.mrb[0].mxu0
      %v2462 = vadd.f32 0.0, %v2461
      %v2463 = vpop.f32.mrb[0].mxu0
      %v2464 = vpop.f32.mrb[0].mxu0
      %v2465 = vadd.f32 0.0, %v2464
      %v2466 = vpop.f32.mrb[0].mxu0
      %2467 = vdwg.mxu0
      %v2469 = vsel %vm1057, %v863, 0
      %v2472 = vsel %vm1057, %v1055, 0
      %2474 = vmatprep.subr.bf16.mxu0 0
      %2475 = vmatpush1.bf16.xpose.msra.mxu0 %v2472
      %2476 = vmatprep.subr.bf16.mxu0 0
      %2477 = vmatpush1.bf16.xpose.msra.mxu0 0
      %2478 = vmatprep.subr.bf16.mxu0 0
      %2479 = vmatpush1.bf16.xpose.msra.mxu0 0
      %2480 = vmatprep.subr.bf16.mxu0 0
      %2481 = vmatpush1.bf16.xpose.msra.mxu0 0
      %2482 = vmatprep.subr.bf16.mxu0 0
      %2483 = vmatpush1.bf16.xpose.msra.mxu0 0
      %2484 = vmatprep.subr.bf16.mxu0 0
      %2485 = vmatpush1.bf16.xpose.msra.mxu0 0
      %2486 = vmatprep.subr.bf16.mxu0 0
      %2487 = vmatpush1.bf16.xpose.msra.mxu0 0
      %2488 = vmatprep.subr.bf16.mxu0 0
      %2489 = vmatpush1.bf16.xpose.msra.mxu0 0
      %2490 = vmatprep.subr.bf16.mxu0 0
      %2491 = vmatpush1.bf16.xpose.msra.mxu0 0
      %2492 = vmatprep.subr.bf16.mxu0 0
      %2493 = vmatpush1.bf16.xpose.msra.mxu0 0
      %2494 = vmatprep.subr.bf16.mxu0 0
      %2495 = vmatpush1.bf16.xpose.msra.mxu0 0
      %2496 = vmatprep.subr.bf16.mxu0 0
      %2497 = vmatpush1.bf16.xpose.msra.mxu0 0
      %2498 = vmatprep.subr.bf16.mxu0 0
      %2499 = vmatpush1.bf16.xpose.msra.mxu0 0
      %2500 = vmatprep.subr.bf16.mxu0 0
      %2501 = vmatpush1.bf16.xpose.msra.mxu0 0
      %2502 = vmatprep.subr.bf16.mxu0 0
      %2503 = vmatpush1.bf16.xpose.msra.mxu0 0
      %2504 = vmatprep.subr.bf16.mxu0 0
      %2505 = vmatpush1.bf16.xpose.msra.mxu0 0
      %2506 = vmatprep.mubr.bf16.mxu0 0
      %2507 = vmatmul.mubr.bf16.gmra.mrb[0].mxu0 %v2469
      %v2508 = vpop.f32.mrb[0].mxu0
      %v2509 = vadd.f32 0.0, %v2508
      %v2510 = vpop.f32.mrb[0].mxu0
      %v2511 = vpop.f32.mrb[0].mxu0
      %v2512 = vadd.f32 0.0, %v2511
      %v2513 = vpop.f32.mrb[0].mxu0
      %2514 = vdwg.mxu0
      %v2516 = vsel %vm1057, %v864, 0
      %v2519 = vsel %vm1057, %v1056, 0
      %2521 = vmatprep.subr.bf16.mxu0 0
      %2522 = vmatpush1.bf16.xpose.msra.mxu0 %v2519
      %2523 = vmatprep.subr.bf16.mxu0 0
      %2524 = vmatpush1.bf16.xpose.msra.mxu0 0
      %2525 = vmatprep.subr.bf16.mxu0 0
      %2526 = vmatpush1.bf16.xpose.msra.mxu0 0
      %2527 = vmatprep.subr.bf16.mxu0 0
      %2528 = vmatpush1.bf16.xpose.msra.mxu0 0
      %2529 = vmatprep.subr.bf16.mxu0 0
      %2530 = vmatpush1.bf16.xpose.msra.mxu0 0
      %2531 = vmatprep.subr.bf16.mxu0 0
      %2532 = vmatpush1.bf16.xpose.msra.mxu0 0
      %2533 = vmatprep.subr.bf16.mxu0 0
      %2534 = vmatpush1.bf16.xpose.msra.mxu0 0
      %2535 = vmatprep.subr.bf16.mxu0 0
      %2536 = vmatpush1.bf16.xpose.msra.mxu0 0
      %2537 = vmatprep.subr.bf16.mxu0 0
      %2538 = vmatpush1.bf16.xpose.msra.mxu0 0
      %2539 = vmatprep.subr.bf16.mxu0 0
      %2540 = vmatpush1.bf16.xpose.msra.mxu0 0
      %2541 = vmatprep.subr.bf16.mxu0 0
      %2542 = vmatpush1.bf16.xpose.msra.mxu0 0
      %2543 = vmatprep.subr.bf16.mxu0 0
      %2544 = vmatpush1.bf16.xpose.msra.mxu0 0
      %2545 = vmatprep.subr.bf16.mxu0 0
      %2546 = vmatpush1.bf16.xpose.msra.mxu0 0
      %2547 = vmatprep.subr.bf16.mxu0 0
      %2548 = vmatpush1.bf16.xpose.msra.mxu0 0
      %2549 = vmatprep.subr.bf16.mxu0 0
      %2550 = vmatpush1.bf16.xpose.msra.mxu0 0
      %2551 = vmatprep.subr.bf16.mxu0 0
      %2552 = vmatpush1.bf16.xpose.msra.mxu0 0
      %2553 = vmatprep.mubr.bf16.mxu0 0
      %2554 = vmatmul.mubr.bf16.gmra.mrb[0].mxu0 %v2516
      %v2555 = vpop.f32.mrb[0].mxu0
      %v2556 = vadd.f32 0.0, %v2555
      %v2557 = vpop.f32.mrb[0].mxu0
      %v2558 = vpop.f32.mrb[0].mxu0
      %v2559 = vadd.f32 0.0, %v2558
      %v2560 = vpop.f32.mrb[0].mxu0
      %2561 = vdwg.mxu0
      %vm2562 = vcmask 130048
      %v2563 = vsel %vm2562, %v1099, -inf
      %2564 = vmax.xlane.f32.xlu0 %v2563
      %v2565 = vpop.xlane.xlu0 %2564
      %v2566 = vsel %vm2562, %v1102, -inf
      %2567 = vmax.xlane.f32.xlu0 %v2566
      %v2568 = vpop.xlane.xlu0 %2567
      %v2569 = vsel %vm2562, %v1146, -inf
      %2570 = vmax.xlane.f32.xlu0 %v2569
      %v2571 = vpop.xlane.xlu0 %2570
      %v2572 = vsel %vm2562, %v1149, -inf
      %2573 = vmax.xlane.f32.xlu0 %v2572
      %v2574 = vpop.xlane.xlu0 %2573
      %v2575 = vsel %vm2562, %v1193, -inf
      %2576 = vmax.xlane.f32.xlu0 %v2575
      %v2577 = vpop.xlane.xlu0 %2576
      %v2578 = vsel %vm2562, %v1196, -inf
      %2579 = vmax.xlane.f32.xlu0 %v2578
      %v2580 = vpop.xlane.xlu0 %2579
      %v2581 = vsel %vm2562, %v1240, -inf
      %2582 = vmax.xlane.f32.xlu0 %v2581
      %v2583 = vpop.xlane.xlu0 %2582
      %v2584 = vsel %vm2562, %v1243, -inf
      %2585 = vmax.xlane.f32.xlu0 %v2584
      %v2586 = vpop.xlane.xlu0 %2585
      %v2587 = vsel %vm2562, %v1287, -inf
      %2588 = vmax.xlane.f32.xlu0 %v2587
      %v2589 = vpop.xlane.xlu0 %2588
      %v2590 = vsel %vm2562, %v1290, -inf
      %2591 = vmax.xlane.f32.xlu0 %v2590
      %v2592 = vpop.xlane.xlu0 %2591
      %v2593 = vsel %vm2562, %v1334, -inf
      %2594 = vmax.xlane.f32.xlu0 %v2593
      %v2595 = vpop.xlane.xlu0 %2594
      %v2596 = vsel %vm2562, %v1337, -inf
      %2597 = vmax.xlane.f32.xlu0 %v2596
      %v2598 = vpop.xlane.xlu0 %2597
      %v2599 = vsel %vm2562, %v1381, -inf
      %2600 = vmax.xlane.f32.xlu0 %v2599
      %v2601 = vpop.xlane.xlu0 %2600
      %v2602 = vsel %vm2562, %v1384, -inf
      %2603 = vmax.xlane.f32.xlu0 %v2602
      %v2604 = vpop.xlane.xlu0 %2603
      %v2605 = vsel %vm2562, %v1428, -inf
      %2606 = vmax.xlane.f32.xlu0 %v2605
      %v2607 = vpop.xlane.xlu0 %2606
      %v2608 = vsel %vm2562, %v1431, -inf
      %2609 = vmax.xlane.f32.xlu0 %v2608
      %v2610 = vpop.xlane.xlu0 %2609
      %v2611 = vsel %vm2562, %v1475, -inf
      %2612 = vmax.xlane.f32.xlu0 %v2611
      %v2613 = vpop.xlane.xlu0 %2612
      %v2614 = vsel %vm2562, %v1478, -inf
      %2615 = vmax.xlane.f32.xlu0 %v2614
      %v2616 = vpop.xlane.xlu0 %2615
      %v2617 = vsel %vm2562, %v1522, -inf
      %2618 = vmax.xlane.f32.xlu0 %v2617
      %v2619 = vpop.xlane.xlu0 %2618
      %v2620 = vsel %vm2562, %v1525, -inf
      %2621 = vmax.xlane.f32.xlu0 %v2620
      %v2622 = vpop.xlane.xlu0 %2621
      %v2623 = vsel %vm2562, %v1569, -inf
      %2624 = vmax.xlane.f32.xlu0 %v2623
      %v2625 = vpop.xlane.xlu0 %2624
      %v2626 = vsel %vm2562, %v1572, -inf
      %2627 = vmax.xlane.f32.xlu0 %v2626
      %v2628 = vpop.xlane.xlu0 %2627
      %v2629 = vsel %vm2562, %v1616, -inf
      %2630 = vmax.xlane.f32.xlu0 %v2629
      %v2631 = vpop.xlane.xlu0 %2630
      %v2632 = vsel %vm2562, %v1619, -inf
      %2633 = vmax.xlane.f32.xlu0 %v2632
      %v2634 = vpop.xlane.xlu0 %2633
      %v2635 = vsel %vm2562, %v1663, -inf
      %2636 = vmax.xlane.f32.xlu0 %v2635
      %v2637 = vpop.xlane.xlu0 %2636
      %v2638 = vsel %vm2562, %v1666, -inf
      %2639 = vmax.xlane.f32.xlu0 %v2638
      %v2640 = vpop.xlane.xlu0 %2639
      %v2641 = vsel %vm2562, %v1710, -inf
      %2642 = vmax.xlane.f32.xlu0 %v2641
      %v2643 = vpop.xlane.xlu0 %2642
      %v2644 = vsel %vm2562, %v1713, -inf
      %2645 = vmax.xlane.f32.xlu0 %v2644
      %v2646 = vpop.xlane.xlu0 %2645
      %v2647 = vsel %vm2562, %v1757, -inf
      %2648 = vmax.xlane.f32.xlu0 %v2647
      %v2649 = vpop.xlane.xlu0 %2648
      %v2650 = vsel %vm2562, %v1760, -inf
      %2651 = vmax.xlane.f32.xlu0 %v2650
      %v2652 = vpop.xlane.xlu0 %2651
      %v2653 = vsel %vm2562, %v1804, -inf
      %2654 = vmax.xlane.f32.xlu0 %v2653
      %v2655 = vpop.xlane.xlu0 %2654
      %v2656 = vsel %vm2562, %v1807, -inf
      %2657 = vmax.xlane.f32.xlu0 %v2656
      %v2658 = vpop.xlane.xlu0 %2657
      %v2659 = vsel %vm2562, %v1851, -inf
      %2660 = vmax.xlane.f32.xlu0 %v2659
      %v2661 = vpop.xlane.xlu0 %2660
      %v2662 = vsel %vm2562, %v1854, -inf
      %2663 = vmax.xlane.f32.xlu0 %v2662
      %v2664 = vpop.xlane.xlu0 %2663
      %v2665 = vsel %vm2562, %v1898, -inf
      %2666 = vmax.xlane.f32.xlu0 %v2665
      %v2667 = vpop.xlane.xlu0 %2666
      %v2668 = vsel %vm2562, %v1901, -inf
      %2669 = vmax.xlane.f32.xlu0 %v2668
      %v2670 = vpop.xlane.xlu0 %2669
      %v2671 = vsel %vm2562, %v1945, -inf
      %2672 = vmax.xlane.f32.xlu0 %v2671
      %v2673 = vpop.xlane.xlu0 %2672
      %v2674 = vsel %vm2562, %v1948, -inf
      %2675 = vmax.xlane.f32.xlu0 %v2674
      %v2676 = vpop.xlane.xlu0 %2675
      %v2677 = vsel %vm2562, %v1992, -inf
      %2678 = vmax.xlane.f32.xlu0 %v2677
      %v2679 = vpop.xlane.xlu0 %2678
      %v2680 = vsel %vm2562, %v1995, -inf
      %2681 = vmax.xlane.f32.xlu0 %v2680
      %v2682 = vpop.xlane.xlu0 %2681
      %v2683 = vsel %vm2562, %v2039, -inf
      %2684 = vmax.xlane.f32.xlu0 %v2683
      %v2685 = vpop.xlane.xlu0 %2684
      %v2686 = vsel %vm2562, %v2042, -inf
      %2687 = vmax.xlane.f32.xlu0 %v2686
      %v2688 = vpop.xlane.xlu0 %2687
      %v2689 = vsel %vm2562, %v2086, -inf
      %2690 = vmax.xlane.f32.xlu0 %v2689
      %v2691 = vpop.xlane.xlu0 %2690
      %v2692 = vsel %vm2562, %v2089, -inf
      %2693 = vmax.xlane.f32.xlu0 %v2692
      %v2694 = vpop.xlane.xlu0 %2693
      %v2695 = vsel %vm2562, %v2133, -inf
      %2696 = vmax.xlane.f32.xlu0 %v2695
      %v2697 = vpop.xlane.xlu0 %2696
      %v2698 = vsel %vm2562, %v2136, -inf
      %2699 = vmax.xlane.f32.xlu0 %v2698
      %v2700 = vpop.xlane.xlu0 %2699
      %v2701 = vsel %vm2562, %v2180, -inf
      %2702 = vmax.xlane.f32.xlu0 %v2701
      %v2703 = vpop.xlane.xlu0 %2702
      %v2704 = vsel %vm2562, %v2183, -inf
      %2705 = vmax.xlane.f32.xlu0 %v2704
      %v2706 = vpop.xlane.xlu0 %2705
      %v2707 = vsel %vm2562, %v2227, -inf
      %2708 = vmax.xlane.f32.xlu0 %v2707
      %v2709 = vpop.xlane.xlu0 %2708
      %v2710 = vsel %vm2562, %v2230, -inf
      %2711 = vmax.xlane.f32.xlu0 %v2710
      %v2712 = vpop.xlane.xlu0 %2711
      %v2713 = vsel %vm2562, %v2274, -inf
      %2714 = vmax.xlane.f32.xlu0 %v2713
      %v2715 = vpop.xlane.xlu0 %2714
      %v2716 = vsel %vm2562, %v2277, -inf
      %2717 = vmax.xlane.f32.xlu0 %v2716
      %v2718 = vpop.xlane.xlu0 %2717
      %v2719 = vsel %vm2562, %v2321, -inf
      %2720 = vmax.xlane.f32.xlu0 %v2719
      %v2721 = vpop.xlane.xlu0 %2720
      %v2722 = vsel %vm2562, %v2324, -inf
      %2723 = vmax.xlane.f32.xlu0 %v2722
      %v2724 = vpop.xlane.xlu0 %2723
      %v2725 = vsel %vm2562, %v2368, -inf
      %2726 = vmax.xlane.f32.xlu0 %v2725
      %v2727 = vpop.xlane.xlu0 %2726
      %v2728 = vsel %vm2562, %v2371, -inf
      %2729 = vmax.xlane.f32.xlu0 %v2728
      %v2730 = vpop.xlane.xlu0 %2729
      %v2731 = vsel %vm2562, %v2415, -inf
      %2732 = vmax.xlane.f32.xlu0 %v2731
      %v2733 = vpop.xlane.xlu0 %2732
      %v2734 = vsel %vm2562, %v2418, -inf
      %2735 = vmax.xlane.f32.xlu0 %v2734
      %v2736 = vpop.xlane.xlu0 %2735
      %v2737 = vsel %vm2562, %v2462, -inf
      %2738 = vmax.xlane.f32.xlu0 %v2737
      %v2739 = vpop.xlane.xlu0 %2738
      %v2740 = vsel %vm2562, %v2465, -inf
      %2741 = vmax.xlane.f32.xlu0 %v2740
      %v2742 = vpop.xlane.xlu0 %2741
      %v2743 = vsel %vm2562, %v2509, -inf
      %2744 = vmax.xlane.f32.xlu0 %v2743
      %v2745 = vpop.xlane.xlu0 %2744
      %v2746 = vsel %vm2562, %v2512, -inf
      %2747 = vmax.xlane.f32.xlu0 %v2746
      %v2748 = vpop.xlane.xlu0 %2747
      %v2749 = vsel %vm2562, %v2556, -inf
      %2750 = vmax.xlane.f32.xlu0 %v2749
      %v2751 = vpop.xlane.xlu0 %2750
      %v2752 = vsel %vm2562, %v2559, -inf
      %2753 = vmax.xlane.f32.xlu0 %v2752
      %v2754 = vpop.xlane.xlu0 %2753
      %v2755 = vsub.f32 %v1099, %v2565
      %v2756 = vsub.f32 %v1102, %v2568
      %v2757 = vsub.f32 %v1146, %v2571
      %v2758 = vsub.f32 %v1149, %v2574
      %v2759 = vsub.f32 %v1193, %v2577
      %v2760 = vsub.f32 %v1196, %v2580
      %v2761 = vsub.f32 %v1240, %v2583
      %v2762 = vsub.f32 %v1243, %v2586
      %v2763 = vsub.f32 %v1287, %v2589
      %v2764 = vsub.f32 %v1290, %v2592
      %v2765 = vsub.f32 %v1334, %v2595
      %v2766 = vsub.f32 %v1337, %v2598
      %v2767 = vsub.f32 %v1381, %v2601
      %v2768 = vsub.f32 %v1384, %v2604
      %v2769 = vsub.f32 %v1428, %v2607
      %v2770 = vsub.f32 %v1431, %v2610
      %v2771 = vsub.f32 %v1475, %v2613
      %v2772 = vsub.f32 %v1478, %v2616
      %v2773 = vsub.f32 %v1522, %v2619
      %v2774 = vsub.f32 %v1525, %v2622
      %v2775 = vsub.f32 %v1569, %v2625
      %v2776 = vsub.f32 %v1572, %v2628
      %v2777 = vsub.f32 %v1616, %v2631
      %v2778 = vsub.f32 %v1619, %v2634
      %v2779 = vsub.f32 %v1663, %v2637
      %v2780 = vsub.f32 %v1666, %v2640
      %v2781 = vsub.f32 %v1710, %v2643
      %v2782 = vsub.f32 %v1713, %v2646
      %v2783 = vsub.f32 %v1757, %v2649
      %v2784 = vsub.f32 %v1760, %v2652
      %v2785 = vsub.f32 %v1804, %v2655
      %v2786 = vsub.f32 %v1807, %v2658
      %v2787 = vsub.f32 %v1851, %v2661
      %v2788 = vsub.f32 %v1854, %v2664
      %v2789 = vsub.f32 %v1898, %v2667
      %v2790 = vsub.f32 %v1901, %v2670
      %v2791 = vsub.f32 %v1945, %v2673
      %v2792 = vsub.f32 %v1948, %v2676
      %v2793 = vsub.f32 %v1992, %v2679
      %v2794 = vsub.f32 %v1995, %v2682
      %v2795 = vsub.f32 %v2039, %v2685
      %v2796 = vsub.f32 %v2042, %v2688
      %v2797 = vsub.f32 %v2086, %v2691
      %v2798 = vsub.f32 %v2089, %v2694
      %v2799 = vsub.f32 %v2133, %v2697
      %v2800 = vsub.f32 %v2136, %v2700
      %v2801 = vsub.f32 %v2180, %v2703
      %v2802 = vsub.f32 %v2183, %v2706
      %v2803 = vsub.f32 %v2227, %v2709
      %v2804 = vsub.f32 %v2230, %v2712
      %v2805 = vsub.f32 %v2274, %v2715
      %v2806 = vsub.f32 %v2277, %v2718
      %v2807 = vsub.f32 %v2321, %v2721
      %v2808 = vsub.f32 %v2324, %v2724
      %v2809 = vsub.f32 %v2368, %v2727
      %v2810 = vsub.f32 %v2371, %v2730
      %v2811 = vsub.f32 %v2415, %v2733
      %v2812 = vsub.f32 %v2418, %v2736
      %v2813 = vsub.f32 %v2462, %v2739
      %v2814 = vsub.f32 %v2465, %v2742
      %v2815 = vsub.f32 %v2509, %v2745
      %v2816 = vsub.f32 %v2512, %v2748
      %v2817 = vsub.f32 %v2556, %v2751
      %v2818 = vsub.f32 %v2559, %v2754
      %v2819 = vmul.f32 %v2755, 1.442695
      %v2820 = vpow.pop %v2819
      %v2821 = vmul.f32 %v2756, 1.442695
      %v2822 = vpow.pop %v2821
      %v2823 = vmul.f32 %v2757, 1.442695
      %v2824 = vpow.pop %v2823
      %v2825 = vmul.f32 %v2758, 1.442695
      %v2826 = vpow.pop %v2825
      %v2827 = vmul.f32 %v2759, 1.442695
      %v2828 = vpow.pop %v2827
      %v2829 = vmul.f32 %v2760, 1.442695
      %v2830 = vpow.pop %v2829
      %v2831 = vmul.f32 %v2761, 1.442695
      %v2832 = vpow.pop %v2831
      %v2833 = vmul.f32 %v2762, 1.442695
      %v2834 = vpow.pop %v2833
      %v2835 = vmul.f32 %v2763, 1.442695
      %v2836 = vpow.pop %v2835
      %v2837 = vmul.f32 %v2764, 1.442695
      %v2838 = vpow.pop %v2837
      %v2839 = vmul.f32 %v2765, 1.442695
      %v2840 = vpow.pop %v2839
      %v2841 = vmul.f32 %v2766, 1.442695
      %v2842 = vpow.pop %v2841
      %v2843 = vmul.f32 %v2767, 1.442695
      %v2844 = vpow.pop %v2843
      %v2845 = vmul.f32 %v2768, 1.442695
      %v2846 = vpow.pop %v2845
      %v2847 = vmul.f32 %v2769, 1.442695
      %v2848 = vpow.pop %v2847
      %v2849 = vmul.f32 %v2770, 1.442695
      %v2850 = vpow.pop %v2849
      %v2851 = vmul.f32 %v2771, 1.442695
      %v2852 = vpow.pop %v2851
      %v2853 = vmul.f32 %v2772, 1.442695
      %v2854 = vpow.pop %v2853
      %v2855 = vmul.f32 %v2773, 1.442695
      %v2856 = vpow.pop %v2855
      %v2857 = vmul.f32 %v2774, 1.442695
      %v2858 = vpow.pop %v2857
      %v2859 = vmul.f32 %v2775, 1.442695
      %v2860 = vpow.pop %v2859
      %v2861 = vmul.f32 %v2776, 1.442695
      %v2862 = vpow.pop %v2861
      %v2863 = vmul.f32 %v2777, 1.442695
      %v2864 = vpow.pop %v2863
      %v2865 = vmul.f32 %v2778, 1.442695
      %v2866 = vpow.pop %v2865
      %v2867 = vmul.f32 %v2779, 1.442695
      %v2868 = vpow.pop %v2867
      %v2869 = vmul.f32 %v2780, 1.442695
      %v2870 = vpow.pop %v2869
      %v2871 = vmul.f32 %v2781, 1.442695
      %v2872 = vpow.pop %v2871
      %v2873 = vmul.f32 %v2782, 1.442695
      %v2874 = vpow.pop %v2873
      %v2875 = vmul.f32 %v2783, 1.442695
      %v2876 = vpow.pop %v2875
      %v2877 = vmul.f32 %v2784, 1.442695
      %v2878 = vpow.pop %v2877
      %v2879 = vmul.f32 %v2785, 1.442695
      %v2880 = vpow.pop %v2879
      %v2881 = vmul.f32 %v2786, 1.442695
      %v2882 = vpow.pop %v2881
      %v2883 = vmul.f32 %v2787, 1.442695
      %v2884 = vpow.pop %v2883
      %v2885 = vmul.f32 %v2788, 1.442695
      %v2886 = vpow.pop %v2885
      %v2887 = vmul.f32 %v2789, 1.442695
      %v2888 = vpow.pop %v2887
      %v2889 = vmul.f32 %v2790, 1.442695
      %v2890 = vpow.pop %v2889
      %v2891 = vmul.f32 %v2791, 1.442695
      %v2892 = vpow.pop %v2891
      %v2893 = vmul.f32 %v2792, 1.442695
      %v2894 = vpow.pop %v2893
      %v2895 = vmul.f32 %v2793, 1.442695
      %v2896 = vpow.pop %v2895
      %v2897 = vmul.f32 %v2794, 1.442695
      %v2898 = vpow.pop %v2897
      %v2899 = vmul.f32 %v2795, 1.442695
      %v2900 = vpow.pop %v2899
      %v2901 = vmul.f32 %v2796, 1.442695
      %v2902 = vpow.pop %v2901
      %v2903 = vmul.f32 %v2797, 1.442695
      %v2904 = vpow.pop %v2903
      %v2905 = vmul.f32 %v2798, 1.442695
      %v2906 = vpow.pop %v2905
      %v2907 = vmul.f32 %v2799, 1.442695
      %v2908 = vpow.pop %v2907
      %v2909 = vmul.f32 %v2800, 1.442695
      %v2910 = vpow.pop %v2909
      %v2911 = vmul.f32 %v2801, 1.442695
      %v2912 = vpow.pop %v2911
      %v2913 = vmul.f32 %v2802, 1.442695
      %v2914 = vpow.pop %v2913
      %v2915 = vmul.f32 %v2803, 1.442695
      %v2916 = vpow.pop %v2915
      %v2917 = vmul.f32 %v2804, 1.442695
      %v2918 = vpow.pop %v2917
      %v2919 = vmul.f32 %v2805, 1.442695
      %v2920 = vpow.pop %v2919
      %v2921 = vmul.f32 %v2806, 1.442695
      %v2922 = vpow.pop %v2921
      %v2923 = vmul.f32 %v2807, 1.442695
      %v2924 = vpow.pop %v2923
      %v2925 = vmul.f32 %v2808, 1.442695
      %v2926 = vpow.pop %v2925
      %v2927 = vmul.f32 %v2809, 1.442695
      %v2928 = vpow.pop %v2927
      %v2929 = vmul.f32 %v2810, 1.442695
      %v2930 = vpow.pop %v2929
      %v2931 = vmul.f32 %v2811, 1.442695
      %v2932 = vpow.pop %v2931
      %v2933 = vmul.f32 %v2812, 1.442695
      %v2934 = vpow.pop %v2933
      %v2935 = vmul.f32 %v2813, 1.442695
      %v2936 = vpow.pop %v2935
      %v2937 = vmul.f32 %v2814, 1.442695
      %v2938 = vpow.pop %v2937
      %v2939 = vmul.f32 %v2815, 1.442695
      %v2940 = vpow.pop %v2939
      %v2941 = vmul.f32 %v2816, 1.442695
      %v2942 = vpow.pop %v2941
      %v2943 = vmul.f32 %v2817, 1.442695
      %v2944 = vpow.pop %v2943
      %v2945 = vmul.f32 %v2818, 1.442695
      %v2946 = vpow.pop %v2945
      %v2947 = vsel %vm2562, %v2820, 0.0
      %2948 = vadd.xlane.f32.xlu0 %v2947
      %v2949 = vpop.xlane.xlu0 %2948
      %v2950 = vsel %vm2562, %v2822, 0.0
      %2951 = vadd.xlane.f32.xlu0 %v2950
      %v2952 = vpop.xlane.xlu0 %2951
      %v2953 = vsel %vm2562, %v2824, 0.0
      %2954 = vadd.xlane.f32.xlu0 %v2953
      %v2955 = vpop.xlane.xlu0 %2954
      %v2956 = vsel %vm2562, %v2826, 0.0
      %2957 = vadd.xlane.f32.xlu0 %v2956
      %v2958 = vpop.xlane.xlu0 %2957
      %v2959 = vsel %vm2562, %v2828, 0.0
      %2960 = vadd.xlane.f32.xlu0 %v2959
      %v2961 = vpop.xlane.xlu0 %2960
      %v2962 = vsel %vm2562, %v2830, 0.0
      %2963 = vadd.xlane.f32.xlu0 %v2962
      %v2964 = vpop.xlane.xlu0 %2963
      %v2965 = vsel %vm2562, %v2832, 0.0
      %2966 = vadd.xlane.f32.xlu0 %v2965
      %v2967 = vpop.xlane.xlu0 %2966
      %v2968 = vsel %vm2562, %v2834, 0.0
      %2969 = vadd.xlane.f32.xlu0 %v2968
      %v2970 = vpop.xlane.xlu0 %2969
      %v2971 = vsel %vm2562, %v2836, 0.0
      %2972 = vadd.xlane.f32.xlu0 %v2971
      %v2973 = vpop.xlane.xlu0 %2972
      %v2974 = vsel %vm2562, %v2838, 0.0
      %2975 = vadd.xlane.f32.xlu0 %v2974
      %v2976 = vpop.xlane.xlu0 %2975
      %v2977 = vsel %vm2562, %v2840, 0.0
      %2978 = vadd.xlane.f32.xlu0 %v2977
      %v2979 = vpop.xlane.xlu0 %2978
      %v2980 = vsel %vm2562, %v2842, 0.0
      %2981 = vadd.xlane.f32.xlu0 %v2980
      %v2982 = vpop.xlane.xlu0 %2981
      %v2983 = vsel %vm2562, %v2844, 0.0
      %2984 = vadd.xlane.f32.xlu0 %v2983
      %v2985 = vpop.xlane.xlu0 %2984
      %v2986 = vsel %vm2562, %v2846, 0.0
      %2987 = vadd.xlane.f32.xlu0 %v2986
      %v2988 = vpop.xlane.xlu0 %2987
      %v2989 = vsel %vm2562, %v2848, 0.0
      %2990 = vadd.xlane.f32.xlu0 %v2989
      %v2991 = vpop.xlane.xlu0 %2990
      %v2992 = vsel %vm2562, %v2850, 0.0
      %2993 = vadd.xlane.f32.xlu0 %v2992
      %v2994 = vpop.xlane.xlu0 %2993
      %v2995 = vsel %vm2562, %v2852, 0.0
      %2996 = vadd.xlane.f32.xlu0 %v2995
      %v2997 = vpop.xlane.xlu0 %2996
      %v2998 = vsel %vm2562, %v2854, 0.0
      %2999 = vadd.xlane.f32.xlu0 %v2998
      %v3000 = vpop.xlane.xlu0 %2999
      %v3001 = vsel %vm2562, %v2856, 0.0
      %3002 = vadd.xlane.f32.xlu0 %v3001
      %v3003 = vpop.xlane.xlu0 %3002
      %v3004 = vsel %vm2562, %v2858, 0.0
      %3005 = vadd.xlane.f32.xlu0 %v3004
      %v3006 = vpop.xlane.xlu0 %3005
      %v3007 = vsel %vm2562, %v2860, 0.0
      %3008 = vadd.xlane.f32.xlu0 %v3007
      %v3009 = vpop.xlane.xlu0 %3008
      %v3010 = vsel %vm2562, %v2862, 0.0
      %3011 = vadd.xlane.f32.xlu0 %v3010
      %v3012 = vpop.xlane.xlu0 %3011
      %v3013 = vsel %vm2562, %v2864, 0.0
      %3014 = vadd.xlane.f32.xlu0 %v3013
      %v3015 = vpop.xlane.xlu0 %3014
      %v3016 = vsel %vm2562, %v2866, 0.0
      %3017 = vadd.xlane.f32.xlu0 %v3016
      %v3018 = vpop.xlane.xlu0 %3017
      %v3019 = vsel %vm2562, %v2868, 0.0
      %3020 = vadd.xlane.f32.xlu0 %v3019
      %v3021 = vpop.xlane.xlu0 %3020
      %v3022 = vsel %vm2562, %v2870, 0.0
      %3023 = vadd.xlane.f32.xlu0 %v3022
      %v3024 = vpop.xlane.xlu0 %3023
      %v3025 = vsel %vm2562, %v2872, 0.0
      %3026 = vadd.xlane.f32.xlu0 %v3025
      %v3027 = vpop.xlane.xlu0 %3026
      %v3028 = vsel %vm2562, %v2874, 0.0
      %3029 = vadd.xlane.f32.xlu0 %v3028
      %v3030 = vpop.xlane.xlu0 %3029
      %v3031 = vsel %vm2562, %v2876, 0.0
      %3032 = vadd.xlane.f32.xlu0 %v3031
      %v3033 = vpop.xlane.xlu0 %3032
      %v3034 = vsel %vm2562, %v2878, 0.0
      %3035 = vadd.xlane.f32.xlu0 %v3034
      %v3036 = vpop.xlane.xlu0 %3035
      %v3037 = vsel %vm2562, %v2880, 0.0
      %3038 = vadd.xlane.f32.xlu0 %v3037
      %v3039 = vpop.xlane.xlu0 %3038
      %v3040 = vsel %vm2562, %v2882, 0.0
      %3041 = vadd.xlane.f32.xlu0 %v3040
      %v3042 = vpop.xlane.xlu0 %3041
      %v3043 = vsel %vm2562, %v2884, 0.0
      %3044 = vadd.xlane.f32.xlu0 %v3043
      %v3045 = vpop.xlane.xlu0 %3044
      %v3046 = vsel %vm2562, %v2886, 0.0
      %3047 = vadd.xlane.f32.xlu0 %v3046
      %v3048 = vpop.xlane.xlu0 %3047
      %v3049 = vsel %vm2562, %v2888, 0.0
      %3050 = vadd.xlane.f32.xlu0 %v3049
      %v3051 = vpop.xlane.xlu0 %3050
      %v3052 = vsel %vm2562, %v2890, 0.0
      %3053 = vadd.xlane.f32.xlu0 %v3052
      %v3054 = vpop.xlane.xlu0 %3053
      %v3055 = vsel %vm2562, %v2892, 0.0
      %3056 = vadd.xlane.f32.xlu0 %v3055
      %v3057 = vpop.xlane.xlu0 %3056
      %v3058 = vsel %vm2562, %v2894, 0.0
      %3059 = vadd.xlane.f32.xlu0 %v3058
      %v3060 = vpop.xlane.xlu0 %3059
      %v3061 = vsel %vm2562, %v2896, 0.0
      %3062 = vadd.xlane.f32.xlu0 %v3061
      %v3063 = vpop.xlane.xlu0 %3062
      %v3064 = vsel %vm2562, %v2898, 0.0
      %3065 = vadd.xlane.f32.xlu0 %v3064
      %v3066 = vpop.xlane.xlu0 %3065
      %v3067 = vsel %vm2562, %v2900, 0.0
      %3068 = vadd.xlane.f32.xlu0 %v3067
      %v3069 = vpop.xlane.xlu0 %3068
      %v3070 = vsel %vm2562, %v2902, 0.0
      %3071 = vadd.xlane.f32.xlu0 %v3070
      %v3072 = vpop.xlane.xlu0 %3071
      %v3073 = vsel %vm2562, %v2904, 0.0
      %3074 = vadd.xlane.f32.xlu0 %v3073
      %v3075 = vpop.xlane.xlu0 %3074
      %v3076 = vsel %vm2562, %v2906, 0.0
      %3077 = vadd.xlane.f32.xlu0 %v3076
      %v3078 = vpop.xlane.xlu0 %3077
      %v3079 = vsel %vm2562, %v2908, 0.0
      %3080 = vadd.xlane.f32.xlu0 %v3079
      %v3081 = vpop.xlane.xlu0 %3080
      %v3082 = vsel %vm2562, %v2910, 0.0
      %3083 = vadd.xlane.f32.xlu0 %v3082
      %v3084 = vpop.xlane.xlu0 %3083
      %v3085 = vsel %vm2562, %v2912, 0.0
      %3086 = vadd.xlane.f32.xlu0 %v3085
      %v3087 = vpop.xlane.xlu0 %3086
      %v3088 = vsel %vm2562, %v2914, 0.0
      %3089 = vadd.xlane.f32.xlu0 %v3088
      %v3090 = vpop.xlane.xlu0 %3089
      %v3091 = vsel %vm2562, %v2916, 0.0
      %3092 = vadd.xlane.f32.xlu0 %v3091
      %v3093 = vpop.xlane.xlu0 %3092
      %v3094 = vsel %vm2562, %v2918, 0.0
      %3095 = vadd.xlane.f32.xlu0 %v3094
      %v3096 = vpop.xlane.xlu0 %3095
      %v3097 = vsel %vm2562, %v2920, 0.0
      %3098 = vadd.xlane.f32.xlu0 %v3097
      %v3099 = vpop.xlane.xlu0 %3098
      %v3100 = vsel %vm2562, %v2922, 0.0
      %3101 = vadd.xlane.f32.xlu0 %v3100
      %v3102 = vpop.xlane.xlu0 %3101
      %v3103 = vsel %vm2562, %v2924, 0.0
      %3104 = vadd.xlane.f32.xlu0 %v3103
      %v3105 = vpop.xlane.xlu0 %3104
      %v3106 = vsel %vm2562, %v2926, 0.0
      %3107 = vadd.xlane.f32.xlu0 %v3106
      %v3108 = vpop.xlane.xlu0 %3107
      %v3109 = vsel %vm2562, %v2928, 0.0
      %3110 = vadd.xlane.f32.xlu0 %v3109
      %v3111 = vpop.xlane.xlu0 %3110
      %v3112 = vsel %vm2562, %v2930, 0.0
      %3113 = vadd.xlane.f32.xlu0 %v3112
      %v3114 = vpop.xlane.xlu0 %3113
      %v3115 = vsel %vm2562, %v2932, 0.0
      %3116 = vadd.xlane.f32.xlu0 %v3115
      %v3117 = vpop.xlane.xlu0 %3116
      %v3118 = vsel %vm2562, %v2934, 0.0
      %3119 = vadd.xlane.f32.xlu0 %v3118
      %v3120 = vpop.xlane.xlu0 %3119
      %v3121 = vsel %vm2562, %v2936, 0.0
      %3122 = vadd.xlane.f32.xlu0 %v3121
      %v3123 = vpop.xlane.xlu0 %3122
      %v3124 = vsel %vm2562, %v2938, 0.0
      %3125 = vadd.xlane.f32.xlu0 %v3124
      %v3126 = vpop.xlane.xlu0 %3125
      %v3127 = vsel %vm2562, %v2940, 0.0
      %3128 = vadd.xlane.f32.xlu0 %v3127
      %v3129 = vpop.xlane.xlu0 %3128
      %v3130 = vsel %vm2562, %v2942, 0.0
      %3131 = vadd.xlane.f32.xlu0 %v3130
      %v3132 = vpop.xlane.xlu0 %3131
      %v3133 = vsel %vm2562, %v2944, 0.0
      %3134 = vadd.xlane.f32.xlu0 %v3133
      %v3135 = vpop.xlane.xlu0 %3134
      %v3136 = vsel %vm2562, %v2946, 0.0
      %3137 = vadd.xlane.f32.xlu0 %v3136
      %v3138 = vpop.xlane.xlu0 %3137
      %v3139 = vrcp.pop %v2949
      %v3140 = vrcp.pop %v2952
      %v3141 = vrcp.pop %v2955
      %v3142 = vrcp.pop %v2958
      %v3143 = vrcp.pop %v2961
      %v3144 = vrcp.pop %v2964
      %v3145 = vrcp.pop %v2967
      %v3146 = vrcp.pop %v2970
      %v3147 = vrcp.pop %v2973
      %v3148 = vrcp.pop %v2976
      %v3149 = vrcp.pop %v2979
      %v3150 = vrcp.pop %v2982
      %v3151 = vrcp.pop %v2985
      %v3152 = vrcp.pop %v2988
      %v3153 = vrcp.pop %v2991
      %v3154 = vrcp.pop %v2994
      %v3155 = vrcp.pop %v2997
      %v3156 = vrcp.pop %v3000
      %v3157 = vrcp.pop %v3003
      %v3158 = vrcp.pop %v3006
      %v3159 = vrcp.pop %v3009
      %v3160 = vrcp.pop %v3012
      %v3161 = vrcp.pop %v3015
      %v3162 = vrcp.pop %v3018
      %v3163 = vrcp.pop %v3021
      %v3164 = vrcp.pop %v3024
      %v3165 = vrcp.pop %v3027
      %v3166 = vrcp.pop %v3030
      %v3167 = vrcp.pop %v3033
      %v3168 = vrcp.pop %v3036
      %v3169 = vrcp.pop %v3039
      %v3170 = vrcp.pop %v3042
      %v3171 = vrcp.pop %v3045
      %v3172 = vrcp.pop %v3048
      %v3173 = vrcp.pop %v3051
      %v3174 = vrcp.pop %v3054
      %v3175 = vrcp.pop %v3057
      %v3176 = vrcp.pop %v3060
      %v3177 = vrcp.pop %v3063
      %v3178 = vrcp.pop %v3066
      %v3179 = vrcp.pop %v3069
      %v3180 = vrcp.pop %v3072
      %v3181 = vrcp.pop %v3075
      %v3182 = vrcp.pop %v3078
      %v3183 = vrcp.pop %v3081
      %v3184 = vrcp.pop %v3084
      %v3185 = vrcp.pop %v3087
      %v3186 = vrcp.pop %v3090
      %v3187 = vrcp.pop %v3093
      %v3188 = vrcp.pop %v3096
      %v3189 = vrcp.pop %v3099
      %v3190 = vrcp.pop %v3102
      %v3191 = vrcp.pop %v3105
      %v3192 = vrcp.pop %v3108
      %v3193 = vrcp.pop %v3111
      %v3194 = vrcp.pop %v3114
      %v3195 = vrcp.pop %v3117
      %v3196 = vrcp.pop %v3120
      %v3197 = vrcp.pop %v3123
      %v3198 = vrcp.pop %v3126
      %v3199 = vrcp.pop %v3129
      %v3200 = vrcp.pop %v3132
      %v3201 = vrcp.pop %v3135
      %v3202 = vrcp.pop %v3138
      %v3203 = vmul.f32 %v2820, %v3139
      %v3204 = vmul.f32 %v2822, %v3140
      %v3205 = vmul.f32 %v2824, %v3141
      %v3206 = vmul.f32 %v2826, %v3142
      %v3207 = vmul.f32 %v2828, %v3143
      %v3208 = vmul.f32 %v2830, %v3144
      %v3209 = vmul.f32 %v2832, %v3145
      %v3210 = vmul.f32 %v2834, %v3146
      %v3211 = vmul.f32 %v2836, %v3147
      %v3212 = vmul.f32 %v2838, %v3148
      %v3213 = vmul.f32 %v2840, %v3149
      %v3214 = vmul.f32 %v2842, %v3150
      %v3215 = vmul.f32 %v2844, %v3151
      %v3216 = vmul.f32 %v2846, %v3152
      %v3217 = vmul.f32 %v2848, %v3153
      %v3218 = vmul.f32 %v2850, %v3154
      %v3219 = vmul.f32 %v2852, %v3155
      %v3220 = vmul.f32 %v2854, %v3156
      %v3221 = vmul.f32 %v2856, %v3157
      %v3222 = vmul.f32 %v2858, %v3158
      %v3223 = vmul.f32 %v2860, %v3159
      %v3224 = vmul.f32 %v2862, %v3160
      %v3225 = vmul.f32 %v2864, %v3161
      %v3226 = vmul.f32 %v2866, %v3162
      %v3227 = vmul.f32 %v2868, %v3163
      %v3228 = vmul.f32 %v2870, %v3164
      %v3229 = vmul.f32 %v2872, %v3165
      %v3230 = vmul.f32 %v2874, %v3166
      %v3231 = vmul.f32 %v2876, %v3167
      %v3232 = vmul.f32 %v2878, %v3168
      %v3233 = vmul.f32 %v2880, %v3169
      %v3234 = vmul.f32 %v2882, %v3170
      %v3235 = vmul.f32 %v2884, %v3171
      %v3236 = vmul.f32 %v2886, %v3172
      %v3237 = vmul.f32 %v2888, %v3173
      %v3238 = vmul.f32 %v2890, %v3174
      %v3239 = vmul.f32 %v2892, %v3175
      %v3240 = vmul.f32 %v2894, %v3176
      %v3241 = vmul.f32 %v2896, %v3177
      %v3242 = vmul.f32 %v2898, %v3178
      %v3243 = vmul.f32 %v2900, %v3179
      %v3244 = vmul.f32 %v2902, %v3180
      %v3245 = vmul.f32 %v2904, %v3181
      %v3246 = vmul.f32 %v2906, %v3182
      %v3247 = vmul.f32 %v2908, %v3183
      %v3248 = vmul.f32 %v2910, %v3184
      %v3249 = vmul.f32 %v2912, %v3185
      %v3250 = vmul.f32 %v2914, %v3186
      %v3251 = vmul.f32 %v2916, %v3187
      %v3252 = vmul.f32 %v2918, %v3188
      %v3253 = vmul.f32 %v2920, %v3189
      %v3254 = vmul.f32 %v2922, %v3190
      %v3255 = vmul.f32 %v2924, %v3191
      %v3256 = vmul.f32 %v2926, %v3192
      %v3257 = vmul.f32 %v2928, %v3193
      %v3258 = vmul.f32 %v2930, %v3194
      %v3259 = vmul.f32 %v2932, %v3195
      %v3260 = vmul.f32 %v2934, %v3196
      %v3261 = vmul.f32 %v2936, %v3197
      %v3262 = vmul.f32 %v2938, %v3198
      %v3263 = vmul.f32 %v2940, %v3199
      %v3264 = vmul.f32 %v2942, %v3200
      %v3265 = vmul.f32 %v2944, %v3201
      %v3266 = vmul.f32 %v2946, %v3202
      %v3267 = vpack.c.bf16 %v3204, %v3203
      %v3268 = vpack.c.bf16 %v3206, %v3205
      %v3269 = vpack.c.bf16 %v3208, %v3207
      %v3270 = vpack.c.bf16 %v3210, %v3209
      %v3271 = vpack.c.bf16 %v3212, %v3211
      %v3272 = vpack.c.bf16 %v3214, %v3213
      %v3273 = vpack.c.bf16 %v3216, %v3215
      %v3274 = vpack.c.bf16 %v3218, %v3217
      %v3275 = vpack.c.bf16 %v3220, %v3219
      %v3276 = vpack.c.bf16 %v3222, %v3221
      %v3277 = vpack.c.bf16 %v3224, %v3223
      %v3278 = vpack.c.bf16 %v3226, %v3225
      %v3279 = vpack.c.bf16 %v3228, %v3227
      %v3280 = vpack.c.bf16 %v3230, %v3229
      %v3281 = vpack.c.bf16 %v3232, %v3231
      %v3282 = vpack.c.bf16 %v3234, %v3233
      %v3283 = vpack.c.bf16 %v3236, %v3235
      %v3284 = vpack.c.bf16 %v3238, %v3237
      %v3285 = vpack.c.bf16 %v3240, %v3239
      %v3286 = vpack.c.bf16 %v3242, %v3241
      %v3287 = vpack.c.bf16 %v3244, %v3243
      %v3288 = vpack.c.bf16 %v3246, %v3245
      %v3289 = vpack.c.bf16 %v3248, %v3247
      %v3290 = vpack.c.bf16 %v3250, %v3249
      %v3291 = vpack.c.bf16 %v3252, %v3251
      %v3292 = vpack.c.bf16 %v3254, %v3253
      %v3293 = vpack.c.bf16 %v3256, %v3255
      %v3294 = vpack.c.bf16 %v3258, %v3257
      %v3295 = vpack.c.bf16 %v3260, %v3259
      %v3296 = vpack.c.bf16 %v3262, %v3261
      %v3297 = vpack.c.bf16 %v3264, %v3263
      %v3298 = vpack.c.bf16 %v3266, %v3265
      %3300 = vrot.lane.b32.xlu0 %v1025, 96
      %v3301 = vpop.permute.xlu0 %3300
      %v3304 = vsel %vm2562, %v3267, 0
      %3306 = vmatprep.subr.bf16.mxu0 0
      %3307 = vmatpush1.bf16.msra.mxu0 %v3301
      %3308 = vmatprep.subr.bf16.mxu0 0
      %3309 = vmatpush1.bf16.msra.mxu0 0
      %3310 = vmatprep.subr.bf16.mxu0 0
      %3311 = vmatpush1.bf16.msra.mxu0 0
      %3312 = vmatprep.subr.bf16.mxu0 0
      %3313 = vmatpush1.bf16.msra.mxu0 0
      %3314 = vmatprep.subr.bf16.mxu0 0
      %3315 = vmatpush1.bf16.msra.mxu0 0
      %3316 = vmatprep.subr.bf16.mxu0 0
      %3317 = vmatpush1.bf16.msra.mxu0 0
      %3318 = vmatprep.subr.bf16.mxu0 0
      %3319 = vmatpush1.bf16.msra.mxu0 0
      %3320 = vmatprep.subr.bf16.mxu0 0
      %3321 = vmatpush1.bf16.msra.mxu0 0
      %3322 = vmatprep.subr.bf16.mxu0 0
      %3323 = vmatpush1.bf16.msra.mxu0 0
      %3324 = vmatprep.subr.bf16.mxu0 0
      %3325 = vmatpush1.bf16.msra.mxu0 0
      %3326 = vmatprep.subr.bf16.mxu0 0
      %3327 = vmatpush1.bf16.msra.mxu0 0
      %3328 = vmatprep.subr.bf16.mxu0 0
      %3329 = vmatpush1.bf16.msra.mxu0 0
      %3330 = vmatprep.subr.bf16.mxu0 0
      %3331 = vmatpush1.bf16.msra.mxu0 0
      %3332 = vmatprep.subr.bf16.mxu0 0
      %3333 = vmatpush1.bf16.msra.mxu0 0
      %3334 = vmatprep.subr.bf16.mxu0 0
      %3335 = vmatpush1.bf16.msra.mxu0 0
      %3336 = vmatprep.subr.bf16.mxu0 0
      %3337 = vmatpush1.bf16.msra.mxu0 0
      %3338 = vmatprep.mubr.bf16.mxu0 0
      %3339 = vmatmul.mubr.bf16.gmra.mrb[0].mxu0 %v3304
      %v3340 = vpop.f32.mrb[0].mxu0
      %v3341 = vadd.f32 0.0, %v3340
      %v3342 = vpop.f32.mrb[0].mxu0
      %v3343 = vpop.f32.mrb[0].mxu0
      %v3344 = vadd.f32 0.0, %v3343
      %v3345 = vpop.f32.mrb[0].mxu0
      %3346 = vdwg.mxu0
      %3348 = vrot.lane.b32.xlu0 %v1026, 96
      %v3349 = vpop.permute.xlu0 %3348
      %v3352 = vsel %vm2562, %v3268, 0
      %3354 = vmatprep.subr.bf16.mxu0 0
      %3355 = vmatpush1.bf16.msra.mxu0 %v3349
      %3356 = vmatprep.subr.bf16.mxu0 0
      %3357 = vmatpush1.bf16.msra.mxu0 0
      %3358 = vmatprep.subr.bf16.mxu0 0
      %3359 = vmatpush1.bf16.msra.mxu0 0
      %3360 = vmatprep.subr.bf16.mxu0 0
      %3361 = vmatpush1.bf16.msra.mxu0 0
      %3362 = vmatprep.subr.bf16.mxu0 0
      %3363 = vmatpush1.bf16.msra.mxu0 0
      %3364 = vmatprep.subr.bf16.mxu0 0
      %3365 = vmatpush1.bf16.msra.mxu0 0
      %3366 = vmatprep.subr.bf16.mxu0 0
      %3367 = vmatpush1.bf16.msra.mxu0 0
      %3368 = vmatprep.subr.bf16.mxu0 0
      %3369 = vmatpush1.bf16.msra.mxu0 0
      %3370 = vmatprep.subr.bf16.mxu0 0
      %3371 = vmatpush1.bf16.msra.mxu0 0
      %3372 = vmatprep.subr.bf16.mxu0 0
      %3373 = vmatpush1.bf16.msra.mxu0 0
      %3374 = vmatprep.subr.bf16.mxu0 0
      %3375 = vmatpush1.bf16.msra.mxu0 0
      %3376 = vmatprep.subr.bf16.mxu0 0
      %3377 = vmatpush1.bf16.msra.mxu0 0
      %3378 = vmatprep.subr.bf16.mxu0 0
      %3379 = vmatpush1.bf16.msra.mxu0 0
      %3380 = vmatprep.subr.bf16.mxu0 0
      %3381 = vmatpush1.bf16.msra.mxu0 0
      %3382 = vmatprep.subr.bf16.mxu0 0
      %3383 = vmatpush1.bf16.msra.mxu0 0
      %3384 = vmatprep.subr.bf16.mxu0 0
      %3385 = vmatpush1.bf16.msra.mxu0 0
      %3386 = vmatprep.mubr.bf16.mxu0 0
      %3387 = vmatmul.mubr.bf16.gmra.mrb[0].mxu0 %v3352
      %v3388 = vpop.f32.mrb[0].mxu0
      %v3389 = vadd.f32 0.0, %v3388
      %v3390 = vpop.f32.mrb[0].mxu0
      %v3391 = vpop.f32.mrb[0].mxu0
      %v3392 = vadd.f32 0.0, %v3391
      %v3393 = vpop.f32.mrb[0].mxu0
      %3394 = vdwg.mxu0
      %3396 = vrot.lane.b32.xlu0 %v1027, 96
      %v3397 = vpop.permute.xlu0 %3396
      %v3400 = vsel %vm2562, %v3269, 0
      %3402 = vmatprep.subr.bf16.mxu0 0
      %3403 = vmatpush1.bf16.msra.mxu0 %v3397
      %3404 = vmatprep.subr.bf16.mxu0 0
      %3405 = vmatpush1.bf16.msra.mxu0 0
      %3406 = vmatprep.subr.bf16.mxu0 0
      %3407 = vmatpush1.bf16.msra.mxu0 0
      %3408 = vmatprep.subr.bf16.mxu0 0
      %3409 = vmatpush1.bf16.msra.mxu0 0
      %3410 = vmatprep.subr.bf16.mxu0 0
      %3411 = vmatpush1.bf16.msra.mxu0 0
      %3412 = vmatprep.subr.bf16.mxu0 0
      %3413 = vmatpush1.bf16.msra.mxu0 0
      %3414 = vmatprep.subr.bf16.mxu0 0
      %3415 = vmatpush1.bf16.msra.mxu0 0
      %3416 = vmatprep.subr.bf16.mxu0 0
      %3417 = vmatpush1.bf16.msra.mxu0 0
      %3418 = vmatprep.subr.bf16.mxu0 0
      %3419 = vmatpush1.bf16.msra.mxu0 0
      %3420 = vmatprep.subr.bf16.mxu0 0
      %3421 = vmatpush1.bf16.msra.mxu0 0
      %3422 = vmatprep.subr.bf16.mxu0 0
      %3423 = vmatpush1.bf16.msra.mxu0 0
      %3424 = vmatprep.subr.bf16.mxu0 0
      %3425 = vmatpush1.bf16.msra.mxu0 0
      %3426 = vmatprep.subr.bf16.mxu0 0
      %3427 = vmatpush1.bf16.msra.mxu0 0
      %3428 = vmatprep.subr.bf16.mxu0 0
      %3429 = vmatpush1.bf16.msra.mxu0 0
      %3430 = vmatprep.subr.bf16.mxu0 0
      %3431 = vmatpush1.bf16.msra.mxu0 0
      %3432 = vmatprep.subr.bf16.mxu0 0
      %3433 = vmatpush1.bf16.msra.mxu0 0
      %3434 = vmatprep.mubr.bf16.mxu0 0
      %3435 = vmatmul.mubr.bf16.gmra.mrb[0].mxu0 %v3400
      %v3436 = vpop.f32.mrb[0].mxu0
      %v3437 = vadd.f32 0.0, %v3436
      %v3438 = vpop.f32.mrb[0].mxu0
      %v3439 = vpop.f32.mrb[0].mxu0
      %v3440 = vadd.f32 0.0, %v3439
      %v3441 = vpop.f32.mrb[0].mxu0
      %3442 = vdwg.mxu0
      %3444 = vrot.lane.b32.xlu0 %v1028, 96
      %v3445 = vpop.permute.xlu0 %3444
      %v3448 = vsel %vm2562, %v3270, 0
      %3450 = vmatprep.subr.bf16.mxu0 0
      %3451 = vmatpush1.bf16.msra.mxu0 %v3445
      %3452 = vmatprep.subr.bf16.mxu0 0
      %3453 = vmatpush1.bf16.msra.mxu0 0
      %3454 = vmatprep.subr.bf16.mxu0 0
      %3455 = vmatpush1.bf16.msra.mxu0 0
      %3456 = vmatprep.subr.bf16.mxu0 0
      %3457 = vmatpush1.bf16.msra.mxu0 0
      %3458 = vmatprep.subr.bf16.mxu0 0
      %3459 = vmatpush1.bf16.msra.mxu0 0
      %3460 = vmatprep.subr.bf16.mxu0 0
      %3461 = vmatpush1.bf16.msra.mxu0 0
      %3462 = vmatprep.subr.bf16.mxu0 0
      %3463 = vmatpush1.bf16.msra.mxu0 0
      %3464 = vmatprep.subr.bf16.mxu0 0
      %3465 = vmatpush1.bf16.msra.mxu0 0
      %3466 = vmatprep.subr.bf16.mxu0 0
      %3467 = vmatpush1.bf16.msra.mxu0 0
      %3468 = vmatprep.subr.bf16.mxu0 0
      %3469 = vmatpush1.bf16.msra.mxu0 0
      %3470 = vmatprep.subr.bf16.mxu0 0
      %3471 = vmatpush1.bf16.msra.mxu0 0
      %3472 = vmatprep.subr.bf16.mxu0 0
      %3473 = vmatpush1.bf16.msra.mxu0 0
      %3474 = vmatprep.subr.bf16.mxu0 0
      %3475 = vmatpush1.bf16.msra.mxu0 0
      %3476 = vmatprep.subr.bf16.mxu0 0
      %3477 = vmatpush1.bf16.msra.mxu0 0
      %3478 = vmatprep.subr.bf16.mxu0 0
      %3479 = vmatpush1.bf16.msra.mxu0 0
      %3480 = vmatprep.subr.bf16.mxu0 0
      %3481 = vmatpush1.bf16.msra.mxu0 0
      %3482 = vmatprep.mubr.bf16.mxu0 0
      %3483 = vmatmul.mubr.bf16.gmra.mrb[0].mxu0 %v3448
      %v3484 = vpop.f32.mrb[0].mxu0
      %v3485 = vadd.f32 0.0, %v3484
      %v3486 = vpop.f32.mrb[0].mxu0
      %v3487 = vpop.f32.mrb[0].mxu0
      %v3488 = vadd.f32 0.0, %v3487
      %v3489 = vpop.f32.mrb[0].mxu0
      %3490 = vdwg.mxu0
      %3492 = vrot.lane.b32.xlu0 %v1029, 96
      %v3493 = vpop.permute.xlu0 %3492
      %v3496 = vsel %vm2562, %v3271, 0
      %3498 = vmatprep.subr.bf16.mxu0 0
      %3499 = vmatpush1.bf16.msra.mxu0 %v3493
      %3500 = vmatprep.subr.bf16.mxu0 0
      %3501 = vmatpush1.bf16.msra.mxu0 0
      %3502 = vmatprep.subr.bf16.mxu0 0
      %3503 = vmatpush1.bf16.msra.mxu0 0
      %3504 = vmatprep.subr.bf16.mxu0 0
      %3505 = vmatpush1.bf16.msra.mxu0 0
      %3506 = vmatprep.subr.bf16.mxu0 0
      %3507 = vmatpush1.bf16.msra.mxu0 0
      %3508 = vmatprep.subr.bf16.mxu0 0
      %3509 = vmatpush1.bf16.msra.mxu0 0
      %3510 = vmatprep.subr.bf16.mxu0 0
      %3511 = vmatpush1.bf16.msra.mxu0 0
      %3512 = vmatprep.subr.bf16.mxu0 0
      %3513 = vmatpush1.bf16.msra.mxu0 0
      %3514 = vmatprep.subr.bf16.mxu0 0
      %3515 = vmatpush1.bf16.msra.mxu0 0
      %3516 = vmatprep.subr.bf16.mxu0 0
      %3517 = vmatpush1.bf16.msra.mxu0 0
      %3518 = vmatprep.subr.bf16.mxu0 0
      %3519 = vmatpush1.bf16.msra.mxu0 0
      %3520 = vmatprep.subr.bf16.mxu0 0
      %3521 = vmatpush1.bf16.msra.mxu0 0
      %3522 = vmatprep.subr.bf16.mxu0 0
      %3523 = vmatpush1.bf16.msra.mxu0 0
      %3524 = vmatprep.subr.bf16.mxu0 0
      %3525 = vmatpush1.bf16.msra.mxu0 0
      %3526 = vmatprep.subr.bf16.mxu0 0
      %3527 = vmatpush1.bf16.msra.mxu0 0
      %3528 = vmatprep.subr.bf16.mxu0 0
      %3529 = vmatpush1.bf16.msra.mxu0 0
      %3530 = vmatprep.mubr.bf16.mxu0 0
      %3531 = vmatmul.mubr.bf16.gmra.mrb[0].mxu0 %v3496
      %v3532 = vpop.f32.mrb[0].mxu0
      %v3533 = vadd.f32 0.0, %v3532
      %v3534 = vpop.f32.mrb[0].mxu0
      %v3535 = vpop.f32.mrb[0].mxu0
      %v3536 = vadd.f32 0.0, %v3535
      %v3537 = vpop.f32.mrb[0].mxu0
      %3538 = vdwg.mxu0
      %3540 = vrot.lane.b32.xlu0 %v1030, 96
      %v3541 = vpop.permute.xlu0 %3540
      %v3544 = vsel %vm2562, %v3272, 0
      %3546 = vmatprep.subr.bf16.mxu0 0
      %3547 = vmatpush1.bf16.msra.mxu0 %v3541
      %3548 = vmatprep.subr.bf16.mxu0 0
      %3549 = vmatpush1.bf16.msra.mxu0 0
      %3550 = vmatprep.subr.bf16.mxu0 0
      %3551 = vmatpush1.bf16.msra.mxu0 0
      %3552 = vmatprep.subr.bf16.mxu0 0
      %3553 = vmatpush1.bf16.msra.mxu0 0
      %3554 = vmatprep.subr.bf16.mxu0 0
      %3555 = vmatpush1.bf16.msra.mxu0 0
      %3556 = vmatprep.subr.bf16.mxu0 0
      %3557 = vmatpush1.bf16.msra.mxu0 0
      %3558 = vmatprep.subr.bf16.mxu0 0
      %3559 = vmatpush1.bf16.msra.mxu0 0
      %3560 = vmatprep.subr.bf16.mxu0 0
      %3561 = vmatpush1.bf16.msra.mxu0 0
      %3562 = vmatprep.subr.bf16.mxu0 0
      %3563 = vmatpush1.bf16.msra.mxu0 0
      %3564 = vmatprep.subr.bf16.mxu0 0
      %3565 = vmatpush1.bf16.msra.mxu0 0
      %3566 = vmatprep.subr.bf16.mxu0 0
      %3567 = vmatpush1.bf16.msra.mxu0 0
      %3568 = vmatprep.subr.bf16.mxu0 0
      %3569 = vmatpush1.bf16.msra.mxu0 0
      %3570 = vmatprep.subr.bf16.mxu0 0
      %3571 = vmatpush1.bf16.msra.mxu0 0
      %3572 = vmatprep.subr.bf16.mxu0 0
      %3573 = vmatpush1.bf16.msra.mxu0 0
      %3574 = vmatprep.subr.bf16.mxu0 0
      %3575 = vmatpush1.bf16.msra.mxu0 0
      %3576 = vmatprep.subr.bf16.mxu0 0
      %3577 = vmatpush1.bf16.msra.mxu0 0
      %3578 = vmatprep.mubr.bf16.mxu0 0
      %3579 = vmatmul.mubr.bf16.gmra.mrb[0].mxu0 %v3544
      %v3580 = vpop.f32.mrb[0].mxu0
      %v3581 = vadd.f32 0.0, %v3580
      %v3582 = vpop.f32.mrb[0].mxu0
      %v3583 = vpop.f32.mrb[0].mxu0
      %v3584 = vadd.f32 0.0, %v3583
      %v3585 = vpop.f32.mrb[0].mxu0
      %3586 = vdwg.mxu0
      %3588 = vrot.lane.b32.xlu0 %v1031, 96
      %v3589 = vpop.permute.xlu0 %3588
      %v3592 = vsel %vm2562, %v3273, 0
      %3594 = vmatprep.subr.bf16.mxu0 0
      %3595 = vmatpush1.bf16.msra.mxu0 %v3589
      %3596 = vmatprep.subr.bf16.mxu0 0
      %3597 = vmatpush1.bf16.msra.mxu0 0
      %3598 = vmatprep.subr.bf16.mxu0 0
      %3599 = vmatpush1.bf16.msra.mxu0 0
      %3600 = vmatprep.subr.bf16.mxu0 0
      %3601 = vmatpush1.bf16.msra.mxu0 0
      %3602 = vmatprep.subr.bf16.mxu0 0
      %3603 = vmatpush1.bf16.msra.mxu0 0
      %3604 = vmatprep.subr.bf16.mxu0 0
      %3605 = vmatpush1.bf16.msra.mxu0 0
      %3606 = vmatprep.subr.bf16.mxu0 0
      %3607 = vmatpush1.bf16.msra.mxu0 0
      %3608 = vmatprep.subr.bf16.mxu0 0
      %3609 = vmatpush1.bf16.msra.mxu0 0
      %3610 = vmatprep.subr.bf16.mxu0 0
      %3611 = vmatpush1.bf16.msra.mxu0 0
      %3612 = vmatprep.subr.bf16.mxu0 0
      %3613 = vmatpush1.bf16.msra.mxu0 0
      %3614 = vmatprep.subr.bf16.mxu0 0
      %3615 = vmatpush1.bf16.msra.mxu0 0
      %3616 = vmatprep.subr.bf16.mxu0 0
      %3617 = vmatpush1.bf16.msra.mxu0 0
      %3618 = vmatprep.subr.bf16.mxu0 0
      %3619 = vmatpush1.bf16.msra.mxu0 0
      %3620 = vmatprep.subr.bf16.mxu0 0
      %3621 = vmatpush1.bf16.msra.mxu0 0
      %3622 = vmatprep.subr.bf16.mxu0 0
      %3623 = vmatpush1.bf16.msra.mxu0 0
      %3624 = vmatprep.subr.bf16.mxu0 0
      %3625 = vmatpush1.bf16.msra.mxu0 0
      %3626 = vmatprep.mubr.bf16.mxu0 0
      %3627 = vmatmul.mubr.bf16.gmra.mrb[0].mxu0 %v3592
      %v3628 = vpop.f32.mrb[0].mxu0
      %v3629 = vadd.f32 0.0, %v3628
      %v3630 = vpop.f32.mrb[0].mxu0
      %v3631 = vpop.f32.mrb[0].mxu0
      %v3632 = vadd.f32 0.0, %v3631
      %v3633 = vpop.f32.mrb[0].mxu0
      %3634 = vdwg.mxu0
      %3636 = vrot.lane.b32.xlu0 %v1032, 96
      %v3637 = vpop.permute.xlu0 %3636
      %v3640 = vsel %vm2562, %v3274, 0
      %3642 = vmatprep.subr.bf16.mxu0 0
      %3643 = vmatpush1.bf16.msra.mxu0 %v3637
      %3644 = vmatprep.subr.bf16.mxu0 0
      %3645 = vmatpush1.bf16.msra.mxu0 0
      %3646 = vmatprep.subr.bf16.mxu0 0
      %3647 = vmatpush1.bf16.msra.mxu0 0
      %3648 = vmatprep.subr.bf16.mxu0 0
      %3649 = vmatpush1.bf16.msra.mxu0 0
      %3650 = vmatprep.subr.bf16.mxu0 0
      %3651 = vmatpush1.bf16.msra.mxu0 0
      %3652 = vmatprep.subr.bf16.mxu0 0
      %3653 = vmatpush1.bf16.msra.mxu0 0
      %3654 = vmatprep.subr.bf16.mxu0 0
      %3655 = vmatpush1.bf16.msra.mxu0 0
      %3656 = vmatprep.subr.bf16.mxu0 0
      %3657 = vmatpush1.bf16.msra.mxu0 0
      %3658 = vmatprep.subr.bf16.mxu0 0
      %3659 = vmatpush1.bf16.msra.mxu0 0
      %3660 = vmatprep.subr.bf16.mxu0 0
      %3661 = vmatpush1.bf16.msra.mxu0 0
      %3662 = vmatprep.subr.bf16.mxu0 0
      %3663 = vmatpush1.bf16.msra.mxu0 0
      %3664 = vmatprep.subr.bf16.mxu0 0
      %3665 = vmatpush1.bf16.msra.mxu0 0
      %3666 = vmatprep.subr.bf16.mxu0 0
      %3667 = vmatpush1.bf16.msra.mxu0 0
      %3668 = vmatprep.subr.bf16.mxu0 0
      %3669 = vmatpush1.bf16.msra.mxu0 0
      %3670 = vmatprep.subr.bf16.mxu0 0
      %3671 = vmatpush1.bf16.msra.mxu0 0
      %3672 = vmatprep.subr.bf16.mxu0 0
      %3673 = vmatpush1.bf16.msra.mxu0 0
      %3674 = vmatprep.mubr.bf16.mxu0 0
      %3675 = vmatmul.mubr.bf16.gmra.mrb[0].mxu0 %v3640
      %v3676 = vpop.f32.mrb[0].mxu0
      %v3677 = vadd.f32 0.0, %v3676
      %v3678 = vpop.f32.mrb[0].mxu0
      %v3679 = vpop.f32.mrb[0].mxu0
      %v3680 = vadd.f32 0.0, %v3679
      %v3681 = vpop.f32.mrb[0].mxu0
      %3682 = vdwg.mxu0
      %3684 = vrot.lane.b32.xlu0 %v1033, 96
      %v3685 = vpop.permute.xlu0 %3684
      %v3688 = vsel %vm2562, %v3275, 0
      %3690 = vmatprep.subr.bf16.mxu0 0
      %3691 = vmatpush1.bf16.msra.mxu0 %v3685
      %3692 = vmatprep.subr.bf16.mxu0 0
      %3693 = vmatpush1.bf16.msra.mxu0 0
      %3694 = vmatprep.subr.bf16.mxu0 0
      %3695 = vmatpush1.bf16.msra.mxu0 0
      %3696 = vmatprep.subr.bf16.mxu0 0
      %3697 = vmatpush1.bf16.msra.mxu0 0
      %3698 = vmatprep.subr.bf16.mxu0 0
      %3699 = vmatpush1.bf16.msra.mxu0 0
      %3700 = vmatprep.subr.bf16.mxu0 0
      %3701 = vmatpush1.bf16.msra.mxu0 0
      %3702 = vmatprep.subr.bf16.mxu0 0
      %3703 = vmatpush1.bf16.msra.mxu0 0
      %3704 = vmatprep.subr.bf16.mxu0 0
      %3705 = vmatpush1.bf16.msra.mxu0 0
      %3706 = vmatprep.subr.bf16.mxu0 0
      %3707 = vmatpush1.bf16.msra.mxu0 0
      %3708 = vmatprep.subr.bf16.mxu0 0
      %3709 = vmatpush1.bf16.msra.mxu0 0
      %3710 = vmatprep.subr.bf16.mxu0 0
      %3711 = vmatpush1.bf16.msra.mxu0 0
      %3712 = vmatprep.subr.bf16.mxu0 0
      %3713 = vmatpush1.bf16.msra.mxu0 0
      %3714 = vmatprep.subr.bf16.mxu0 0
      %3715 = vmatpush1.bf16.msra.mxu0 0
      %3716 = vmatprep.subr.bf16.mxu0 0
      %3717 = vmatpush1.bf16.msra.mxu0 0
      %3718 = vmatprep.subr.bf16.mxu0 0
      %3719 = vmatpush1.bf16.msra.mxu0 0
      %3720 = vmatprep.subr.bf16.mxu0 0
      %3721 = vmatpush1.bf16.msra.mxu0 0
      %3722 = vmatprep.mubr.bf16.mxu0 0
      %3723 = vmatmul.mubr.bf16.gmra.mrb[0].mxu0 %v3688
      %v3724 = vpop.f32.mrb[0].mxu0
      %v3725 = vadd.f32 0.0, %v3724
      %v3726 = vpop.f32.mrb[0].mxu0
      %v3727 = vpop.f32.mrb[0].mxu0
      %v3728 = vadd.f32 0.0, %v3727
      %v3729 = vpop.f32.mrb[0].mxu0
      %3730 = vdwg.mxu0
      %3732 = vrot.lane.b32.xlu0 %v1034, 96
      %v3733 = vpop.permute.xlu0 %3732
      %v3736 = vsel %vm2562, %v3276, 0
      %3738 = vmatprep.subr.bf16.mxu0 0
      %3739 = vmatpush1.bf16.msra.mxu0 %v3733
      %3740 = vmatprep.subr.bf16.mxu0 0
      %3741 = vmatpush1.bf16.msra.mxu0 0
      %3742 = vmatprep.subr.bf16.mxu0 0
      %3743 = vmatpush1.bf16.msra.mxu0 0
      %3744 = vmatprep.subr.bf16.mxu0 0
      %3745 = vmatpush1.bf16.msra.mxu0 0
      %3746 = vmatprep.subr.bf16.mxu0 0
      %3747 = vmatpush1.bf16.msra.mxu0 0
      %3748 = vmatprep.subr.bf16.mxu0 0
      %3749 = vmatpush1.bf16.msra.mxu0 0
      %3750 = vmatprep.subr.bf16.mxu0 0
      %3751 = vmatpush1.bf16.msra.mxu0 0
      %3752 = vmatprep.subr.bf16.mxu0 0
      %3753 = vmatpush1.bf16.msra.mxu0 0
      %3754 = vmatprep.subr.bf16.mxu0 0
      %3755 = vmatpush1.bf16.msra.mxu0 0
      %3756 = vmatprep.subr.bf16.mxu0 0
      %3757 = vmatpush1.bf16.msra.mxu0 0
      %3758 = vmatprep.subr.bf16.mxu0 0
      %3759 = vmatpush1.bf16.msra.mxu0 0
      %3760 = vmatprep.subr.bf16.mxu0 0
      %3761 = vmatpush1.bf16.msra.mxu0 0
      %3762 = vmatprep.subr.bf16.mxu0 0
      %3763 = vmatpush1.bf16.msra.mxu0 0
      %3764 = vmatprep.subr.bf16.mxu0 0
      %3765 = vmatpush1.bf16.msra.mxu0 0
      %3766 = vmatprep.subr.bf16.mxu0 0
      %3767 = vmatpush1.bf16.msra.mxu0 0
      %3768 = vmatprep.subr.bf16.mxu0 0
      %3769 = vmatpush1.bf16.msra.mxu0 0
      %3770 = vmatprep.mubr.bf16.mxu0 0
      %3771 = vmatmul.mubr.bf16.gmra.mrb[0].mxu0 %v3736
      %v3772 = vpop.f32.mrb[0].mxu0
      %v3773 = vadd.f32 0.0, %v3772
      %v3774 = vpop.f32.mrb[0].mxu0
      %v3775 = vpop.f32.mrb[0].mxu0
      %v3776 = vadd.f32 0.0, %v3775
      %v3777 = vpop.f32.mrb[0].mxu0
      %3778 = vdwg.mxu0
      %3780 = vrot.lane.b32.xlu0 %v1035, 96
      %v3781 = vpop.permute.xlu0 %3780
      %v3784 = vsel %vm2562, %v3277, 0
      %3786 = vmatprep.subr.bf16.mxu0 0
      %3787 = vmatpush1.bf16.msra.mxu0 %v3781
      %3788 = vmatprep.subr.bf16.mxu0 0
      %3789 = vmatpush1.bf16.msra.mxu0 0
      %3790 = vmatprep.subr.bf16.mxu0 0
      %3791 = vmatpush1.bf16.msra.mxu0 0
      %3792 = vmatprep.subr.bf16.mxu0 0
      %3793 = vmatpush1.bf16.msra.mxu0 0
      %3794 = vmatprep.subr.bf16.mxu0 0
      %3795 = vmatpush1.bf16.msra.mxu0 0
      %3796 = vmatprep.subr.bf16.mxu0 0
      %3797 = vmatpush1.bf16.msra.mxu0 0
      %3798 = vmatprep.subr.bf16.mxu0 0
      %3799 = vmatpush1.bf16.msra.mxu0 0
      %3800 = vmatprep.subr.bf16.mxu0 0
      %3801 = vmatpush1.bf16.msra.mxu0 0
      %3802 = vmatprep.subr.bf16.mxu0 0
      %3803 = vmatpush1.bf16.msra.mxu0 0
      %3804 = vmatprep.subr.bf16.mxu0 0
      %3805 = vmatpush1.bf16.msra.mxu0 0
      %3806 = vmatprep.subr.bf16.mxu0 0
      %3807 = vmatpush1.bf16.msra.mxu0 0
      %3808 = vmatprep.subr.bf16.mxu0 0
      %3809 = vmatpush1.bf16.msra.mxu0 0
      %3810 = vmatprep.subr.bf16.mxu0 0
      %3811 = vmatpush1.bf16.msra.mxu0 0
      %3812 = vmatprep.subr.bf16.mxu0 0
      %3813 = vmatpush1.bf16.msra.mxu0 0
      %3814 = vmatprep.subr.bf16.mxu0 0
      %3815 = vmatpush1.bf16.msra.mxu0 0
      %3816 = vmatprep.subr.bf16.mxu0 0
      %3817 = vmatpush1.bf16.msra.mxu0 0
      %3818 = vmatprep.mubr.bf16.mxu0 0
      %3819 = vmatmul.mubr.bf16.gmra.mrb[0].mxu0 %v3784
      %v3820 = vpop.f32.mrb[0].mxu0
      %v3821 = vadd.f32 0.0, %v3820
      %v3822 = vpop.f32.mrb[0].mxu0
      %v3823 = vpop.f32.mrb[0].mxu0
      %v3824 = vadd.f32 0.0, %v3823
      %v3825 = vpop.f32.mrb[0].mxu0
      %3826 = vdwg.mxu0
      %3828 = vrot.lane.b32.xlu0 %v1036, 96
      %v3829 = vpop.permute.xlu0 %3828
      %v3832 = vsel %vm2562, %v3278, 0
      %3834 = vmatprep.subr.bf16.mxu0 0
      %3835 = vmatpush1.bf16.msra.mxu0 %v3829
      %3836 = vmatprep.subr.bf16.mxu0 0
      %3837 = vmatpush1.bf16.msra.mxu0 0
      %3838 = vmatprep.subr.bf16.mxu0 0
      %3839 = vmatpush1.bf16.msra.mxu0 0
      %3840 = vmatprep.subr.bf16.mxu0 0
      %3841 = vmatpush1.bf16.msra.mxu0 0
      %3842 = vmatprep.subr.bf16.mxu0 0
      %3843 = vmatpush1.bf16.msra.mxu0 0
      %3844 = vmatprep.subr.bf16.mxu0 0
      %3845 = vmatpush1.bf16.msra.mxu0 0
      %3846 = vmatprep.subr.bf16.mxu0 0
      %3847 = vmatpush1.bf16.msra.mxu0 0
      %3848 = vmatprep.subr.bf16.mxu0 0
      %3849 = vmatpush1.bf16.msra.mxu0 0
      %3850 = vmatprep.subr.bf16.mxu0 0
      %3851 = vmatpush1.bf16.msra.mxu0 0
      %3852 = vmatprep.subr.bf16.mxu0 0
      %3853 = vmatpush1.bf16.msra.mxu0 0
      %3854 = vmatprep.subr.bf16.mxu0 0
      %3855 = vmatpush1.bf16.msra.mxu0 0
      %3856 = vmatprep.subr.bf16.mxu0 0
      %3857 = vmatpush1.bf16.msra.mxu0 0
      %3858 = vmatprep.subr.bf16.mxu0 0
      %3859 = vmatpush1.bf16.msra.mxu0 0
      %3860 = vmatprep.subr.bf16.mxu0 0
      %3861 = vmatpush1.bf16.msra.mxu0 0
      %3862 = vmatprep.subr.bf16.mxu0 0
      %3863 = vmatpush1.bf16.msra.mxu0 0
      %3864 = vmatprep.subr.bf16.mxu0 0
      %3865 = vmatpush1.bf16.msra.mxu0 0
      %3866 = vmatprep.mubr.bf16.mxu0 0
      %3867 = vmatmul.mubr.bf16.gmra.mrb[0].mxu0 %v3832
      %v3868 = vpop.f32.mrb[0].mxu0
      %v3869 = vadd.f32 0.0, %v3868
      %v3870 = vpop.f32.mrb[0].mxu0
      %v3871 = vpop.f32.mrb[0].mxu0
      %v3872 = vadd.f32 0.0, %v3871
      %v3873 = vpop.f32.mrb[0].mxu0
      %3874 = vdwg.mxu0
      %3876 = vrot.lane.b32.xlu0 %v1037, 96
      %v3877 = vpop.permute.xlu0 %3876
      %v3880 = vsel %vm2562, %v3279, 0
      %3882 = vmatprep.subr.bf16.mxu0 0
      %3883 = vmatpush1.bf16.msra.mxu0 %v3877
      %3884 = vmatprep.subr.bf16.mxu0 0
      %3885 = vmatpush1.bf16.msra.mxu0 0
      %3886 = vmatprep.subr.bf16.mxu0 0
      %3887 = vmatpush1.bf16.msra.mxu0 0
      %3888 = vmatprep.subr.bf16.mxu0 0
      %3889 = vmatpush1.bf16.msra.mxu0 0
      %3890 = vmatprep.subr.bf16.mxu0 0
      %3891 = vmatpush1.bf16.msra.mxu0 0
      %3892 = vmatprep.subr.bf16.mxu0 0
      %3893 = vmatpush1.bf16.msra.mxu0 0
      %3894 = vmatprep.subr.bf16.mxu0 0
      %3895 = vmatpush1.bf16.msra.mxu0 0
      %3896 = vmatprep.subr.bf16.mxu0 0
      %3897 = vmatpush1.bf16.msra.mxu0 0
      %3898 = vmatprep.subr.bf16.mxu0 0
      %3899 = vmatpush1.bf16.msra.mxu0 0
      %3900 = vmatprep.subr.bf16.mxu0 0
      %3901 = vmatpush1.bf16.msra.mxu0 0
      %3902 = vmatprep.subr.bf16.mxu0 0
      %3903 = vmatpush1.bf16.msra.mxu0 0
      %3904 = vmatprep.subr.bf16.mxu0 0
      %3905 = vmatpush1.bf16.msra.mxu0 0
      %3906 = vmatprep.subr.bf16.mxu0 0
      %3907 = vmatpush1.bf16.msra.mxu0 0
      %3908 = vmatprep.subr.bf16.mxu0 0
      %3909 = vmatpush1.bf16.msra.mxu0 0
      %3910 = vmatprep.subr.bf16.mxu0 0
      %3911 = vmatpush1.bf16.msra.mxu0 0
      %3912 = vmatprep.subr.bf16.mxu0 0
      %3913 = vmatpush1.bf16.msra.mxu0 0
      %3914 = vmatprep.mubr.bf16.mxu0 0
      %3915 = vmatmul.mubr.bf16.gmra.mrb[0].mxu0 %v3880
      %v3916 = vpop.f32.mrb[0].mxu0
      %v3917 = vadd.f32 0.0, %v3916
      %v3918 = vpop.f32.mrb[0].mxu0
      %v3919 = vpop.f32.mrb[0].mxu0
      %v3920 = vadd.f32 0.0, %v3919
      %v3921 = vpop.f32.mrb[0].mxu0
      %3922 = vdwg.mxu0
      %3924 = vrot.lane.b32.xlu0 %v1038, 96
      %v3925 = vpop.permute.xlu0 %3924
      %v3928 = vsel %vm2562, %v3280, 0
      %3930 = vmatprep.subr.bf16.mxu0 0
      %3931 = vmatpush1.bf16.msra.mxu0 %v3925
      %3932 = vmatprep.subr.bf16.mxu0 0
      %3933 = vmatpush1.bf16.msra.mxu0 0
      %3934 = vmatprep.subr.bf16.mxu0 0
      %3935 = vmatpush1.bf16.msra.mxu0 0
      %3936 = vmatprep.subr.bf16.mxu0 0
      %3937 = vmatpush1.bf16.msra.mxu0 0
      %3938 = vmatprep.subr.bf16.mxu0 0
      %3939 = vmatpush1.bf16.msra.mxu0 0
      %3940 = vmatprep.subr.bf16.mxu0 0
      %3941 = vmatpush1.bf16.msra.mxu0 0
      %3942 = vmatprep.subr.bf16.mxu0 0
      %3943 = vmatpush1.bf16.msra.mxu0 0
      %3944 = vmatprep.subr.bf16.mxu0 0
      %3945 = vmatpush1.bf16.msra.mxu0 0
      %3946 = vmatprep.subr.bf16.mxu0 0
      %3947 = vmatpush1.bf16.msra.mxu0 0
      %3948 = vmatprep.subr.bf16.mxu0 0
      %3949 = vmatpush1.bf16.msra.mxu0 0
      %3950 = vmatprep.subr.bf16.mxu0 0
      %3951 = vmatpush1.bf16.msra.mxu0 0
      %3952 = vmatprep.subr.bf16.mxu0 0
      %3953 = vmatpush1.bf16.msra.mxu0 0
      %3954 = vmatprep.subr.bf16.mxu0 0
      %3955 = vmatpush1.bf16.msra.mxu0 0
      %3956 = vmatprep.subr.bf16.mxu0 0
      %3957 = vmatpush1.bf16.msra.mxu0 0
      %3958 = vmatprep.subr.bf16.mxu0 0
      %3959 = vmatpush1.bf16.msra.mxu0 0
      %3960 = vmatprep.subr.bf16.mxu0 0
      %3961 = vmatpush1.bf16.msra.mxu0 0
      %3962 = vmatprep.mubr.bf16.mxu0 0
      %3963 = vmatmul.mubr.bf16.gmra.mrb[0].mxu0 %v3928
      %v3964 = vpop.f32.mrb[0].mxu0
      %v3965 = vadd.f32 0.0, %v3964
      %v3966 = vpop.f32.mrb[0].mxu0
      %v3967 = vpop.f32.mrb[0].mxu0
      %v3968 = vadd.f32 0.0, %v3967
      %v3969 = vpop.f32.mrb[0].mxu0
      %3970 = vdwg.mxu0
      %3972 = vrot.lane.b32.xlu0 %v1039, 96
      %v3973 = vpop.permute.xlu0 %3972
      %v3976 = vsel %vm2562, %v3281, 0
      %3978 = vmatprep.subr.bf16.mxu0 0
      %3979 = vmatpush1.bf16.msra.mxu0 %v3973
      %3980 = vmatprep.subr.bf16.mxu0 0
      %3981 = vmatpush1.bf16.msra.mxu0 0
      %3982 = vmatprep.subr.bf16.mxu0 0
      %3983 = vmatpush1.bf16.msra.mxu0 0
      %3984 = vmatprep.subr.bf16.mxu0 0
      %3985 = vmatpush1.bf16.msra.mxu0 0
      %3986 = vmatprep.subr.bf16.mxu0 0
      %3987 = vmatpush1.bf16.msra.mxu0 0
      %3988 = vmatprep.subr.bf16.mxu0 0
      %3989 = vmatpush1.bf16.msra.mxu0 0
      %3990 = vmatprep.subr.bf16.mxu0 0
      %3991 = vmatpush1.bf16.msra.mxu0 0
      %3992 = vmatprep.subr.bf16.mxu0 0
      %3993 = vmatpush1.bf16.msra.mxu0 0
      %3994 = vmatprep.subr.bf16.mxu0 0
      %3995 = vmatpush1.bf16.msra.mxu0 0
      %3996 = vmatprep.subr.bf16.mxu0 0
      %3997 = vmatpush1.bf16.msra.mxu0 0
      %3998 = vmatprep.subr.bf16.mxu0 0
      %3999 = vmatpush1.bf16.msra.mxu0 0
      %4000 = vmatprep.subr.bf16.mxu0 0
      %4001 = vmatpush1.bf16.msra.mxu0 0
      %4002 = vmatprep.subr.bf16.mxu0 0
      %4003 = vmatpush1.bf16.msra.mxu0 0
      %4004 = vmatprep.subr.bf16.mxu0 0
      %4005 = vmatpush1.bf16.msra.mxu0 0
      %4006 = vmatprep.subr.bf16.mxu0 0
      %4007 = vmatpush1.bf16.msra.mxu0 0
      %4008 = vmatprep.subr.bf16.mxu0 0
      %4009 = vmatpush1.bf16.msra.mxu0 0
      %4010 = vmatprep.mubr.bf16.mxu0 0
      %4011 = vmatmul.mubr.bf16.gmra.mrb[0].mxu0 %v3976
      %v4012 = vpop.f32.mrb[0].mxu0
      %v4013 = vadd.f32 0.0, %v4012
      %v4014 = vpop.f32.mrb[0].mxu0
      %v4015 = vpop.f32.mrb[0].mxu0
      %v4016 = vadd.f32 0.0, %v4015
      %v4017 = vpop.f32.mrb[0].mxu0
      %4018 = vdwg.mxu0
      %4020 = vrot.lane.b32.xlu0 %v1040, 96
      %v4021 = vpop.permute.xlu0 %4020
      %v4024 = vsel %vm2562, %v3282, 0
      %4026 = vmatprep.subr.bf16.mxu0 0
      %4027 = vmatpush1.bf16.msra.mxu0 %v4021
      %4028 = vmatprep.subr.bf16.mxu0 0
      %4029 = vmatpush1.bf16.msra.mxu0 0
      %4030 = vmatprep.subr.bf16.mxu0 0
      %4031 = vmatpush1.bf16.msra.mxu0 0
      %4032 = vmatprep.subr.bf16.mxu0 0
      %4033 = vmatpush1.bf16.msra.mxu0 0
      %4034 = vmatprep.subr.bf16.mxu0 0
      %4035 = vmatpush1.bf16.msra.mxu0 0
      %4036 = vmatprep.subr.bf16.mxu0 0
      %4037 = vmatpush1.bf16.msra.mxu0 0
      %4038 = vmatprep.subr.bf16.mxu0 0
      %4039 = vmatpush1.bf16.msra.mxu0 0
      %4040 = vmatprep.subr.bf16.mxu0 0
      %4041 = vmatpush1.bf16.msra.mxu0 0
      %4042 = vmatprep.subr.bf16.mxu0 0
      %4043 = vmatpush1.bf16.msra.mxu0 0
      %4044 = vmatprep.subr.bf16.mxu0 0
      %4045 = vmatpush1.bf16.msra.mxu0 0
      %4046 = vmatprep.subr.bf16.mxu0 0
      %4047 = vmatpush1.bf16.msra.mxu0 0
      %4048 = vmatprep.subr.bf16.mxu0 0
      %4049 = vmatpush1.bf16.msra.mxu0 0
      %4050 = vmatprep.subr.bf16.mxu0 0
      %4051 = vmatpush1.bf16.msra.mxu0 0
      %4052 = vmatprep.subr.bf16.mxu0 0
      %4053 = vmatpush1.bf16.msra.mxu0 0
      %4054 = vmatprep.subr.bf16.mxu0 0
      %4055 = vmatpush1.bf16.msra.mxu0 0
      %4056 = vmatprep.subr.bf16.mxu0 0
      %4057 = vmatpush1.bf16.msra.mxu0 0
      %4058 = vmatprep.mubr.bf16.mxu0 0
      %4059 = vmatmul.mubr.bf16.gmra.mrb[0].mxu0 %v4024
      %v4060 = vpop.f32.mrb[0].mxu0
      %v4061 = vadd.f32 0.0, %v4060
      %v4062 = vpop.f32.mrb[0].mxu0
      %v4063 = vpop.f32.mrb[0].mxu0
      %v4064 = vadd.f32 0.0, %v4063
      %v4065 = vpop.f32.mrb[0].mxu0
      %4066 = vdwg.mxu0
      %4068 = vrot.lane.b32.xlu0 %v1041, 96
      %v4069 = vpop.permute.xlu0 %4068
      %v4072 = vsel %vm2562, %v3283, 0
      %4074 = vmatprep.subr.bf16.mxu0 0
      %4075 = vmatpush1.bf16.msra.mxu0 %v4069
      %4076 = vmatprep.subr.bf16.mxu0 0
      %4077 = vmatpush1.bf16.msra.mxu0 0
      %4078 = vmatprep.subr.bf16.mxu0 0
      %4079 = vmatpush1.bf16.msra.mxu0 0
      %4080 = vmatprep.subr.bf16.mxu0 0
      %4081 = vmatpush1.bf16.msra.mxu0 0
      %4082 = vmatprep.subr.bf16.mxu0 0
      %4083 = vmatpush1.bf16.msra.mxu0 0
      %4084 = vmatprep.subr.bf16.mxu0 0
      %4085 = vmatpush1.bf16.msra.mxu0 0
      %4086 = vmatprep.subr.bf16.mxu0 0
      %4087 = vmatpush1.bf16.msra.mxu0 0
      %4088 = vmatprep.subr.bf16.mxu0 0
      %4089 = vmatpush1.bf16.msra.mxu0 0
      %4090 = vmatprep.subr.bf16.mxu0 0
      %4091 = vmatpush1.bf16.msra.mxu0 0
      %4092 = vmatprep.subr.bf16.mxu0 0
      %4093 = vmatpush1.bf16.msra.mxu0 0
      %4094 = vmatprep.subr.bf16.mxu0 0
      %4095 = vmatpush1.bf16.msra.mxu0 0
      %4096 = vmatprep.subr.bf16.mxu0 0
      %4097 = vmatpush1.bf16.msra.mxu0 0
      %4098 = vmatprep.subr.bf16.mxu0 0
      %4099 = vmatpush1.bf16.msra.mxu0 0
      %4100 = vmatprep.subr.bf16.mxu0 0
      %4101 = vmatpush1.bf16.msra.mxu0 0
      %4102 = vmatprep.subr.bf16.mxu0 0
      %4103 = vmatpush1.bf16.msra.mxu0 0
      %4104 = vmatprep.subr.bf16.mxu0 0
      %4105 = vmatpush1.bf16.msra.mxu0 0
      %4106 = vmatprep.mubr.bf16.mxu0 0
      %4107 = vmatmul.mubr.bf16.gmra.mrb[0].mxu0 %v4072
      %v4108 = vpop.f32.mrb[0].mxu0
      %v4109 = vadd.f32 0.0, %v4108
      %v4110 = vpop.f32.mrb[0].mxu0
      %v4111 = vpop.f32.mrb[0].mxu0
      %v4112 = vadd.f32 0.0, %v4111
      %v4113 = vpop.f32.mrb[0].mxu0
      %4114 = vdwg.mxu0
      %4116 = vrot.lane.b32.xlu0 %v1042, 96
      %v4117 = vpop.permute.xlu0 %4116
      %v4120 = vsel %vm2562, %v3284, 0
      %4122 = vmatprep.subr.bf16.mxu0 0
      %4123 = vmatpush1.bf16.msra.mxu0 %v4117
      %4124 = vmatprep.subr.bf16.mxu0 0
      %4125 = vmatpush1.bf16.msra.mxu0 0
      %4126 = vmatprep.subr.bf16.mxu0 0
      %4127 = vmatpush1.bf16.msra.mxu0 0
      %4128 = vmatprep.subr.bf16.mxu0 0
      %4129 = vmatpush1.bf16.msra.mxu0 0
      %4130 = vmatprep.subr.bf16.mxu0 0
      %4131 = vmatpush1.bf16.msra.mxu0 0
      %4132 = vmatprep.subr.bf16.mxu0 0
      %4133 = vmatpush1.bf16.msra.mxu0 0
      %4134 = vmatprep.subr.bf16.mxu0 0
      %4135 = vmatpush1.bf16.msra.mxu0 0
      %4136 = vmatprep.subr.bf16.mxu0 0
      %4137 = vmatpush1.bf16.msra.mxu0 0
      %4138 = vmatprep.subr.bf16.mxu0 0
      %4139 = vmatpush1.bf16.msra.mxu0 0
      %4140 = vmatprep.subr.bf16.mxu0 0
      %4141 = vmatpush1.bf16.msra.mxu0 0
      %4142 = vmatprep.subr.bf16.mxu0 0
      %4143 = vmatpush1.bf16.msra.mxu0 0
      %4144 = vmatprep.subr.bf16.mxu0 0
      %4145 = vmatpush1.bf16.msra.mxu0 0
      %4146 = vmatprep.subr.bf16.mxu0 0
      %4147 = vmatpush1.bf16.msra.mxu0 0
      %4148 = vmatprep.subr.bf16.mxu0 0
      %4149 = vmatpush1.bf16.msra.mxu0 0
      %4150 = vmatprep.subr.bf16.mxu0 0
      %4151 = vmatpush1.bf16.msra.mxu0 0
      %4152 = vmatprep.subr.bf16.mxu0 0
      %4153 = vmatpush1.bf16.msra.mxu0 0
      %4154 = vmatprep.mubr.bf16.mxu0 0
      %4155 = vmatmul.mubr.bf16.gmra.mrb[0].mxu0 %v4120
      %v4156 = vpop.f32.mrb[0].mxu0
      %v4157 = vadd.f32 0.0, %v4156
      %v4158 = vpop.f32.mrb[0].mxu0
      %v4159 = vpop.f32.mrb[0].mxu0
      %v4160 = vadd.f32 0.0, %v4159
      %v4161 = vpop.f32.mrb[0].mxu0
      %4162 = vdwg.mxu0
      %4164 = vrot.lane.b32.xlu0 %v1043, 96
      %v4165 = vpop.permute.xlu0 %4164
      %v4168 = vsel %vm2562, %v3285, 0
      %4170 = vmatprep.subr.bf16.mxu0 0
      %4171 = vmatpush1.bf16.msra.mxu0 %v4165
      %4172 = vmatprep.subr.bf16.mxu0 0
      %4173 = vmatpush1.bf16.msra.mxu0 0
      %4174 = vmatprep.subr.bf16.mxu0 0
      %4175 = vmatpush1.bf16.msra.mxu0 0
      %4176 = vmatprep.subr.bf16.mxu0 0
      %4177 = vmatpush1.bf16.msra.mxu0 0
      %4178 = vmatprep.subr.bf16.mxu0 0
      %4179 = vmatpush1.bf16.msra.mxu0 0
      %4180 = vmatprep.subr.bf16.mxu0 0
      %4181 = vmatpush1.bf16.msra.mxu0 0
      %4182 = vmatprep.subr.bf16.mxu0 0
      %4183 = vmatpush1.bf16.msra.mxu0 0
      %4184 = vmatprep.subr.bf16.mxu0 0
      %4185 = vmatpush1.bf16.msra.mxu0 0
      %4186 = vmatprep.subr.bf16.mxu0 0
      %4187 = vmatpush1.bf16.msra.mxu0 0
      %4188 = vmatprep.subr.bf16.mxu0 0
      %4189 = vmatpush1.bf16.msra.mxu0 0
      %4190 = vmatprep.subr.bf16.mxu0 0
      %4191 = vmatpush1.bf16.msra.mxu0 0
      %4192 = vmatprep.subr.bf16.mxu0 0
      %4193 = vmatpush1.bf16.msra.mxu0 0
      %4194 = vmatprep.subr.bf16.mxu0 0
      %4195 = vmatpush1.bf16.msra.mxu0 0
      %4196 = vmatprep.subr.bf16.mxu0 0
      %4197 = vmatpush1.bf16.msra.mxu0 0
      %4198 = vmatprep.subr.bf16.mxu0 0
      %4199 = vmatpush1.bf16.msra.mxu0 0
      %4200 = vmatprep.subr.bf16.mxu0 0
      %4201 = vmatpush1.bf16.msra.mxu0 0
      %4202 = vmatprep.mubr.bf16.mxu0 0
      %4203 = vmatmul.mubr.bf16.gmra.mrb[0].mxu0 %v4168
      %v4204 = vpop.f32.mrb[0].mxu0
      %v4205 = vadd.f32 0.0, %v4204
      %v4206 = vpop.f32.mrb[0].mxu0
      %v4207 = vpop.f32.mrb[0].mxu0
      %v4208 = vadd.f32 0.0, %v4207
      %v4209 = vpop.f32.mrb[0].mxu0
      %4210 = vdwg.mxu0
      %4212 = vrot.lane.b32.xlu0 %v1044, 96
      %v4213 = vpop.permute.xlu0 %4212
      %v4216 = vsel %vm2562, %v3286, 0
      %4218 = vmatprep.subr.bf16.mxu0 0
      %4219 = vmatpush1.bf16.msra.mxu0 %v4213
      %4220 = vmatprep.subr.bf16.mxu0 0
      %4221 = vmatpush1.bf16.msra.mxu0 0
      %4222 = vmatprep.subr.bf16.mxu0 0
      %4223 = vmatpush1.bf16.msra.mxu0 0
      %4224 = vmatprep.subr.bf16.mxu0 0
      %4225 = vmatpush1.bf16.msra.mxu0 0
      %4226 = vmatprep.subr.bf16.mxu0 0
      %4227 = vmatpush1.bf16.msra.mxu0 0
      %4228 = vmatprep.subr.bf16.mxu0 0
      %4229 = vmatpush1.bf16.msra.mxu0 0
      %4230 = vmatprep.subr.bf16.mxu0 0
      %4231 = vmatpush1.bf16.msra.mxu0 0
      %4232 = vmatprep.subr.bf16.mxu0 0
      %4233 = vmatpush1.bf16.msra.mxu0 0
      %4234 = vmatprep.subr.bf16.mxu0 0
      %4235 = vmatpush1.bf16.msra.mxu0 0
      %4236 = vmatprep.subr.bf16.mxu0 0
      %4237 = vmatpush1.bf16.msra.mxu0 0
      %4238 = vmatprep.subr.bf16.mxu0 0
      %4239 = vmatpush1.bf16.msra.mxu0 0
      %4240 = vmatprep.subr.bf16.mxu0 0
      %4241 = vmatpush1.bf16.msra.mxu0 0
      %4242 = vmatprep.subr.bf16.mxu0 0
      %4243 = vmatpush1.bf16.msra.mxu0 0
      %4244 = vmatprep.subr.bf16.mxu0 0
      %4245 = vmatpush1.bf16.msra.mxu0 0
      %4246 = vmatprep.subr.bf16.mxu0 0
      %4247 = vmatpush1.bf16.msra.mxu0 0
      %4248 = vmatprep.subr.bf16.mxu0 0
      %4249 = vmatpush1.bf16.msra.mxu0 0
      %4250 = vmatprep.mubr.bf16.mxu0 0
      %4251 = vmatmul.mubr.bf16.gmra.mrb[0].mxu0 %v4216
      %v4252 = vpop.f32.mrb[0].mxu0
      %v4253 = vadd.f32 0.0, %v4252
      %v4254 = vpop.f32.mrb[0].mxu0
      %v4255 = vpop.f32.mrb[0].mxu0
      %v4256 = vadd.f32 0.0, %v4255
      %v4257 = vpop.f32.mrb[0].mxu0
      %4258 = vdwg.mxu0
      %4260 = vrot.lane.b32.xlu0 %v1045, 96
      %v4261 = vpop.permute.xlu0 %4260
      %v4264 = vsel %vm2562, %v3287, 0
      %4266 = vmatprep.subr.bf16.mxu0 0
      %4267 = vmatpush1.bf16.msra.mxu0 %v4261
      %4268 = vmatprep.subr.bf16.mxu0 0
      %4269 = vmatpush1.bf16.msra.mxu0 0
      %4270 = vmatprep.subr.bf16.mxu0 0
      %4271 = vmatpush1.bf16.msra.mxu0 0
      %4272 = vmatprep.subr.bf16.mxu0 0
      %4273 = vmatpush1.bf16.msra.mxu0 0
      %4274 = vmatprep.subr.bf16.mxu0 0
      %4275 = vmatpush1.bf16.msra.mxu0 0
      %4276 = vmatprep.subr.bf16.mxu0 0
      %4277 = vmatpush1.bf16.msra.mxu0 0
      %4278 = vmatprep.subr.bf16.mxu0 0
      %4279 = vmatpush1.bf16.msra.mxu0 0
      %4280 = vmatprep.subr.bf16.mxu0 0
      %4281 = vmatpush1.bf16.msra.mxu0 0
      %4282 = vmatprep.subr.bf16.mxu0 0
      %4283 = vmatpush1.bf16.msra.mxu0 0
      %4284 = vmatprep.subr.bf16.mxu0 0
      %4285 = vmatpush1.bf16.msra.mxu0 0
      %4286 = vmatprep.subr.bf16.mxu0 0
      %4287 = vmatpush1.bf16.msra.mxu0 0
      %4288 = vmatprep.subr.bf16.mxu0 0
      %4289 = vmatpush1.bf16.msra.mxu0 0
      %4290 = vmatprep.subr.bf16.mxu0 0
      %4291 = vmatpush1.bf16.msra.mxu0 0
      %4292 = vmatprep.subr.bf16.mxu0 0
      %4293 = vmatpush1.bf16.msra.mxu0 0
      %4294 = vmatprep.subr.bf16.mxu0 0
      %4295 = vmatpush1.bf16.msra.mxu0 0
      %4296 = vmatprep.subr.bf16.mxu0 0
      %4297 = vmatpush1.bf16.msra.mxu0 0
      %4298 = vmatprep.mubr.bf16.mxu0 0
      %4299 = vmatmul.mubr.bf16.gmra.mrb[0].mxu0 %v4264
      %v4300 = vpop.f32.mrb[0].mxu0
      %v4301 = vadd.f32 0.0, %v4300
      %v4302 = vpop.f32.mrb[0].mxu0
      %v4303 = vpop.f32.mrb[0].mxu0
      %v4304 = vadd.f32 0.0, %v4303
      %v4305 = vpop.f32.mrb[0].mxu0
      %4306 = vdwg.mxu0
      %4308 = vrot.lane.b32.xlu0 %v1046, 96
      %v4309 = vpop.permute.xlu0 %4308
      %v4312 = vsel %vm2562, %v3288, 0
      %4314 = vmatprep.subr.bf16.mxu0 0
      %4315 = vmatpush1.bf16.msra.mxu0 %v4309
      %4316 = vmatprep.subr.bf16.mxu0 0
      %4317 = vmatpush1.bf16.msra.mxu0 0
      %4318 = vmatprep.subr.bf16.mxu0 0
      %4319 = vmatpush1.bf16.msra.mxu0 0
      %4320 = vmatprep.subr.bf16.mxu0 0
      %4321 = vmatpush1.bf16.msra.mxu0 0
      %4322 = vmatprep.subr.bf16.mxu0 0
      %4323 = vmatpush1.bf16.msra.mxu0 0
      %4324 = vmatprep.subr.bf16.mxu0 0
      %4325 = vmatpush1.bf16.msra.mxu0 0
      %4326 = vmatprep.subr.bf16.mxu0 0
      %4327 = vmatpush1.bf16.msra.mxu0 0
      %4328 = vmatprep.subr.bf16.mxu0 0
      %4329 = vmatpush1.bf16.msra.mxu0 0
      %4330 = vmatprep.subr.bf16.mxu0 0
      %4331 = vmatpush1.bf16.msra.mxu0 0
      %4332 = vmatprep.subr.bf16.mxu0 0
      %4333 = vmatpush1.bf16.msra.mxu0 0
      %4334 = vmatprep.subr.bf16.mxu0 0
      %4335 = vmatpush1.bf16.msra.mxu0 0
      %4336 = vmatprep.subr.bf16.mxu0 0
      %4337 = vmatpush1.bf16.msra.mxu0 0
      %4338 = vmatprep.subr.bf16.mxu0 0
      %4339 = vmatpush1.bf16.msra.mxu0 0
      %4340 = vmatprep.subr.bf16.mxu0 0
      %4341 = vmatpush1.bf16.msra.mxu0 0
      %4342 = vmatprep.subr.bf16.mxu0 0
      %4343 = vmatpush1.bf16.msra.mxu0 0
      %4344 = vmatprep.subr.bf16.mxu0 0
      %4345 = vmatpush1.bf16.msra.mxu0 0
      %4346 = vmatprep.mubr.bf16.mxu0 0
      %4347 = vmatmul.mubr.bf16.gmra.mrb[0].mxu0 %v4312
      %v4348 = vpop.f32.mrb[0].mxu0
      %v4349 = vadd.f32 0.0, %v4348
      %v4350 = vpop.f32.mrb[0].mxu0
      %v4351 = vpop.f32.mrb[0].mxu0
      %v4352 = vadd.f32 0.0, %v4351
      %v4353 = vpop.f32.mrb[0].mxu0
      %4354 = vdwg.mxu0
      %4356 = vrot.lane.b32.xlu0 %v1047, 96
      %v4357 = vpop.permute.xlu0 %4356
      %v4360 = vsel %vm2562, %v3289, 0
      %4362 = vmatprep.subr.bf16.mxu0 0
      %4363 = vmatpush1.bf16.msra.mxu0 %v4357
      %4364 = vmatprep.subr.bf16.mxu0 0
      %4365 = vmatpush1.bf16.msra.mxu0 0
      %4366 = vmatprep.subr.bf16.mxu0 0
      %4367 = vmatpush1.bf16.msra.mxu0 0
      %4368 = vmatprep.subr.bf16.mxu0 0
      %4369 = vmatpush1.bf16.msra.mxu0 0
      %4370 = vmatprep.subr.bf16.mxu0 0
      %4371 = vmatpush1.bf16.msra.mxu0 0
      %4372 = vmatprep.subr.bf16.mxu0 0
      %4373 = vmatpush1.bf16.msra.mxu0 0
      %4374 = vmatprep.subr.bf16.mxu0 0
      %4375 = vmatpush1.bf16.msra.mxu0 0
      %4376 = vmatprep.subr.bf16.mxu0 0
      %4377 = vmatpush1.bf16.msra.mxu0 0
      %4378 = vmatprep.subr.bf16.mxu0 0
      %4379 = vmatpush1.bf16.msra.mxu0 0
      %4380 = vmatprep.subr.bf16.mxu0 0
      %4381 = vmatpush1.bf16.msra.mxu0 0
      %4382 = vmatprep.subr.bf16.mxu0 0
      %4383 = vmatpush1.bf16.msra.mxu0 0
      %4384 = vmatprep.subr.bf16.mxu0 0
      %4385 = vmatpush1.bf16.msra.mxu0 0
      %4386 = vmatprep.subr.bf16.mxu0 0
      %4387 = vmatpush1.bf16.msra.mxu0 0
      %4388 = vmatprep.subr.bf16.mxu0 0
      %4389 = vmatpush1.bf16.msra.mxu0 0
      %4390 = vmatprep.subr.bf16.mxu0 0
      %4391 = vmatpush1.bf16.msra.mxu0 0
      %4392 = vmatprep.subr.bf16.mxu0 0
      %4393 = vmatpush1.bf16.msra.mxu0 0
      %4394 = vmatprep.mubr.bf16.mxu0 0
      %4395 = vmatmul.mubr.bf16.gmra.mrb[0].mxu0 %v4360
      %v4396 = vpop.f32.mrb[0].mxu0
      %v4397 = vadd.f32 0.0, %v4396
      %v4398 = vpop.f32.mrb[0].mxu0
      %v4399 = vpop.f32.mrb[0].mxu0
      %v4400 = vadd.f32 0.0, %v4399
      %v4401 = vpop.f32.mrb[0].mxu0
      %4402 = vdwg.mxu0
      %4404 = vrot.lane.b32.xlu0 %v1048, 96
      %v4405 = vpop.permute.xlu0 %4404
      %v4408 = vsel %vm2562, %v3290, 0
      %4410 = vmatprep.subr.bf16.mxu0 0
      %4411 = vmatpush1.bf16.msra.mxu0 %v4405
      %4412 = vmatprep.subr.bf16.mxu0 0
      %4413 = vmatpush1.bf16.msra.mxu0 0
      %4414 = vmatprep.subr.bf16.mxu0 0
      %4415 = vmatpush1.bf16.msra.mxu0 0
      %4416 = vmatprep.subr.bf16.mxu0 0
      %4417 = vmatpush1.bf16.msra.mxu0 0
      %4418 = vmatprep.subr.bf16.mxu0 0
      %4419 = vmatpush1.bf16.msra.mxu0 0
      %4420 = vmatprep.subr.bf16.mxu0 0
      %4421 = vmatpush1.bf16.msra.mxu0 0
      %4422 = vmatprep.subr.bf16.mxu0 0
      %4423 = vmatpush1.bf16.msra.mxu0 0
      %4424 = vmatprep.subr.bf16.mxu0 0
      %4425 = vmatpush1.bf16.msra.mxu0 0
      %4426 = vmatprep.subr.bf16.mxu0 0
      %4427 = vmatpush1.bf16.msra.mxu0 0
      %4428 = vmatprep.subr.bf16.mxu0 0
      %4429 = vmatpush1.bf16.msra.mxu0 0
      %4430 = vmatprep.subr.bf16.mxu0 0
      %4431 = vmatpush1.bf16.msra.mxu0 0
      %4432 = vmatprep.subr.bf16.mxu0 0
      %4433 = vmatpush1.bf16.msra.mxu0 0
      %4434 = vmatprep.subr.bf16.mxu0 0
      %4435 = vmatpush1.bf16.msra.mxu0 0
      %4436 = vmatprep.subr.bf16.mxu0 0
      %4437 = vmatpush1.bf16.msra.mxu0 0
      %4438 = vmatprep.subr.bf16.mxu0 0
      %4439 = vmatpush1.bf16.msra.mxu0 0
      %4440 = vmatprep.subr.bf16.mxu0 0
      %4441 = vmatpush1.bf16.msra.mxu0 0
      %4442 = vmatprep.mubr.bf16.mxu0 0
      %4443 = vmatmul.mubr.bf16.gmra.mrb[0].mxu0 %v4408
      %v4444 = vpop.f32.mrb[0].mxu0
      %v4445 = vadd.f32 0.0, %v4444
      %v4446 = vpop.f32.mrb[0].mxu0
      %v4447 = vpop.f32.mrb[0].mxu0
      %v4448 = vadd.f32 0.0, %v4447
      %v4449 = vpop.f32.mrb[0].mxu0
      %4450 = vdwg.mxu0
      %4452 = vrot.lane.b32.xlu0 %v1049, 96
      %v4453 = vpop.permute.xlu0 %4452
      %v4456 = vsel %vm2562, %v3291, 0
      %4458 = vmatprep.subr.bf16.mxu0 0
      %4459 = vmatpush1.bf16.msra.mxu0 %v4453
      %4460 = vmatprep.subr.bf16.mxu0 0
      %4461 = vmatpush1.bf16.msra.mxu0 0
      %4462 = vmatprep.subr.bf16.mxu0 0
      %4463 = vmatpush1.bf16.msra.mxu0 0
      %4464 = vmatprep.subr.bf16.mxu0 0
      %4465 = vmatpush1.bf16.msra.mxu0 0
      %4466 = vmatprep.subr.bf16.mxu0 0
      %4467 = vmatpush1.bf16.msra.mxu0 0
      %4468 = vmatprep.subr.bf16.mxu0 0
      %4469 = vmatpush1.bf16.msra.mxu0 0
      %4470 = vmatprep.subr.bf16.mxu0 0
      %4471 = vmatpush1.bf16.msra.mxu0 0
      %4472 = vmatprep.subr.bf16.mxu0 0
      %4473 = vmatpush1.bf16.msra.mxu0 0
      %4474 = vmatprep.subr.bf16.mxu0 0
      %4475 = vmatpush1.bf16.msra.mxu0 0
      %4476 = vmatprep.subr.bf16.mxu0 0
      %4477 = vmatpush1.bf16.msra.mxu0 0
      %4478 = vmatprep.subr.bf16.mxu0 0
      %4479 = vmatpush1.bf16.msra.mxu0 0
      %4480 = vmatprep.subr.bf16.mxu0 0
      %4481 = vmatpush1.bf16.msra.mxu0 0
      %4482 = vmatprep.subr.bf16.mxu0 0
      %4483 = vmatpush1.bf16.msra.mxu0 0
      %4484 = vmatprep.subr.bf16.mxu0 0
      %4485 = vmatpush1.bf16.msra.mxu0 0
      %4486 = vmatprep.subr.bf16.mxu0 0
      %4487 = vmatpush1.bf16.msra.mxu0 0
      %4488 = vmatprep.subr.bf16.mxu0 0
      %4489 = vmatpush1.bf16.msra.mxu0 0
      %4490 = vmatprep.mubr.bf16.mxu0 0
      %4491 = vmatmul.mubr.bf16.gmra.mrb[0].mxu0 %v4456
      %v4492 = vpop.f32.mrb[0].mxu0
      %v4493 = vadd.f32 0.0, %v4492
      %v4494 = vpop.f32.mrb[0].mxu0
      %v4495 = vpop.f32.mrb[0].mxu0
      %v4496 = vadd.f32 0.0, %v4495
      %v4497 = vpop.f32.mrb[0].mxu0
      %4498 = vdwg.mxu0
      %4500 = vrot.lane.b32.xlu0 %v1050, 96
      %v4501 = vpop.permute.xlu0 %4500
      %v4504 = vsel %vm2562, %v3292, 0
      %4506 = vmatprep.subr.bf16.mxu0 0
      %4507 = vmatpush1.bf16.msra.mxu0 %v4501
      %4508 = vmatprep.subr.bf16.mxu0 0
      %4509 = vmatpush1.bf16.msra.mxu0 0
      %4510 = vmatprep.subr.bf16.mxu0 0
      %4511 = vmatpush1.bf16.msra.mxu0 0
      %4512 = vmatprep.subr.bf16.mxu0 0
      %4513 = vmatpush1.bf16.msra.mxu0 0
      %4514 = vmatprep.subr.bf16.mxu0 0
      %4515 = vmatpush1.bf16.msra.mxu0 0
      %4516 = vmatprep.subr.bf16.mxu0 0
      %4517 = vmatpush1.bf16.msra.mxu0 0
      %4518 = vmatprep.subr.bf16.mxu0 0
      %4519 = vmatpush1.bf16.msra.mxu0 0
      %4520 = vmatprep.subr.bf16.mxu0 0
      %4521 = vmatpush1.bf16.msra.mxu0 0
      %4522 = vmatprep.subr.bf16.mxu0 0
      %4523 = vmatpush1.bf16.msra.mxu0 0
      %4524 = vmatprep.subr.bf16.mxu0 0
      %4525 = vmatpush1.bf16.msra.mxu0 0
      %4526 = vmatprep.subr.bf16.mxu0 0
      %4527 = vmatpush1.bf16.msra.mxu0 0
      %4528 = vmatprep.subr.bf16.mxu0 0
      %4529 = vmatpush1.bf16.msra.mxu0 0
      %4530 = vmatprep.subr.bf16.mxu0 0
      %4531 = vmatpush1.bf16.msra.mxu0 0
      %4532 = vmatprep.subr.bf16.mxu0 0
      %4533 = vmatpush1.bf16.msra.mxu0 0
      %4534 = vmatprep.subr.bf16.mxu0 0
      %4535 = vmatpush1.bf16.msra.mxu0 0
      %4536 = vmatprep.subr.bf16.mxu0 0
      %4537 = vmatpush1.bf16.msra.mxu0 0
      %4538 = vmatprep.mubr.bf16.mxu0 0
      %4539 = vmatmul.mubr.bf16.gmra.mrb[0].mxu0 %v4504
      %v4540 = vpop.f32.mrb[0].mxu0
      %v4541 = vadd.f32 0.0, %v4540
      %v4542 = vpop.f32.mrb[0].mxu0
      %v4543 = vpop.f32.mrb[0].mxu0
      %v4544 = vadd.f32 0.0, %v4543
      %v4545 = vpop.f32.mrb[0].mxu0
      %4546 = vdwg.mxu0
      %4548 = vrot.lane.b32.xlu0 %v1051, 96
      %v4549 = vpop.permute.xlu0 %4548
      %v4552 = vsel %vm2562, %v3293, 0
      %4554 = vmatprep.subr.bf16.mxu0 0
      %4555 = vmatpush1.bf16.msra.mxu0 %v4549
      %4556 = vmatprep.subr.bf16.mxu0 0
      %4557 = vmatpush1.bf16.msra.mxu0 0
      %4558 = vmatprep.subr.bf16.mxu0 0
      %4559 = vmatpush1.bf16.msra.mxu0 0
      %4560 = vmatprep.subr.bf16.mxu0 0
      %4561 = vmatpush1.bf16.msra.mxu0 0
      %4562 = vmatprep.subr.bf16.mxu0 0
      %4563 = vmatpush1.bf16.msra.mxu0 0
      %4564 = vmatprep.subr.bf16.mxu0 0
      %4565 = vmatpush1.bf16.msra.mxu0 0
      %4566 = vmatprep.subr.bf16.mxu0 0
      %4567 = vmatpush1.bf16.msra.mxu0 0
      %4568 = vmatprep.subr.bf16.mxu0 0
      %4569 = vmatpush1.bf16.msra.mxu0 0
      %4570 = vmatprep.subr.bf16.mxu0 0
      %4571 = vmatpush1.bf16.msra.mxu0 0
      %4572 = vmatprep.subr.bf16.mxu0 0
      %4573 = vmatpush1.bf16.msra.mxu0 0
      %4574 = vmatprep.subr.bf16.mxu0 0
      %4575 = vmatpush1.bf16.msra.mxu0 0
      %4576 = vmatprep.subr.bf16.mxu0 0
      %4577 = vmatpush1.bf16.msra.mxu0 0
      %4578 = vmatprep.subr.bf16.mxu0 0
      %4579 = vmatpush1.bf16.msra.mxu0 0
      %4580 = vmatprep.subr.bf16.mxu0 0
      %4581 = vmatpush1.bf16.msra.mxu0 0
      %4582 = vmatprep.subr.bf16.mxu0 0
      %4583 = vmatpush1.bf16.msra.mxu0 0
      %4584 = vmatprep.subr.bf16.mxu0 0
      %4585 = vmatpush1.bf16.msra.mxu0 0
      %4586 = vmatprep.mubr.bf16.mxu0 0
      %4587 = vmatmul.mubr.bf16.gmra.mrb[0].mxu0 %v4552
      %v4588 = vpop.f32.mrb[0].mxu0
      %v4589 = vadd.f32 0.0, %v4588
      %v4590 = vpop.f32.mrb[0].mxu0
      %v4591 = vpop.f32.mrb[0].mxu0
      %v4592 = vadd.f32 0.0, %v4591
      %v4593 = vpop.f32.mrb[0].mxu0
      %4594 = vdwg.mxu0
      %4596 = vrot.lane.b32.xlu0 %v1052, 96
      %v4597 = vpop.permute.xlu0 %4596
      %v4600 = vsel %vm2562, %v3294, 0
      %4602 = vmatprep.subr.bf16.mxu0 0
      %4603 = vmatpush1.bf16.msra.mxu0 %v4597
      %4604 = vmatprep.subr.bf16.mxu0 0
      %4605 = vmatpush1.bf16.msra.mxu0 0
      %4606 = vmatprep.subr.bf16.mxu0 0
      %4607 = vmatpush1.bf16.msra.mxu0 0
      %4608 = vmatprep.subr.bf16.mxu0 0
      %4609 = vmatpush1.bf16.msra.mxu0 0
      %4610 = vmatprep.subr.bf16.mxu0 0
      %4611 = vmatpush1.bf16.msra.mxu0 0
      %4612 = vmatprep.subr.bf16.mxu0 0
      %4613 = vmatpush1.bf16.msra.mxu0 0
      %4614 = vmatprep.subr.bf16.mxu0 0
      %4615 = vmatpush1.bf16.msra.mxu0 0
      %4616 = vmatprep.subr.bf16.mxu0 0
      %4617 = vmatpush1.bf16.msra.mxu0 0
      %4618 = vmatprep.subr.bf16.mxu0 0
      %4619 = vmatpush1.bf16.msra.mxu0 0
      %4620 = vmatprep.subr.bf16.mxu0 0
      %4621 = vmatpush1.bf16.msra.mxu0 0
      %4622 = vmatprep.subr.bf16.mxu0 0
      %4623 = vmatpush1.bf16.msra.mxu0 0
      %4624 = vmatprep.subr.bf16.mxu0 0
      %4625 = vmatpush1.bf16.msra.mxu0 0
      %4626 = vmatprep.subr.bf16.mxu0 0
      %4627 = vmatpush1.bf16.msra.mxu0 0
      %4628 = vmatprep.subr.bf16.mxu0 0
      %4629 = vmatpush1.bf16.msra.mxu0 0
      %4630 = vmatprep.subr.bf16.mxu0 0
      %4631 = vmatpush1.bf16.msra.mxu0 0
      %4632 = vmatprep.subr.bf16.mxu0 0
      %4633 = vmatpush1.bf16.msra.mxu0 0
      %4634 = vmatprep.mubr.bf16.mxu0 0
      %4635 = vmatmul.mubr.bf16.gmra.mrb[0].mxu0 %v4600
      %v4636 = vpop.f32.mrb[0].mxu0
      %v4637 = vadd.f32 0.0, %v4636
      %v4638 = vpop.f32.mrb[0].mxu0
      %v4639 = vpop.f32.mrb[0].mxu0
      %v4640 = vadd.f32 0.0, %v4639
      %v4641 = vpop.f32.mrb[0].mxu0
      %4642 = vdwg.mxu0
      %4644 = vrot.lane.b32.xlu0 %v1053, 96
      %v4645 = vpop.permute.xlu0 %4644
      %v4648 = vsel %vm2562, %v3295, 0
      %4650 = vmatprep.subr.bf16.mxu0 0
      %4651 = vmatpush1.bf16.msra.mxu0 %v4645
      %4652 = vmatprep.subr.bf16.mxu0 0
      %4653 = vmatpush1.bf16.msra.mxu0 0
      %4654 = vmatprep.subr.bf16.mxu0 0
      %4655 = vmatpush1.bf16.msra.mxu0 0
      %4656 = vmatprep.subr.bf16.mxu0 0
      %4657 = vmatpush1.bf16.msra.mxu0 0
      %4658 = vmatprep.subr.bf16.mxu0 0
      %4659 = vmatpush1.bf16.msra.mxu0 0
      %4660 = vmatprep.subr.bf16.mxu0 0
      %4661 = vmatpush1.bf16.msra.mxu0 0
      %4662 = vmatprep.subr.bf16.mxu0 0
      %4663 = vmatpush1.bf16.msra.mxu0 0
      %4664 = vmatprep.subr.bf16.mxu0 0
      %4665 = vmatpush1.bf16.msra.mxu0 0
      %4666 = vmatprep.subr.bf16.mxu0 0
      %4667 = vmatpush1.bf16.msra.mxu0 0
      %4668 = vmatprep.subr.bf16.mxu0 0
      %4669 = vmatpush1.bf16.msra.mxu0 0
      %4670 = vmatprep.subr.bf16.mxu0 0
      %4671 = vmatpush1.bf16.msra.mxu0 0
      %4672 = vmatprep.subr.bf16.mxu0 0
      %4673 = vmatpush1.bf16.msra.mxu0 0
      %4674 = vmatprep.subr.bf16.mxu0 0
      %4675 = vmatpush1.bf16.msra.mxu0 0
      %4676 = vmatprep.subr.bf16.mxu0 0
      %4677 = vmatpush1.bf16.msra.mxu0 0
      %4678 = vmatprep.subr.bf16.mxu0 0
      %4679 = vmatpush1.bf16.msra.mxu0 0
      %4680 = vmatprep.subr.bf16.mxu0 0
      %4681 = vmatpush1.bf16.msra.mxu0 0
      %4682 = vmatprep.mubr.bf16.mxu0 0
      %4683 = vmatmul.mubr.bf16.gmra.mrb[0].mxu0 %v4648
      %v4684 = vpop.f32.mrb[0].mxu0
      %v4685 = vadd.f32 0.0, %v4684
      %v4686 = vpop.f32.mrb[0].mxu0
      %v4687 = vpop.f32.mrb[0].mxu0
      %v4688 = vadd.f32 0.0, %v4687
      %v4689 = vpop.f32.mrb[0].mxu0
      %4690 = vdwg.mxu0
      %4692 = vrot.lane.b32.xlu0 %v1054, 96
      %v4693 = vpop.permute.xlu0 %4692
      %v4696 = vsel %vm2562, %v3296, 0
      %4698 = vmatprep.subr.bf16.mxu0 0
      %4699 = vmatpush1.bf16.msra.mxu0 %v4693
      %4700 = vmatprep.subr.bf16.mxu0 0
      %4701 = vmatpush1.bf16.msra.mxu0 0
      %4702 = vmatprep.subr.bf16.mxu0 0
      %4703 = vmatpush1.bf16.msra.mxu0 0
      %4704 = vmatprep.subr.bf16.mxu0 0
      %4705 = vmatpush1.bf16.msra.mxu0 0
      %4706 = vmatprep.subr.bf16.mxu0 0
      %4707 = vmatpush1.bf16.msra.mxu0 0
      %4708 = vmatprep.subr.bf16.mxu0 0
      %4709 = vmatpush1.bf16.msra.mxu0 0
      %4710 = vmatprep.subr.bf16.mxu0 0
      %4711 = vmatpush1.bf16.msra.mxu0 0
      %4712 = vmatprep.subr.bf16.mxu0 0
      %4713 = vmatpush1.bf16.msra.mxu0 0
      %4714 = vmatprep.subr.bf16.mxu0 0
      %4715 = vmatpush1.bf16.msra.mxu0 0
      %4716 = vmatprep.subr.bf16.mxu0 0
      %4717 = vmatpush1.bf16.msra.mxu0 0
      %4718 = vmatprep.subr.bf16.mxu0 0
      %4719 = vmatpush1.bf16.msra.mxu0 0
      %4720 = vmatprep.subr.bf16.mxu0 0
      %4721 = vmatpush1.bf16.msra.mxu0 0
      %4722 = vmatprep.subr.bf16.mxu0 0
      %4723 = vmatpush1.bf16.msra.mxu0 0
      %4724 = vmatprep.subr.bf16.mxu0 0
      %4725 = vmatpush1.bf16.msra.mxu0 0
      %4726 = vmatprep.subr.bf16.mxu0 0
      %4727 = vmatpush1.bf16.msra.mxu0 0
      %4728 = vmatprep.subr.bf16.mxu0 0
      %4729 = vmatpush1.bf16.msra.mxu0 0
      %4730 = vmatprep.mubr.bf16.mxu0 0
      %4731 = vmatmul.mubr.bf16.gmra.mrb[0].mxu0 %v4696
      %v4732 = vpop.f32.mrb[0].mxu0
      %v4733 = vadd.f32 0.0, %v4732
      %v4734 = vpop.f32.mrb[0].mxu0
      %v4735 = vpop.f32.mrb[0].mxu0
      %v4736 = vadd.f32 0.0, %v4735
      %v4737 = vpop.f32.mrb[0].mxu0
      %4738 = vdwg.mxu0
      %4740 = vrot.lane.b32.xlu0 %v1055, 96
      %v4741 = vpop.permute.xlu0 %4740
      %v4744 = vsel %vm2562, %v3297, 0
      %4746 = vmatprep.subr.bf16.mxu0 0
      %4747 = vmatpush1.bf16.msra.mxu0 %v4741
      %4748 = vmatprep.subr.bf16.mxu0 0
      %4749 = vmatpush1.bf16.msra.mxu0 0
      %4750 = vmatprep.subr.bf16.mxu0 0
      %4751 = vmatpush1.bf16.msra.mxu0 0
      %4752 = vmatprep.subr.bf16.mxu0 0
      %4753 = vmatpush1.bf16.msra.mxu0 0
      %4754 = vmatprep.subr.bf16.mxu0 0
      %4755 = vmatpush1.bf16.msra.mxu0 0
      %4756 = vmatprep.subr.bf16.mxu0 0
      %4757 = vmatpush1.bf16.msra.mxu0 0
      %4758 = vmatprep.subr.bf16.mxu0 0
      %4759 = vmatpush1.bf16.msra.mxu0 0
      %4760 = vmatprep.subr.bf16.mxu0 0
      %4761 = vmatpush1.bf16.msra.mxu0 0
      %4762 = vmatprep.subr.bf16.mxu0 0
      %4763 = vmatpush1.bf16.msra.mxu0 0
      %4764 = vmatprep.subr.bf16.mxu0 0
      %4765 = vmatpush1.bf16.msra.mxu0 0
      %4766 = vmatprep.subr.bf16.mxu0 0
      %4767 = vmatpush1.bf16.msra.mxu0 0
      %4768 = vmatprep.subr.bf16.mxu0 0
      %4769 = vmatpush1.bf16.msra.mxu0 0
      %4770 = vmatprep.subr.bf16.mxu0 0
      %4771 = vmatpush1.bf16.msra.mxu0 0
      %4772 = vmatprep.subr.bf16.mxu0 0
      %4773 = vmatpush1.bf16.msra.mxu0 0
      %4774 = vmatprep.subr.bf16.mxu0 0
      %4775 = vmatpush1.bf16.msra.mxu0 0
      %4776 = vmatprep.subr.bf16.mxu0 0
      %4777 = vmatpush1.bf16.msra.mxu0 0
      %4778 = vmatprep.mubr.bf16.mxu0 0
      %4779 = vmatmul.mubr.bf16.gmra.mrb[0].mxu0 %v4744
      %v4780 = vpop.f32.mrb[0].mxu0
      %v4781 = vadd.f32 0.0, %v4780
      %v4782 = vpop.f32.mrb[0].mxu0
      %v4783 = vpop.f32.mrb[0].mxu0
      %v4784 = vadd.f32 0.0, %v4783
      %v4785 = vpop.f32.mrb[0].mxu0
      %4786 = vdwg.mxu0
      %4788 = vrot.lane.b32.xlu0 %v1056, 96
      %v4789 = vpop.permute.xlu0 %4788
      %v4792 = vsel %vm2562, %v3298, 0
      %4794 = vmatprep.subr.bf16.mxu0 0
      %4795 = vmatpush1.bf16.msra.mxu0 %v4789
      %4796 = vmatprep.subr.bf16.mxu0 0
      %4797 = vmatpush1.bf16.msra.mxu0 0
      %4798 = vmatprep.subr.bf16.mxu0 0
      %4799 = vmatpush1.bf16.msra.mxu0 0
      %4800 = vmatprep.subr.bf16.mxu0 0
      %4801 = vmatpush1.bf16.msra.mxu0 0
      %4802 = vmatprep.subr.bf16.mxu0 0
      %4803 = vmatpush1.bf16.msra.mxu0 0
      %4804 = vmatprep.subr.bf16.mxu0 0
      %4805 = vmatpush1.bf16.msra.mxu0 0
      %4806 = vmatprep.subr.bf16.mxu0 0
      %4807 = vmatpush1.bf16.msra.mxu0 0
      %4808 = vmatprep.subr.bf16.mxu0 0
      %4809 = vmatpush1.bf16.msra.mxu0 0
      %4810 = vmatprep.subr.bf16.mxu0 0
      %4811 = vmatpush1.bf16.msra.mxu0 0
      %4812 = vmatprep.subr.bf16.mxu0 0
      %4813 = vmatpush1.bf16.msra.mxu0 0
      %4814 = vmatprep.subr.bf16.mxu0 0
      %4815 = vmatpush1.bf16.msra.mxu0 0
      %4816 = vmatprep.subr.bf16.mxu0 0
      %4817 = vmatpush1.bf16.msra.mxu0 0
      %4818 = vmatprep.subr.bf16.mxu0 0
      %4819 = vmatpush1.bf16.msra.mxu0 0
      %4820 = vmatprep.subr.bf16.mxu0 0
      %4821 = vmatpush1.bf16.msra.mxu0 0
      %4822 = vmatprep.subr.bf16.mxu0 0
      %4823 = vmatpush1.bf16.msra.mxu0 0
      %4824 = vmatprep.subr.bf16.mxu0 0
      %4825 = vmatpush1.bf16.msra.mxu0 0
      %4826 = vmatprep.mubr.bf16.mxu0 0
      %4827 = vmatmul.mubr.bf16.gmra.mrb[0].mxu0 %v4792
      %v4828 = vpop.f32.mrb[0].mxu0
      %v4829 = vadd.f32 0.0, %v4828
      %v4830 = vpop.f32.mrb[0].mxu0
      %v4831 = vpop.f32.mrb[0].mxu0
      %v4832 = vadd.f32 0.0, %v4831
      %v4833 = vpop.f32.mrb[0].mxu0
      %4834 = vdwg.mxu0
      %v4835 = vpack.c.bf16 %v3344, %v3341
      %v4836 = vpack.c.bf16 %v3392, %v3389
      %v4837 = vpack.c.bf16 %v3440, %v3437
      %v4838 = vpack.c.bf16 %v3488, %v3485
      %v4839 = vpack.c.bf16 %v3536, %v3533
      %v4840 = vpack.c.bf16 %v3584, %v3581
      %v4841 = vpack.c.bf16 %v3632, %v3629
      %v4842 = vpack.c.bf16 %v3680, %v3677
      %v4843 = vpack.c.bf16 %v3728, %v3725
      %v4844 = vpack.c.bf16 %v3776, %v3773
      %v4845 = vpack.c.bf16 %v3824, %v3821
      %v4846 = vpack.c.bf16 %v3872, %v3869
      %v4847 = vpack.c.bf16 %v3920, %v3917
      %v4848 = vpack.c.bf16 %v3968, %v3965
      %v4849 = vpack.c.bf16 %v4016, %v4013
      %v4850 = vpack.c.bf16 %v4064, %v4061
      %v4851 = vpack.c.bf16 %v4112, %v4109
      %v4852 = vpack.c.bf16 %v4160, %v4157
      %v4853 = vpack.c.bf16 %v4208, %v4205
      %v4854 = vpack.c.bf16 %v4256, %v4253
      %v4855 = vpack.c.bf16 %v4304, %v4301
      %v4856 = vpack.c.bf16 %v4352, %v4349
      %v4857 = vpack.c.bf16 %v4400, %v4397
      %v4858 = vpack.c.bf16 %v4448, %v4445
      %v4859 = vpack.c.bf16 %v4496, %v4493
      %v4860 = vpack.c.bf16 %v4544, %v4541
      %v4861 = vpack.c.bf16 %v4592, %v4589
      %v4862 = vpack.c.bf16 %v4640, %v4637
      %v4863 = vpack.c.bf16 %v4688, %v4685
      %v4864 = vpack.c.bf16 %v4736, %v4733
      %v4865 = vpack.c.bf16 %v4784, %v4781
      %v4866 = vpack.c.bf16 %v4832, %v4829
      %v4867 = vld [vmem:[%s4] sm:$0xf]
      %v4868 = vld [vmem:[%s4 + $0x4] sm:$0xf]
      %v4869 = vld [vmem:[%s4 + $0x8] sm:$0xf]
      %v4870 = vld [vmem:[%s4 + $0xc] sm:$0xf]
      %v4872 = vsel %vm1057, %v4835, 0
      %v4875 = vsel %vm1057, %v4836, 0
      %v4878 = vsel %vm1057, %v4837, 0
      %v4881 = vsel %vm1057, %v4838, 0
      %v4884 = vsel %vm1057, %v4839, 0
      %v4887 = vsel %vm1057, %v4840, 0
      %v4890 = vsel %vm1057, %v4841, 0
      %v4893 = vsel %vm1057, %v4842, 0
      %vm4895 = vcmask 1043456
      %v4897 = vsel %vm4895, %v4867, 0
      %4899 = vmatprep.subr.bf16.mxu0 0
      %4900 = vmatpush1.bf16.msra.mxu0 %v4897
      %4901 = vmatprep.subr.bf16.mxu0 0
      %4902 = vmatpush1.bf16.msra.mxu0 0
      %4903 = vmatprep.subr.bf16.mxu0 0
      %4904 = vmatpush1.bf16.msra.mxu0 0
      %4905 = vmatprep.subr.bf16.mxu0 0
      %4906 = vmatpush1.bf16.msra.mxu0 0
      %4907 = vmatprep.subr.bf16.mxu0 0
      %4908 = vmatpush1.bf16.msra.mxu0 0
      %4909 = vmatprep.subr.bf16.mxu0 0
      %4910 = vmatpush1.bf16.msra.mxu0 0
      %4911 = vmatprep.subr.bf16.mxu0 0
      %4912 = vmatpush1.bf16.msra.mxu0 0
      %4913 = vmatprep.subr.bf16.mxu0 0
      %4914 = vmatpush1.bf16.msra.mxu0 0
      %4915 = vmatprep.subr.bf16.mxu0 0
      %4916 = vmatpush1.bf16.msra.mxu0 0
      %4917 = vmatprep.subr.bf16.mxu0 0
      %4918 = vmatpush1.bf16.msra.mxu0 0
      %4919 = vmatprep.subr.bf16.mxu0 0
      %4920 = vmatpush1.bf16.msra.mxu0 0
      %4921 = vmatprep.subr.bf16.mxu0 0
      %4922 = vmatpush1.bf16.msra.mxu0 0
      %4923 = vmatprep.subr.bf16.mxu0 0
      %4924 = vmatpush1.bf16.msra.mxu0 0
      %4925 = vmatprep.subr.bf16.mxu0 0
      %4926 = vmatpush1.bf16.msra.mxu0 0
      %4927 = vmatprep.subr.bf16.mxu0 0
      %4928 = vmatpush1.bf16.msra.mxu0 0
      %4929 = vmatprep.subr.bf16.mxu0 0
      %4930 = vmatpush1.bf16.msra.mxu0 0
      %4931 = vmatprep.mubr.bf16.mxu0 0
      %4932 = vmatmul.mubr.bf16.gmra.mrb[0].mxu0 %v4872
      %v4933 = vpop.f32.mrb[0].mxu0
      %v4934 = vadd.f32 0.0, %v4933
      %v4935 = vpop.f32.mrb[0].mxu0
      %v4936 = vpop.f32.mrb[0].mxu0
      %v4937 = vadd.f32 0.0, %v4936
      %v4938 = vpop.f32.mrb[0].mxu0
      %4939 = vmatprep.mubr.bf16.mxu0 0
      %4940 = vmatmul.mubr.bf16.gmra.mrb[0].mxu0 %v4875
      %v4941 = vpop.f32.mrb[0].mxu0
      %v4942 = vadd.f32 0.0, %v4941
      %v4943 = vpop.f32.mrb[0].mxu0
      %v4944 = vpop.f32.mrb[0].mxu0
      %v4945 = vadd.f32 0.0, %v4944
      %v4946 = vpop.f32.mrb[0].mxu0
      %4947 = vmatprep.mubr.bf16.mxu0 0
      %4948 = vmatmul.mubr.bf16.gmra.mrb[0].mxu0 %v4878
      %v4949 = vpop.f32.mrb[0].mxu0
      %v4950 = vadd.f32 0.0, %v4949
      %v4951 = vpop.f32.mrb[0].mxu0
      %v4952 = vpop.f32.mrb[0].mxu0
      %v4953 = vadd.f32 0.0, %v4952
      %v4954 = vpop.f32.mrb[0].mxu0
      %4955 = vmatprep.mubr.bf16.mxu0 0
      %4956 = vmatmul.mubr.bf16.gmra.mrb[0].mxu0 %v4881
      %v4957 = vpop.f32.mrb[0].mxu0
      %v4958 = vadd.f32 0.0, %v4957
      %v4959 = vpop.f32.mrb[0].mxu0
      %v4960 = vpop.f32.mrb[0].mxu0
      %v4961 = vadd.f32 0.0, %v4960
      %v4962 = vpop.f32.mrb[0].mxu0
      %4963 = vmatprep.mubr.bf16.mxu0 0
      %4964 = vmatmul.mubr.bf16.gmra.mrb[0].mxu0 %v4884
      %v4965 = vpop.f32.mrb[0].mxu0
      %v4966 = vadd.f32 0.0, %v4965
      %v4967 = vpop.f32.mrb[0].mxu0
      %v4968 = vpop.f32.mrb[0].mxu0
      %v4969 = vadd.f32 0.0, %v4968
      %v4970 = vpop.f32.mrb[0].mxu0
      %4971 = vmatprep.mubr.bf16.mxu0 0
      %4972 = vmatmul.mubr.bf16.gmra.mrb[0].mxu0 %v4887
      %v4973 = vpop.f32.mrb[0].mxu0
      %v4974 = vadd.f32 0.0, %v4973
      %v4975 = vpop.f32.mrb[0].mxu0
      %v4976 = vpop.f32.mrb[0].mxu0
      %v4977 = vadd.f32 0.0, %v4976
      %v4978 = vpop.f32.mrb[0].mxu0
      %4979 = vmatprep.mubr.bf16.mxu0 0
      %4980 = vmatmul.mubr.bf16.gmra.mrb[0].mxu0 %v4890
      %v4981 = vpop.f32.mrb[0].mxu0
      %v4982 = vadd.f32 0.0, %v4981
      %v4983 = vpop.f32.mrb[0].mxu0
      %v4984 = vpop.f32.mrb[0].mxu0
      %v4985 = vadd.f32 0.0, %v4984
      %v4986 = vpop.f32.mrb[0].mxu0
      %4987 = vmatprep.mubr.bf16.mxu0 0
      %4988 = vmatmul.mubr.bf16.gmra.mrb[0].mxu0 %v4893
      %v4989 = vpop.f32.mrb[0].mxu0
      %v4990 = vadd.f32 0.0, %v4989
      %v4991 = vpop.f32.mrb[0].mxu0
      %v4992 = vpop.f32.mrb[0].mxu0
      %v4993 = vadd.f32 0.0, %v4992
      %v4994 = vpop.f32.mrb[0].mxu0
      %4995 = vdwg.mxu0
      %v4997 = vsel %vm1057, %v4843, 0
      %v5000 = vsel %vm1057, %v4844, 0
      %v5003 = vsel %vm1057, %v4845, 0
      %v5006 = vsel %vm1057, %v4846, 0
      %v5009 = vsel %vm1057, %v4847, 0
      %v5012 = vsel %vm1057, %v4848, 0
      %v5015 = vsel %vm1057, %v4849, 0
      %v5018 = vsel %vm1057, %v4850, 0
      %v5021 = vsel %vm4895, %v4868, 0
      %5023 = vmatprep.subr.bf16.mxu0 0
      %5024 = vmatpush1.bf16.msra.mxu0 %v5021
      %5025 = vmatprep.subr.bf16.mxu0 0
      %5026 = vmatpush1.bf16.msra.mxu0 0
      %5027 = vmatprep.subr.bf16.mxu0 0
      %5028 = vmatpush1.bf16.msra.mxu0 0
      %5029 = vmatprep.subr.bf16.mxu0 0
      %5030 = vmatpush1.bf16.msra.mxu0 0
      %5031 = vmatprep.subr.bf16.mxu0 0
      %5032 = vmatpush1.bf16.msra.mxu0 0
      %5033 = vmatprep.subr.bf16.mxu0 0
      %5034 = vmatpush1.bf16.msra.mxu0 0
      %5035 = vmatprep.subr.bf16.mxu0 0
      %5036 = vmatpush1.bf16.msra.mxu0 0
      %5037 = vmatprep.subr.bf16.mxu0 0
      %5038 = vmatpush1.bf16.msra.mxu0 0
      %5039 = vmatprep.subr.bf16.mxu0 0
      %5040 = vmatpush1.bf16.msra.mxu0 0
      %5041 = vmatprep.subr.bf16.mxu0 0
      %5042 = vmatpush1.bf16.msra.mxu0 0
      %5043 = vmatprep.subr.bf16.mxu0 0
      %5044 = vmatpush1.bf16.msra.mxu0 0
      %5045 = vmatprep.subr.bf16.mxu0 0
      %5046 = vmatpush1.bf16.msra.mxu0 0
      %5047 = vmatprep.subr.bf16.mxu0 0
      %5048 = vmatpush1.bf16.msra.mxu0 0
      %5049 = vmatprep.subr.bf16.mxu0 0
      %5050 = vmatpush1.bf16.msra.mxu0 0
      %5051 = vmatprep.subr.bf16.mxu0 0
      %5052 = vmatpush1.bf16.msra.mxu0 0
      %5053 = vmatprep.subr.bf16.mxu0 0
      %5054 = vmatpush1.bf16.msra.mxu0 0
      %5055 = vmatprep.mubr.bf16.mxu0 0
      %5056 = vmatmul.mubr.bf16.gmra.mrb[0].mxu0 %v4997
      %v5057 = vpop.f32.mrb[0].mxu0
      %v5058 = vadd.f32 0.0, %v5057
      %v5059 = vpop.f32.mrb[0].mxu0
      %v5060 = vpop.f32.mrb[0].mxu0
      %v5061 = vadd.f32 0.0, %v5060
      %v5062 = vpop.f32.mrb[0].mxu0
      %5063 = vmatprep.mubr.bf16.mxu0 0
      %5064 = vmatmul.mubr.bf16.gmra.mrb[0].mxu0 %v5000
      %v5065 = vpop.f32.mrb[0].mxu0
      %v5066 = vadd.f32 0.0, %v5065
      %v5067 = vpop.f32.mrb[0].mxu0
      %v5068 = vpop.f32.mrb[0].mxu0
      %v5069 = vadd.f32 0.0, %v5068
      %v5070 = vpop.f32.mrb[0].mxu0
      %5071 = vmatprep.mubr.bf16.mxu0 0
      %5072 = vmatmul.mubr.bf16.gmra.mrb[0].mxu0 %v5003
      %v5073 = vpop.f32.mrb[0].mxu0
      %v5074 = vadd.f32 0.0, %v5073
      %v5075 = vpop.f32.mrb[0].mxu0
      %v5076 = vpop.f32.mrb[0].mxu0
      %v5077 = vadd.f32 0.0, %v5076
      %v5078 = vpop.f32.mrb[0].mxu0
      %5079 = vmatprep.mubr.bf16.mxu0 0
      %5080 = vmatmul.mubr.bf16.gmra.mrb[0].mxu0 %v5006
      %v5081 = vpop.f32.mrb[0].mxu0
      %v5082 = vadd.f32 0.0, %v5081
      %v5083 = vpop.f32.mrb[0].mxu0
      %v5084 = vpop.f32.mrb[0].mxu0
      %v5085 = vadd.f32 0.0, %v5084
      %v5086 = vpop.f32.mrb[0].mxu0
      %5087 = vmatprep.mubr.bf16.mxu0 0
      %5088 = vmatmul.mubr.bf16.gmra.mrb[0].mxu0 %v5009
      %v5089 = vpop.f32.mrb[0].mxu0
      %v5090 = vadd.f32 0.0, %v5089
      %v5091 = vpop.f32.mrb[0].mxu0
      %v5092 = vpop.f32.mrb[0].mxu0
      %v5093 = vadd.f32 0.0, %v5092
      %v5094 = vpop.f32.mrb[0].mxu0
      %5095 = vmatprep.mubr.bf16.mxu0 0
      %5096 = vmatmul.mubr.bf16.gmra.mrb[0].mxu0 %v5012
      %v5097 = vpop.f32.mrb[0].mxu0
      %v5098 = vadd.f32 0.0, %v5097
      %v5099 = vpop.f32.mrb[0].mxu0
      %v5100 = vpop.f32.mrb[0].mxu0
      %v5101 = vadd.f32 0.0, %v5100
      %v5102 = vpop.f32.mrb[0].mxu0
      %5103 = vmatprep.mubr.bf16.mxu0 0
      %5104 = vmatmul.mubr.bf16.gmra.mrb[0].mxu0 %v5015
      %v5105 = vpop.f32.mrb[0].mxu0
      %v5106 = vadd.f32 0.0, %v5105
      %v5107 = vpop.f32.mrb[0].mxu0
      %v5108 = vpop.f32.mrb[0].mxu0
      %v5109 = vadd.f32 0.0, %v5108
      %v5110 = vpop.f32.mrb[0].mxu0
      %5111 = vmatprep.mubr.bf16.mxu0 0
      %5112 = vmatmul.mubr.bf16.gmra.mrb[0].mxu0 %v5018
      %v5113 = vpop.f32.mrb[0].mxu0
      %v5114 = vadd.f32 0.0, %v5113
      %v5115 = vpop.f32.mrb[0].mxu0
      %v5116 = vpop.f32.mrb[0].mxu0
      %v5117 = vadd.f32 0.0, %v5116
      %v5118 = vpop.f32.mrb[0].mxu0
      %5119 = vdwg.mxu0
      %v5121 = vsel %vm1057, %v4851, 0
      %v5124 = vsel %vm1057, %v4852, 0
      %v5127 = vsel %vm1057, %v4853, 0
      %v5130 = vsel %vm1057, %v4854, 0
      %v5133 = vsel %vm1057, %v4855, 0
      %v5136 = vsel %vm1057, %v4856, 0
      %v5139 = vsel %vm1057, %v4857, 0
      %v5142 = vsel %vm1057, %v4858, 0
      %v5145 = vsel %vm4895, %v4869, 0
      %5147 = vmatprep.subr.bf16.mxu0 0
      %5148 = vmatpush1.bf16.msra.mxu0 %v5145
      %5149 = vmatprep.subr.bf16.mxu0 0
      %5150 = vmatpush1.bf16.msra.mxu0 0
      %5151 = vmatprep.subr.bf16.mxu0 0
      %5152 = vmatpush1.bf16.msra.mxu0 0
      %5153 = vmatprep.subr.bf16.mxu0 0
      %5154 = vmatpush1.bf16.msra.mxu0 0
      %5155 = vmatprep.subr.bf16.mxu0 0
      %5156 = vmatpush1.bf16.msra.mxu0 0
      %5157 = vmatprep.subr.bf16.mxu0 0
      %5158 = vmatpush1.bf16.msra.mxu0 0
      %5159 = vmatprep.subr.bf16.mxu0 0
      %5160 = vmatpush1.bf16.msra.mxu0 0
      %5161 = vmatprep.subr.bf16.mxu0 0
      %5162 = vmatpush1.bf16.msra.mxu0 0
      %5163 = vmatprep.subr.bf16.mxu0 0
      %5164 = vmatpush1.bf16.msra.mxu0 0
      %5165 = vmatprep.subr.bf16.mxu0 0
      %5166 = vmatpush1.bf16.msra.mxu0 0
      %5167 = vmatprep.subr.bf16.mxu0 0
      %5168 = vmatpush1.bf16.msra.mxu0 0
      %5169 = vmatprep.subr.bf16.mxu0 0
      %5170 = vmatpush1.bf16.msra.mxu0 0
      %5171 = vmatprep.subr.bf16.mxu0 0
      %5172 = vmatpush1.bf16.msra.mxu0 0
      %5173 = vmatprep.subr.bf16.mxu0 0
      %5174 = vmatpush1.bf16.msra.mxu0 0
      %5175 = vmatprep.subr.bf16.mxu0 0
      %5176 = vmatpush1.bf16.msra.mxu0 0
      %5177 = vmatprep.subr.bf16.mxu0 0
      %5178 = vmatpush1.bf16.msra.mxu0 0
      %5179 = vmatprep.mubr.bf16.mxu0 0
      %5180 = vmatmul.mubr.bf16.gmra.mrb[0].mxu0 %v5121
      %v5181 = vpop.f32.mrb[0].mxu0
      %v5182 = vadd.f32 0.0, %v5181
      %v5183 = vpop.f32.mrb[0].mxu0
      %v5184 = vpop.f32.mrb[0].mxu0
      %v5185 = vadd.f32 0.0, %v5184
      %v5186 = vpop.f32.mrb[0].mxu0
      %5187 = vmatprep.mubr.bf16.mxu0 0
      %5188 = vmatmul.mubr.bf16.gmra.mrb[0].mxu0 %v5124
      %v5189 = vpop.f32.mrb[0].mxu0
      %v5190 = vadd.f32 0.0, %v5189
      %v5191 = vpop.f32.mrb[0].mxu0
      %v5192 = vpop.f32.mrb[0].mxu0
      %v5193 = vadd.f32 0.0, %v5192
      %v5194 = vpop.f32.mrb[0].mxu0
      %5195 = vmatprep.mubr.bf16.mxu0 0
      %5196 = vmatmul.mubr.bf16.gmra.mrb[0].mxu0 %v5127
      %v5197 = vpop.f32.mrb[0].mxu0
      %v5198 = vadd.f32 0.0, %v5197
      %v5199 = vpop.f32.mrb[0].mxu0
      %v5200 = vpop.f32.mrb[0].mxu0
      %v5201 = vadd.f32 0.0, %v5200
      %v5202 = vpop.f32.mrb[0].mxu0
      %5203 = vmatprep.mubr.bf16.mxu0 0
      %5204 = vmatmul.mubr.bf16.gmra.mrb[0].mxu0 %v5130
      %v5205 = vpop.f32.mrb[0].mxu0
      %v5206 = vadd.f32 0.0, %v5205
      %v5207 = vpop.f32.mrb[0].mxu0
      %v5208 = vpop.f32.mrb[0].mxu0
      %v5209 = vadd.f32 0.0, %v5208
      %v5210 = vpop.f32.mrb[0].mxu0
      %5211 = vmatprep.mubr.bf16.mxu0 0
      %5212 = vmatmul.mubr.bf16.gmra.mrb[0].mxu0 %v5133
      %v5213 = vpop.f32.mrb[0].mxu0
      %v5214 = vadd.f32 0.0, %v5213
      %v5215 = vpop.f32.mrb[0].mxu0
      %v5216 = vpop.f32.mrb[0].mxu0
      %v5217 = vadd.f32 0.0, %v5216
      %v5218 = vpop.f32.mrb[0].mxu0
      %5219 = vmatprep.mubr.bf16.mxu0 0
      %5220 = vmatmul.mubr.bf16.gmra.mrb[0].mxu0 %v5136
      %v5221 = vpop.f32.mrb[0].mxu0
      %v5222 = vadd.f32 0.0, %v5221
      %v5223 = vpop.f32.mrb[0].mxu0
      %v5224 = vpop.f32.mrb[0].mxu0
      %v5225 = vadd.f32 0.0, %v5224
      %v5226 = vpop.f32.mrb[0].mxu0
      %5227 = vmatprep.mubr.bf16.mxu0 0
      %5228 = vmatmul.mubr.bf16.gmra.mrb[0].mxu0 %v5139
      %v5229 = vpop.f32.mrb[0].mxu0
      %v5230 = vadd.f32 0.0, %v5229
      %v5231 = vpop.f32.mrb[0].mxu0
      %v5232 = vpop.f32.mrb[0].mxu0
      %v5233 = vadd.f32 0.0, %v5232
      %v5234 = vpop.f32.mrb[0].mxu0
      %5235 = vmatprep.mubr.bf16.mxu0 0
      %5236 = vmatmul.mubr.bf16.gmra.mrb[0].mxu0 %v5142
      %v5237 = vpop.f32.mrb[0].mxu0
      %v5238 = vadd.f32 0.0, %v5237
      %v5239 = vpop.f32.mrb[0].mxu0
      %v5240 = vpop.f32.mrb[0].mxu0
      %v5241 = vadd.f32 0.0, %v5240
      %v5242 = vpop.f32.mrb[0].mxu0
      %5243 = vdwg.mxu0
      %v5245 = vsel %vm1057, %v4859, 0
      %v5248 = vsel %vm1057, %v4860, 0
      %v5251 = vsel %vm1057, %v4861, 0
      %v5254 = vsel %vm1057, %v4862, 0
      %v5257 = vsel %vm1057, %v4863, 0
      %v5260 = vsel %vm1057, %v4864, 0
      %v5263 = vsel %vm1057, %v4865, 0
      %v5266 = vsel %vm1057, %v4866, 0
      %v5269 = vsel %vm4895, %v4870, 0
      %5271 = vmatprep.subr.bf16.mxu0 0
      %5272 = vmatpush1.bf16.msra.mxu0 %v5269
      %5273 = vmatprep.subr.bf16.mxu0 0
      %5274 = vmatpush1.bf16.msra.mxu0 0
      %5275 = vmatprep.subr.bf16.mxu0 0
      %5276 = vmatpush1.bf16.msra.mxu0 0
      %5277 = vmatprep.subr.bf16.mxu0 0
      %5278 = vmatpush1.bf16.msra.mxu0 0
      %5279 = vmatprep.subr.bf16.mxu0 0
      %5280 = vmatpush1.bf16.msra.mxu0 0
      %5281 = vmatprep.subr.bf16.mxu0 0
      %5282 = vmatpush1.bf16.msra.mxu0 0
      %5283 = vmatprep.subr.bf16.mxu0 0
      %5284 = vmatpush1.bf16.msra.mxu0 0
      %5285 = vmatprep.subr.bf16.mxu0 0
      %5286 = vmatpush1.bf16.msra.mxu0 0
      %5287 = vmatprep.subr.bf16.mxu0 0
      %5288 = vmatpush1.bf16.msra.mxu0 0
      %5289 = vmatprep.subr.bf16.mxu0 0
      %5290 = vmatpush1.bf16.msra.mxu0 0
      %5291 = vmatprep.subr.bf16.mxu0 0
      %5292 = vmatpush1.bf16.msra.mxu0 0
      %5293 = vmatprep.subr.bf16.mxu0 0
      %5294 = vmatpush1.bf16.msra.mxu0 0
      %5295 = vmatprep.subr.bf16.mxu0 0
      %5296 = vmatpush1.bf16.msra.mxu0 0
      %5297 = vmatprep.subr.bf16.mxu0 0
      %5298 = vmatpush1.bf16.msra.mxu0 0
      %5299 = vmatprep.subr.bf16.mxu0 0
      %5300 = vmatpush1.bf16.msra.mxu0 0
      %5301 = vmatprep.subr.bf16.mxu0 0
      %5302 = vmatpush1.bf16.msra.mxu0 0
      %5303 = vmatprep.mubr.bf16.mxu0 0
      %5304 = vmatmul.mubr.bf16.gmra.mrb[0].mxu0 %v5245
      %v5305 = vpop.f32.mrb[0].mxu0
      %v5306 = vadd.f32 0.0, %v5305
      %v5307 = vpop.f32.mrb[0].mxu0
      %v5308 = vpop.f32.mrb[0].mxu0
      %v5309 = vadd.f32 0.0, %v5308
      %v5310 = vpop.f32.mrb[0].mxu0
      %5311 = vmatprep.mubr.bf16.mxu0 0
      %5312 = vmatmul.mubr.bf16.gmra.mrb[0].mxu0 %v5248
      %v5313 = vpop.f32.mrb[0].mxu0
      %v5314 = vadd.f32 0.0, %v5313
      %v5315 = vpop.f32.mrb[0].mxu0
      %v5316 = vpop.f32.mrb[0].mxu0
      %v5317 = vadd.f32 0.0, %v5316
      %v5318 = vpop.f32.mrb[0].mxu0
      %5319 = vmatprep.mubr.bf16.mxu0 0
      %5320 = vmatmul.mubr.bf16.gmra.mrb[0].mxu0 %v5251
      %v5321 = vpop.f32.mrb[0].mxu0
      %v5322 = vadd.f32 0.0, %v5321
      %v5323 = vpop.f32.mrb[0].mxu0
      %v5324 = vpop.f32.mrb[0].mxu0
      %v5325 = vadd.f32 0.0, %v5324
      %v5326 = vpop.f32.mrb[0].mxu0
      %5327 = vmatprep.mubr.bf16.mxu0 0
      %5328 = vmatmul.mubr.bf16.gmra.mrb[0].mxu0 %v5254
      %v5329 = vpop.f32.mrb[0].mxu0
      %v5330 = vadd.f32 0.0, %v5329
      %v5331 = vpop.f32.mrb[0].mxu0
      %v5332 = vpop.f32.mrb[0].mxu0
      %v5333 = vadd.f32 0.0, %v5332
      %v5334 = vpop.f32.mrb[0].mxu0
      %5335 = vmatprep.mubr.bf16.mxu0 0
      %5336 = vmatmul.mubr.bf16.gmra.mrb[0].mxu0 %v5257
      %v5337 = vpop.f32.mrb[0].mxu0
      %v5338 = vadd.f32 0.0, %v5337
      %v5339 = vpop.f32.mrb[0].mxu0
      %v5340 = vpop.f32.mrb[0].mxu0
      %v5341 = vadd.f32 0.0, %v5340
      %v5342 = vpop.f32.mrb[0].mxu0
      %5343 = vmatprep.mubr.bf16.mxu0 0
      %5344 = vmatmul.mubr.bf16.gmra.mrb[0].mxu0 %v5260
      %v5345 = vpop.f32.mrb[0].mxu0
      %v5346 = vadd.f32 0.0, %v5345
      %v5347 = vpop.f32.mrb[0].mxu0
      %v5348 = vpop.f32.mrb[0].mxu0
      %v5349 = vadd.f32 0.0, %v5348
      %v5350 = vpop.f32.mrb[0].mxu0
      %5351 = vmatprep.mubr.bf16.mxu0 0
      %5352 = vmatmul.mubr.bf16.gmra.mrb[0].mxu0 %v5263
      %v5353 = vpop.f32.mrb[0].mxu0
      %v5354 = vadd.f32 0.0, %v5353
      %v5355 = vpop.f32.mrb[0].mxu0
      %v5356 = vpop.f32.mrb[0].mxu0
      %v5357 = vadd.f32 0.0, %v5356
      %v5358 = vpop.f32.mrb[0].mxu0
      %5359 = vmatprep.mubr.bf16.mxu0 0
      %5360 = vmatmul.mubr.bf16.gmra.mrb[0].mxu0 %v5266
      %v5361 = vpop.f32.mrb[0].mxu0
      %v5362 = vadd.f32 0.0, %v5361
      %v5363 = vpop.f32.mrb[0].mxu0
      %v5364 = vpop.f32.mrb[0].mxu0
      %v5365 = vadd.f32 0.0, %v5364
      %v5366 = vpop.f32.mrb[0].mxu0
      %5367 = vdwg.mxu0
      %v5368 = vsel %vm374, %v4934, 0.0
      %v5369 = vsel %vm374, %v5058, 0.0
      %v5370 = vadd.f32 %v5368, %v5369
      %v5371 = vsel %vm374, %v5182, 0.0
      %v5372 = vadd.f32 %v5370, %v5371
      %v5373 = vsel %vm374, %v5306, 0.0
      %v5374 = vadd.f32 %v5372, %v5373
      %v5375 = vsel %vm374, %v4937, 0.0
      %v5376 = vsel %vm374, %v5061, 0.0
      %v5377 = vadd.f32 %v5375, %v5376
      %v5378 = vsel %vm374, %v5185, 0.0
      %v5379 = vadd.f32 %v5377, %v5378
      %v5380 = vsel %vm374, %v5309, 0.0
      %v5381 = vadd.f32 %v5379, %v5380
      %v5382 = vsel %vm374, %v4942, 0.0
      %v5383 = vsel %vm374, %v5066, 0.0
      %v5384 = vadd.f32 %v5382, %v5383
      %v5385 = vsel %vm374, %v5190, 0.0
      %v5386 = vadd.f32 %v5384, %v5385
      %v5387 = vsel %vm374, %v5314, 0.0
      %v5388 = vadd.f32 %v5386, %v5387
      %v5389 = vsel %vm374, %v4945, 0.0
      %v5390 = vsel %vm374, %v5069, 0.0
      %v5391 = vadd.f32 %v5389, %v5390
      %v5392 = vsel %vm374, %v5193, 0.0
      %v5393 = vadd.f32 %v5391, %v5392
      %v5394 = vsel %vm374, %v5317, 0.0
      %v5395 = vadd.f32 %v5393, %v5394
      %v5396 = vsel %vm374, %v4950, 0.0
      %v5397 = vsel %vm374, %v5074, 0.0
      %v5398 = vadd.f32 %v5396, %v5397
      %v5399 = vsel %vm374, %v5198, 0.0
      %v5400 = vadd.f32 %v5398, %v5399
      %v5401 = vsel %vm374, %v5322, 0.0
      %v5402 = vadd.f32 %v5400, %v5401
      %v5403 = vsel %vm374, %v4953, 0.0
      %v5404 = vsel %vm374, %v5077, 0.0
      %v5405 = vadd.f32 %v5403, %v5404
      %v5406 = vsel %vm374, %v5201, 0.0
      %v5407 = vadd.f32 %v5405, %v5406
      %v5408 = vsel %vm374, %v5325, 0.0
      %v5409 = vadd.f32 %v5407, %v5408
      %v5410 = vsel %vm374, %v4958, 0.0
      %v5411 = vsel %vm374, %v5082, 0.0
      %v5412 = vadd.f32 %v5410, %v5411
      %v5413 = vsel %vm374, %v5206, 0.0
      %v5414 = vadd.f32 %v5412, %v5413
      %v5415 = vsel %vm374, %v5330, 0.0
      %v5416 = vadd.f32 %v5414, %v5415
      %v5417 = vsel %vm374, %v4961, 0.0
      %v5418 = vsel %vm374, %v5085, 0.0
      %v5419 = vadd.f32 %v5417, %v5418
      %v5420 = vsel %vm374, %v5209, 0.0
      %v5421 = vadd.f32 %v5419, %v5420
      %v5422 = vsel %vm374, %v5333, 0.0
      %v5423 = vadd.f32 %v5421, %v5422
      %v5424 = vsel %vm374, %v4966, 0.0
      %v5425 = vsel %vm374, %v5090, 0.0
      %v5426 = vadd.f32 %v5424, %v5425
      %v5427 = vsel %vm374, %v5214, 0.0
      %v5428 = vadd.f32 %v5426, %v5427
      %v5429 = vsel %vm374, %v5338, 0.0
      %v5430 = vadd.f32 %v5428, %v5429
      %v5431 = vsel %vm374, %v4969, 0.0
      %v5432 = vsel %vm374, %v5093, 0.0
      %v5433 = vadd.f32 %v5431, %v5432
      %v5434 = vsel %vm374, %v5217, 0.0
      %v5435 = vadd.f32 %v5433, %v5434
      %v5436 = vsel %vm374, %v5341, 0.0
      %v5437 = vadd.f32 %v5435, %v5436
      %v5438 = vsel %vm374, %v4974, 0.0
      %v5439 = vsel %vm374, %v5098, 0.0
      %v5440 = vadd.f32 %v5438, %v5439
      %v5441 = vsel %vm374, %v5222, 0.0
      %v5442 = vadd.f32 %v5440, %v5441
      %v5443 = vsel %vm374, %v5346, 0.0
      %v5444 = vadd.f32 %v5442, %v5443
      %v5445 = vsel %vm374, %v4977, 0.0
      %v5446 = vsel %vm374, %v5101, 0.0
      %v5447 = vadd.f32 %v5445, %v5446
      %v5448 = vsel %vm374, %v5225, 0.0
      %v5449 = vadd.f32 %v5447, %v5448
      %v5450 = vsel %vm374, %v5349, 0.0
      %v5451 = vadd.f32 %v5449, %v5450
      %v5452 = vsel %vm374, %v4982, 0.0
      %v5453 = vsel %vm374, %v5106, 0.0
      %v5454 = vadd.f32 %v5452, %v5453
      %v5455 = vsel %vm374, %v5230, 0.0
      %v5456 = vadd.f32 %v5454, %v5455
      %v5457 = vsel %vm374, %v5354, 0.0
      %v5458 = vadd.f32 %v5456, %v5457
      %v5459 = vsel %vm374, %v4985, 0.0
      %v5460 = vsel %vm374, %v5109, 0.0
      %v5461 = vadd.f32 %v5459, %v5460
      %v5462 = vsel %vm374, %v5233, 0.0
      %v5463 = vadd.f32 %v5461, %v5462
      %v5464 = vsel %vm374, %v5357, 0.0
      %v5465 = vadd.f32 %v5463, %v5464
      %v5466 = vsel %vm374, %v4990, 0.0
      %v5467 = vsel %vm374, %v5114, 0.0
      %v5468 = vadd.f32 %v5466, %v5467
      %v5469 = vsel %vm374, %v5238, 0.0
      %v5470 = vadd.f32 %v5468, %v5469
      %v5471 = vsel %vm374, %v5362, 0.0
      %v5472 = vadd.f32 %v5470, %v5471
      %v5473 = vsel %vm374, %v4993, 0.0
      %v5474 = vsel %vm374, %v5117, 0.0
      %v5475 = vadd.f32 %v5473, %v5474
      %v5476 = vsel %vm374, %v5241, 0.0
      %v5477 = vadd.f32 %v5475, %v5476
      %v5478 = vsel %vm374, %v5365, 0.0
      %v5479 = vadd.f32 %v5477, %v5478
      %v5480 = vld [vmem:[%s5] sm:$0x1]
      %v5482 = vlaneseq
      %v5483 = vshrl.u32 %v5482, 7
      %v5484 = vsub.s32 0, %v5483
      %v5485 = vrot.slane %v5480, %v5484
      %v5487 = vadd.f32 %v5374, %v5485
      %v5488 = vadd.f32 %v5381, %v5485
      %v5489 = vadd.f32 %v5388, %v5485
      %v5490 = vadd.f32 %v5395, %v5485
      %v5491 = vadd.f32 %v5402, %v5485
      %v5492 = vadd.f32 %v5409, %v5485
      %v5493 = vadd.f32 %v5416, %v5485
      %v5494 = vadd.f32 %v5423, %v5485
      %v5495 = vadd.f32 %v5430, %v5485
      %v5496 = vadd.f32 %v5437, %v5485
      %v5497 = vadd.f32 %v5444, %v5485
      %v5498 = vadd.f32 %v5451, %v5485
      %v5499 = vadd.f32 %v5458, %v5485
      %v5500 = vadd.f32 %v5465, %v5485
      %v5501 = vadd.f32 %v5472, %v5485
      %v5502 = vadd.f32 %v5479, %v5485
      %5503 = vst.msk [vmem:[%s283] sm:$0xff] %vm374, %v5487
      %5504 = vst.msk [vmem:[%s283 + $0x8] sm:$0xff] %vm374, %v5488
      %5505 = vst.msk [vmem:[%s283 + $0x10] sm:$0xff] %vm374, %v5489
      %5506 = vst.msk [vmem:[%s283 + $0x18] sm:$0xff] %vm374, %v5490
      %5507 = vst.msk [vmem:[%s283 + $0x20] sm:$0xff] %vm374, %v5491
      %5508 = vst.msk [vmem:[%s283 + $0x28] sm:$0xff] %vm374, %v5492
      %5509 = vst.msk [vmem:[%s283 + $0x30] sm:$0xff] %vm374, %v5493
      %5510 = vst.msk [vmem:[%s283 + $0x38] sm:$0xff] %vm374, %v5494
      %5511 = vst.msk [vmem:[%s283 + $0x40] sm:$0xff] %vm374, %v5495
      %5512 = vst.msk [vmem:[%s283 + $0x48] sm:$0xff] %vm374, %v5496
      %5513 = vst.msk [vmem:[%s283 + $0x50] sm:$0xff] %vm374, %v5497
      %5514 = vst.msk [vmem:[%s283 + $0x58] sm:$0xff] %vm374, %v5498
      %5515 = vst.msk [vmem:[%s283 + $0x60] sm:$0xff] %vm374, %v5499
      %5516 = vst.msk [vmem:[%s283 + $0x68] sm:$0xff] %vm374, %v5500
      %5517 = vst.msk [vmem:[%s283 + $0x70] sm:$0xff] %vm374, %v5501
      %5518 = vst.msk [vmem:[%s283 + $0x78] sm:$0xff] %vm374, %v5502
      %s5519 = smul.u32 8, %s17
      %p5520 = scmp.lt.s32.totalorder %s5519, 15
      %s5521 = scalar_select %p5520, %s5519, 15
      %s5522 = smul.addr %s5521, 2
      %s5523 = smul.addr %s5522, 8
      %s5524 = scalar_lea.vmem %s6, %s5523
      // Predicated region
      $region45: #{_lambda_.1} parent=43 // pred_check
        %p5525 = pneg %p171
      $region46: #{_lambda_.1} parent=43 // pred_check_branch
        %5527 = sbr.rel (%p5525) target = $region48
      $region47: #{_lambda_.1} parent=43 // pred_region
        %s5528 = smul.u32 8, %s17
      $region48: #{_lambda_.1} parent=43 // pred_fallthru
        _
    $region44: #{_lambda_.1} parent=5 // pred_fallthru
      _
    %p5529 = scmp.le.s32.totalorder 2, %s12
    // Predicated region
    $region49: #{_lambda_.1} parent=5 // pred_check
      %p5530 = pneg %p5529
    $region50: #{_lambda_.1} parent=5 // pred_check_branch
      %5532 = sbr.rel (%p5530) target = $region52
    $region51: #{_lambda_.1} parent=5 // pred_region
      %s5533 = ssub.s32 %s12, 2
      // Predicated region
      $region53: #{_lambda_.1} parent=51 // pred_check
        %p5534 = pneg %p177
      $region54: #{_lambda_.1} parent=51 // pred_check_branch
        %5536 = sbr.rel (%p5534) target = $region56
      $region55: #{_lambda_.1} parent=51 // pred_region
        %s5537 = smul.u32 8, %s18
        %p5538 = scmp.lt.s32.totalorder %s5537, 15
        %s5539 = scalar_select %p5538, %s5537, 15
        %s5540 = smul.addr %s5539, 2
        %s5541 = smul.addr %s5540, 8
        %s5542 = scalar_lea.vmem %s6, %s5541
      $region56: #{_lambda_.1} parent=51 // pred_fallthru
        _
    $region52: #{_lambda_.1} parent=5 // pred_fallthru
      _
  $region6: #{_lambda_.1} parent=0 // loop_footer
    %s16 = sadd.s32 1, %s12
  $region7: #{_lambda_.1} parent=0 // loop_footer_branch
    %11 = sbr.rel target = $region3
  $region8: #{_lambda_.1} parent=0 // loop_exit
    _

</llo_original>
